<compile_context>
chip_gen: v7x
topology: tpu7x:2x2x1
jax: 0.10.0
libtpu: 0.0.40
codegen_flags: <defaults>
</compile_context>

<pallas_src>
import jax
import jax.numpy as jnp
from jax.experimental import pallas as pl
from jax.experimental.pallas import tpu as pltpu

NEG_SLOPE = 0.01  # PyTorch LeakyReLU default
_LAYER_ORDER = ("E1", "E2", "E3", "E1_3", "N1", "N2_4", "G1")


def _transpose_perm_matrix(H, W):
    """P with (y @ P)[c, h*W+w] == y[c, w*W+h] (square connectivity, H == W)."""
    hw = H * W
    idx = jnp.arange(hw)
    h, w = idx // W, idx % W
    perm = w * W + h                     # involution -> P is symmetric
    return jax.nn.one_hot(perm, hw, dtype=jnp.float32)


# ---------------------------------------------------------------------------
# Fully fused NetworkSC kernel (single pallas_call, grid over batch)
# ---------------------------------------------------------------------------

def build_fused_networksc(channels, B, H, W, out_size, fc_hidden, out_dtype):
    assert H == W, "E2E/E2N require square connectivity matrices"
    hw = H * W
    assert hw % out_size == 0, "fused FC head needs out_size | H*W"
    ng = hw // out_size                   # FC rows per (batch, channel)

    c_in = {n: channels[n][0] for n in _LAYER_ORDER}
    c_out = {n: channels[n][1] for n in _LAYER_ORDER}
    C3, C4 = c_out["E3"], c_out["E1_3"]
    C5, C6 = c_out["N1"], c_out["N2_4"]
    C7 = c_out["G1"]
    assert c_in["N1"] == C3 + C4 and c_in["G1"] == C5 + C6
    assert out_size == C7
    n_layers = len(_LAYER_ORDER)

    def kernel(*refs):
        x_ref = refs[0]
        w_refs, b_refs = {}, {}
        for i, name in enumerate(_LAYER_ORDER):
            w_refs[name] = refs[1 + 2 * i]           # (C_out, C_in)  VMEM
            b_refs[name] = refs[2 + 2 * i]           # (C_out, 1)     VMEM
        p_ref, w1b_ref, b1b_ref, w20_ref, w21_ref, b2_ref = (
            refs[1 + 2 * n_layers: 1 + 2 * n_layers + 6])
        layer3_ref, input5_ref, probs_ref = refs[1 + 2 * n_layers + 6:]

        f32 = jnp.float32
        P = p_ref[...]                               # (hw, hw) permutation

        def conv(name, parts):
            """1x1 conv + LeakyReLU as a channel-mix matmul on (C, H*W) slabs.

            `parts` = [(width, array), ...] lets concatenated inputs be consumed
            as split-K matmuls (no in-kernel jnp.concatenate needed)."""
            w = w_refs[name][...]
            b = b_refs[name][...]                    # (C_out, 1) broadcasts
            y, off = None, 0
            for width, arr in parts:
                w_part = w[:, off:off + width]       # static value slice
                if width == 1:                       # K=1: plain broadcast mul
                    d = w_part * arr
                else:
                    d = jnp.dot(w_part, arr, preferred_element_type=f32)
                y = d if y is None else y + d
                off += width
            y = y + b
            return jnp.maximum(y, NEG_SLOPE * y)     # LeakyReLU(0.01)

        def e2e(y):  # x + x.permute(0, 1, 3, 2)  -> permutation matmul on MXU
            return y + jnp.dot(y, P, preferred_element_type=f32)

        def e2n(y):  # x.permute(0, 1, 3, 2) * 2
            return 2.0 * jnp.dot(y, P, preferred_element_type=f32)

        # dropout = identity in eval mode
        x = x_ref[0].astype(f32)                           # (C_in0, hw)
        l1 = e2e(conv("E1", [(c_in["E1"], x)]))            # layer1
        l2 = e2e(conv("E2", [(c_in["E2"], l1)]))           # layer2
        l3 = e2e(conv("E3", [(c_in["E3"], l2)]))           # layer3
        l4 = e2e(conv("E1_3", [(c_in["E1_3"], l1)]))       # layer4
        l5 = e2n(conv("N1", [(C3, l3), (C4, l4)]))         # layer5 (in: cat(l3,l4))
        l6 = e2n(conv("N2_4", [(c_in["N2_4"], l2)]))       # layer6
        l7 = conv("G1", [(C5, l5), (C6, l6)])              # layer7 (in: cat(l5,l6))

        # whole-block lane-dense stores of the returned tensors
        layer3_ref[0] = l3.astype(out_dtype)
        input5_ref[0, :C3] = l3.astype(out_dtype)
        input5_ref[0, C3:] = l4.astype(out_dtype)

        # ---- fused FC2 + softmax head ------------------------------------
        # flat = layer7.view(-1, out_size) is realized by block-diagonal
        # (kron) FC weights, so no in-kernel (C7, hw)->(hw, out_size) reshape.
        h = jnp.dot(l7, w1b_ref[...], preferred_element_type=f32) + b1b_ref[...]
        h = jnp.maximum(h, 0.0)                           # (C7, ng*hidden)
        lg0 = jnp.dot(h, w20_ref[...], preferred_element_type=f32) + b2_ref[0]
        lg1 = jnp.dot(h, w21_ref[...], preferred_element_type=f32) + b2_ref[1]
        m = jnp.maximum(lg0, lg1)
        e0 = jnp.exp(lg0 - m)
        e1 = jnp.exp(lg1 - m)
        denom = e0 + e1                                   # (C7, ng)
        probs_ref[0, 0] = (e0 / denom).astype(out_dtype)
        probs_ref[0, 1] = (e1 / denom).astype(out_dtype)

    def _full2(shape):
        return pl.BlockSpec(shape, lambda b: (0, 0))

    in_specs = [pl.BlockSpec((1, c_in["E1"], hw), lambda b: (b, 0, 0))]
    for name in _LAYER_ORDER:
        in_specs.append(_full2((c_out[name], c_in[name])))   # weight
        in_specs.append(_full2((c_out[name], 1)))            # bias
    in_specs += [
        _full2((hw, hw)),                  # P
        _full2((hw, ng * fc_hidden)),      # W1 block-diagonal
        _full2((1, ng * fc_hidden)),       # b1 tiled
        _full2((ng * fc_hidden, ng)),      # W2 class-0 block-diagonal
        _full2((ng * fc_hidden, ng)),      # W2 class-1 block-diagonal
        pl.BlockSpec(memory_space=pltpu.MemorySpace.SMEM),   # b2 (2,)
    ]
    out_shape = (
        jax.ShapeDtypeStruct((B, C3, hw), out_dtype),         # layer3
        jax.ShapeDtypeStruct((B, C3 + C4, hw), out_dtype),    # input_5
        jax.ShapeDtypeStruct((B, 2, C7, ng), out_dtype),      # class probs
    )
    out_specs = (
        pl.BlockSpec((1, C3, hw), lambda b: (b, 0, 0)),
        pl.BlockSpec((1, C3 + C4, hw), lambda b: (b, 0, 0)),
        pl.BlockSpec((1, 2, C7, ng), lambda b: (b, 0, 0, 0)),
    )
    return pl.pallas_call(
        kernel,
        out_shape=out_shape,
        grid=(B,),
        in_specs=in_specs,
        out_specs=out_specs,
        compiler_params=pltpu.CompilerParams(dimension_semantics=("parallel",)),
    )


# ---------------------------------------------------------------------------
# Parameters + forward glue
# ---------------------------------------------------------------------------

def make_params(key, channels, fc_hidden):
    params = {}
    keys = jax.random.split(key, 2 * len(channels) + 4)
    ki = 0
    for name, (c_i, c_o) in channels.items():
        params[name] = (
            0.1 * jax.random.normal(keys[ki], (c_o, c_i), jnp.float32),
            0.1 * jax.random.normal(keys[ki + 1], (c_o,), jnp.float32),
        )
        ki += 2
    out_size = channels["G1"][1]
    params["FC_w1"] = 0.1 * jax.random.normal(keys[ki], (out_size, fc_hidden), jnp.float32)
    params["FC_b1"] = 0.1 * jax.random.normal(keys[ki + 1], (fc_hidden,), jnp.float32)
    params["FC_w2"] = 0.1 * jax.random.normal(keys[ki + 2], (fc_hidden, 2), jnp.float32)
    params["FC_b2"] = 0.1 * jax.random.normal(keys[ki + 3], (2,), jnp.float32)
    return params, out_size


def network_sc_forward(x, params, channels, fc_hidden):
    B, C0, H, W = x.shape
    out_size = channels["G1"][1]
    hw = H * W
    ng = hw // out_size
    fused = build_fused_networksc(channels, B, H, W, out_size, fc_hidden, x.dtype)

    args = [x.reshape(B, C0, hw)]
    for name in _LAYER_ORDER:
        w, b = params[name]
        args += [w, b.reshape(-1, 1)]

    P = _transpose_perm_matrix(H, W)
    eye = jnp.eye(ng, dtype=jnp.float32)
    W1, b1 = params["FC_w1"], params["FC_b1"]
    W2, b2 = params["FC_w2"], params["FC_b2"]
    W1_big = jnp.kron(eye, W1)                     # (hw, ng*hidden)
    b1_big = jnp.tile(b1, ng).reshape(1, -1)       # (1, ng*hidden)
    W2_big0 = jnp.kron(eye, W2[:, 0:1])            # (ng*hidden, ng)
    W2_big1 = jnp.kron(eye, W2[:, 1:2])            # (ng*hidden, ng)
    args += [P, W1_big, b1_big, W2_big0, W2_big1, b2]

    layer3, input_5, probs = fused(*args)
    # probs[b, s, c, k] -> torch row order (b, c, k), columns = classes
    out = jnp.transpose(probs, (0, 2, 3, 1)).reshape(-1, 2)
    return out, layer3.reshape(B, -1, H, W), input_5.reshape(B, -1, H, W)


# ---------------------------------------------------------------------------
# Pure-JAX reference (for correctness check)
# ---------------------------------------------------------------------------

def _ref_forward(x, params, channels):
    hp = jax.lax.Precision.HIGHEST

    def conv(t, w, b):
        y = jnp.einsum("oc,bchw->bohw", w, t, precision=hp) + b[None, :, None, None]
        return jnp.where(y > 0, y, NEG_SLOPE * y)

    E2E_ = lambda t: t + jnp.swapaxes(t, -1, -2)
    E2N_ = lambda t: jnp.swapaxes(t, -1, -2) * 2.0
    l1 = E2E_(conv(x, *params["E1"]))
    l2 = E2E_(conv(l1, *params["E2"]))
    l3 = E2E_(conv(l2, *params["E3"]))
    l4 = E2E_(conv(l1, *params["E1_3"]))
    in5 = jnp.concatenate([l3, l4], axis=1)
    l5 = E2N_(conv(in5, *params["N1"]))
    l6 = E2N_(conv(l2, *params["N2_4"]))
    in7 = jnp.concatenate([l5, l6], axis=1)
    l7 = conv(in7, *params["G1"])
    flat = l7.reshape(-1, channels["G1"][1])
    h = jnp.maximum(jnp.dot(flat, params["FC_w1"], precision=hp) + params["FC_b1"], 0.0)
    logits = jnp.dot(h, params["FC_w2"], precision=hp) + params["FC_b2"]
    return jax.nn.softmax(logits, axis=1), l3, in5


if __name__ == "__main__":
    B, d = 2, 16            # batch=2, connectivity-matrix size 16x16
    C = 8
    channels = {
        "E1":   (1, C),
        "E2":   (C, C),
        "E3":   (C, C),
        "E1_3": (C, C),
        "N1":   (2 * C, C),   # cat(layer3, layer4) -> 2C in
        "N2_4": (C, C),
        "G1":   (2 * C, C),   # cat(layer5, layer6) -> 2C in
    }
    fc_hidden = 16

    key = jax.random.PRNGKey(0)
    k_params, k_x = jax.random.split(key)
    params, out_size = make_params(k_params, channels, fc_hidden)
    x = jax.random.normal(k_x, (B, 1, d, d), jnp.float32)

    fwd = jax.jit(lambda xx: network_sc_forward(xx, params, channels, fc_hidden))
    out, layer3, input_5 = fwd(x)
    jax.block_until_ready((out, layer3, input_5))

    # shape checks
    assert out.shape == (B * C * d * d // out_size, 2)
    assert layer3.shape == (B, C, d, d)
    assert input_5.shape == (B, 2 * C, d, d)
    assert jnp.allclose(jnp.sum(out, axis=1), 1.0, atol=1e-5)

    # numerical check against pure-JAX reference of the same module semantics
    # (tolerance leaves margin for MXU f32 matmul pass decomposition)
    out_r, l3_r, in5_r = _ref_forward(x, params, channels)
    assert jnp.allclose(layer3, l3_r, atol=2e-3, rtol=2e-3)
    assert jnp.allclose(input_5, in5_r, atol=2e-3, rtol=2e-3)
    assert jnp.allclose(out, out_r, atol=2e-3, rtol=2e-3)

    print("KERNEL_OK")
</pallas_src>

<mosaic_0001>
module attributes {stable_mosaic.version = 11 : i64} {
  func.func @kernel(%arg0: i32, %arg1: memref<1x1x256xf32, #tpu.memory_space<vmem>>, %arg2: memref<8x1xf32, #tpu.memory_space<vmem>>, %arg3: memref<8x1xf32, #tpu.memory_space<vmem>>, %arg4: memref<8x8xf32, #tpu.memory_space<vmem>>, %arg5: memref<8x1xf32, #tpu.memory_space<vmem>>, %arg6: memref<8x8xf32, #tpu.memory_space<vmem>>, %arg7: memref<8x1xf32, #tpu.memory_space<vmem>>, %arg8: memref<8x8xf32, #tpu.memory_space<vmem>>, %arg9: memref<8x1xf32, #tpu.memory_space<vmem>>, %arg10: memref<8x16xf32, #tpu.memory_space<vmem>>, %arg11: memref<8x1xf32, #tpu.memory_space<vmem>>, %arg12: memref<8x8xf32, #tpu.memory_space<vmem>>, %arg13: memref<8x1xf32, #tpu.memory_space<vmem>>, %arg14: memref<8x16xf32, #tpu.memory_space<vmem>>, %arg15: memref<8x1xf32, #tpu.memory_space<vmem>>, %arg16: memref<256x256xf32, #tpu.memory_space<vmem>>, %arg17: memref<256x512xf32, #tpu.memory_space<vmem>>, %arg18: memref<1x512xf32, #tpu.memory_space<vmem>>, %arg19: memref<512x32xf32, #tpu.memory_space<vmem>>, %arg20: memref<512x32xf32, #tpu.memory_space<vmem>>, %arg21: memref<2xf32, #tpu.memory_space<smem>>, %arg22: memref<1x8x256xf32, #tpu.memory_space<vmem>>, %arg23: memref<1x16x256xf32, #tpu.memory_space<vmem>>, %arg24: memref<1x2x8x32xf32, #tpu.memory_space<vmem>>) attributes {dimension_semantics = [#tpu.dimension_semantics<parallel>], iteration_bounds = array<i64: 2>, scalar_prefetch = 0 : i64, scratch_operands = 0 : i64, tpu.core_type = #tpu.core_type<tc>, window_params = [{transform_indices = @transform_0, window_bounds = array<i64: 1, 1, 256>}, {pipeline_mode = #tpu.pipeline_mode<synchronous>, transform_indices = @transform_1, window_bounds = array<i64: 8, 1>}, {pipeline_mode = #tpu.pipeline_mode<synchronous>, transform_indices = @transform_2, window_bounds = array<i64: 8, 1>}, {pipeline_mode = #tpu.pipeline_mode<synchronous>, transform_indices = @transform_3, window_bounds = array<i64: 8, 8>}, {pipeline_mode = #tpu.pipeline_mode<synchronous>, transform_indices = @transform_4, window_bounds = array<i64: 8, 1>}, {pipeline_mode = #tpu.pipeline_mode<synchronous>, transform_indices = @transform_5, window_bounds = array<i64: 8, 8>}, {pipeline_mode = #tpu.pipeline_mode<synchronous>, transform_indices = @transform_6, window_bounds = array<i64: 8, 1>}, {pipeline_mode = #tpu.pipeline_mode<synchronous>, transform_indices = @transform_7, window_bounds = array<i64: 8, 8>}, {pipeline_mode = #tpu.pipeline_mode<synchronous>, transform_indices = @transform_8, window_bounds = array<i64: 8, 1>}, {pipeline_mode = #tpu.pipeline_mode<synchronous>, transform_indices = @transform_9, window_bounds = array<i64: 8, 16>}, {pipeline_mode = #tpu.pipeline_mode<synchronous>, transform_indices = @transform_10, window_bounds = array<i64: 8, 1>}, {pipeline_mode = #tpu.pipeline_mode<synchronous>, transform_indices = @transform_11, window_bounds = array<i64: 8, 8>}, {pipeline_mode = #tpu.pipeline_mode<synchronous>, transform_indices = @transform_12, window_bounds = array<i64: 8, 1>}, {pipeline_mode = #tpu.pipeline_mode<synchronous>, transform_indices = @transform_13, window_bounds = array<i64: 8, 16>}, {pipeline_mode = #tpu.pipeline_mode<synchronous>, transform_indices = @transform_14, window_bounds = array<i64: 8, 1>}, {pipeline_mode = #tpu.pipeline_mode<synchronous>, transform_indices = @transform_15, window_bounds = array<i64: 256, 256>}, {pipeline_mode = #tpu.pipeline_mode<synchronous>, transform_indices = @transform_16, window_bounds = array<i64: 256, 512>}, {pipeline_mode = #tpu.pipeline_mode<synchronous>, transform_indices = @transform_17, window_bounds = array<i64: 1, 512>}, {pipeline_mode = #tpu.pipeline_mode<synchronous>, transform_indices = @transform_18, window_bounds = array<i64: 512, 32>}, {pipeline_mode = #tpu.pipeline_mode<synchronous>, transform_indices = @transform_19, window_bounds = array<i64: 512, 32>}, {transform_indices = @transform_20, window_bounds = array<i64: 2>}, {transform_indices = @transform_21, window_bounds = array<i64: 1, 8, 256>}, {transform_indices = @transform_22, window_bounds = array<i64: 1, 16, 256>}, {transform_indices = @transform_23, window_bounds = array<i64: 1, 2, 8, 32>}]} {
    %c0 = arith.constant 0 : index
    %c0_0 = arith.constant 0 : index
    %0 = vector.load %arg16[%c0, %c0_0] : memref<256x256xf32, #tpu.memory_space<vmem>>, vector<256x256xf32>
    %c0_1 = arith.constant 0 : index
    %c0_2 = arith.constant 0 : index
    %c0_3 = arith.constant 0 : index
    %1 = vector.load %arg1[%c0_1, %c0_2, %c0_3] : memref<1x1x256xf32, #tpu.memory_space<vmem>>, vector<1x1x256xf32>
    %2 = vector.shape_cast %1 : vector<1x1x256xf32> to vector<1x256xf32>
    %c0_4 = arith.constant 0 : index
    %c0_5 = arith.constant 0 : index
    %3 = vector.load %arg2[%c0_4, %c0_5] : memref<8x1xf32, #tpu.memory_space<vmem>>, vector<8x1xf32>
    %c0_6 = arith.constant 0 : index
    %c0_7 = arith.constant 0 : index
    %4 = vector.load %arg3[%c0_6, %c0_7] : memref<8x1xf32, #tpu.memory_space<vmem>>, vector<8x1xf32>
    %5 = vector.broadcast %3 : vector<8x1xf32> to vector<8x256xf32>
    %6 = vector.broadcast %2 : vector<1x256xf32> to vector<8x256xf32>
    %7 = arith.mulf %5, %6 : vector<8x256xf32>
    %8 = vector.broadcast %4 : vector<8x1xf32> to vector<8x256xf32>
    %9 = arith.addf %7, %8 : vector<8x256xf32>
    %cst = arith.constant 0.00999999977 : f32
    %10 = vector.broadcast %cst : f32 to vector<8x256xf32>
    %11 = arith.mulf %10, %9 : vector<8x256xf32>
    %12 = arith.maximumf %9, %11 : vector<8x256xf32>
    %cst_8 = arith.constant dense<0.000000e+00> : vector<8x256xf32>
    %13 = tpu.matmul %12, %0, %cst_8 {dimension_numbers = #tpu.dot_dimension_numbers<[1], [0], [0], [1], [0, 0, 1, 1], [], []>} : vector<8x256xf32>, vector<256x256xf32>, vector<8x256xf32> -> vector<8x256xf32>
    %14 = arith.addf %12, %13 : vector<8x256xf32>
    %c0_9 = arith.constant 0 : index
    %c0_10 = arith.constant 0 : index
    %15 = vector.load %arg4[%c0_9, %c0_10] : memref<8x8xf32, #tpu.memory_space<vmem>>, vector<8x8xf32>
    %c0_11 = arith.constant 0 : index
    %c0_12 = arith.constant 0 : index
    %16 = vector.load %arg5[%c0_11, %c0_12] : memref<8x1xf32, #tpu.memory_space<vmem>>, vector<8x1xf32>
    %cst_13 = arith.constant dense<0.000000e+00> : vector<8x256xf32>
    %17 = tpu.matmul %15, %14, %cst_13 {dimension_numbers = #tpu.dot_dimension_numbers<[1], [0], [0], [1], [0, 0, 1, 1], [], []>} : vector<8x8xf32>, vector<8x256xf32>, vector<8x256xf32> -> vector<8x256xf32>
    %18 = vector.broadcast %16 : vector<8x1xf32> to vector<8x256xf32>
    %19 = arith.addf %17, %18 : vector<8x256xf32>
    %cst_14 = arith.constant 0.00999999977 : f32
    %20 = vector.broadcast %cst_14 : f32 to vector<8x256xf32>
    %21 = arith.mulf %20, %19 : vector<8x256xf32>
    %22 = arith.maximumf %19, %21 : vector<8x256xf32>
    %cst_15 = arith.constant dense<0.000000e+00> : vector<8x256xf32>
    %23 = tpu.matmul %22, %0, %cst_15 {dimension_numbers = #tpu.dot_dimension_numbers<[1], [0], [0], [1], [0, 0, 1, 1], [], []>} : vector<8x256xf32>, vector<256x256xf32>, vector<8x256xf32> -> vector<8x256xf32>
    %24 = arith.addf %22, %23 : vector<8x256xf32>
    %c0_16 = arith.constant 0 : index
    %c0_17 = arith.constant 0 : index
    %25 = vector.load %arg6[%c0_16, %c0_17] : memref<8x8xf32, #tpu.memory_space<vmem>>, vector<8x8xf32>
    %c0_18 = arith.constant 0 : index
    %c0_19 = arith.constant 0 : index
    %26 = vector.load %arg7[%c0_18, %c0_19] : memref<8x1xf32, #tpu.memory_space<vmem>>, vector<8x1xf32>
    %cst_20 = arith.constant dense<0.000000e+00> : vector<8x256xf32>
    %27 = tpu.matmul %25, %24, %cst_20 {dimension_numbers = #tpu.dot_dimension_numbers<[1], [0], [0], [1], [0, 0, 1, 1], [], []>} : vector<8x8xf32>, vector<8x256xf32>, vector<8x256xf32> -> vector<8x256xf32>
    %28 = vector.broadcast %26 : vector<8x1xf32> to vector<8x256xf32>
    %29 = arith.addf %27, %28 : vector<8x256xf32>
    %cst_21 = arith.constant 0.00999999977 : f32
    %30 = vector.broadcast %cst_21 : f32 to vector<8x256xf32>
    %31 = arith.mulf %30, %29 : vector<8x256xf32>
    %32 = arith.maximumf %29, %31 : vector<8x256xf32>
    %cst_22 = arith.constant dense<0.000000e+00> : vector<8x256xf32>
    %33 = tpu.matmul %32, %0, %cst_22 {dimension_numbers = #tpu.dot_dimension_numbers<[1], [0], [0], [1], [0, 0, 1, 1], [], []>} : vector<8x256xf32>, vector<256x256xf32>, vector<8x256xf32> -> vector<8x256xf32>
    %34 = arith.addf %32, %33 : vector<8x256xf32>
    %c0_23 = arith.constant 0 : index
    %c0_24 = arith.constant 0 : index
    %35 = vector.load %arg8[%c0_23, %c0_24] : memref<8x8xf32, #tpu.memory_space<vmem>>, vector<8x8xf32>
    %c0_25 = arith.constant 0 : index
    %c0_26 = arith.constant 0 : index
    %36 = vector.load %arg9[%c0_25, %c0_26] : memref<8x1xf32, #tpu.memory_space<vmem>>, vector<8x1xf32>
    %cst_27 = arith.constant dense<0.000000e+00> : vector<8x256xf32>
    %37 = tpu.matmul %35, %14, %cst_27 {dimension_numbers = #tpu.dot_dimension_numbers<[1], [0], [0], [1], [0, 0, 1, 1], [], []>} : vector<8x8xf32>, vector<8x256xf32>, vector<8x256xf32> -> vector<8x256xf32>
    %38 = vector.broadcast %36 : vector<8x1xf32> to vector<8x256xf32>
    %39 = arith.addf %37, %38 : vector<8x256xf32>
    %cst_28 = arith.constant 0.00999999977 : f32
    %40 = vector.broadcast %cst_28 : f32 to vector<8x256xf32>
    %41 = arith.mulf %40, %39 : vector<8x256xf32>
    %42 = arith.maximumf %39, %41 : vector<8x256xf32>
    %cst_29 = arith.constant dense<0.000000e+00> : vector<8x256xf32>
    %43 = tpu.matmul %42, %0, %cst_29 {dimension_numbers = #tpu.dot_dimension_numbers<[1], [0], [0], [1], [0, 0, 1, 1], [], []>} : vector<8x256xf32>, vector<256x256xf32>, vector<8x256xf32> -> vector<8x256xf32>
    %44 = arith.addf %42, %43 : vector<8x256xf32>
    %c0_30 = arith.constant 0 : index
    %c0_31 = arith.constant 0 : index
    %45 = vector.load %arg10[%c0_30, %c0_31] : memref<8x16xf32, #tpu.memory_space<vmem>>, vector<8x16xf32>
    %c0_32 = arith.constant 0 : index
    %c0_33 = arith.constant 0 : index
    %46 = vector.load %arg11[%c0_32, %c0_33] : memref<8x1xf32, #tpu.memory_space<vmem>>, vector<8x1xf32>
    %47 = vector.extract_strided_slice %45 {offsets = [0, 0], sizes = [8, 8], strides = [1, 1]} : vector<8x16xf32> to vector<8x8xf32>
    %cst_34 = arith.constant dense<0.000000e+00> : vector<8x256xf32>
    %48 = tpu.matmul %47, %34, %cst_34 {dimension_numbers = #tpu.dot_dimension_numbers<[1], [0], [0], [1], [0, 0, 1, 1], [], []>} : vector<8x8xf32>, vector<8x256xf32>, vector<8x256xf32> -> vector<8x256xf32>
    %49 = vector.extract_strided_slice %45 {offsets = [0, 8], sizes = [8, 8], strides = [1, 1]} : vector<8x16xf32> to vector<8x8xf32>
    %cst_35 = arith.constant dense<0.000000e+00> : vector<8x256xf32>
    %50 = tpu.matmul %49, %44, %cst_35 {dimension_numbers = #tpu.dot_dimension_numbers<[1], [0], [0], [1], [0, 0, 1, 1], [], []>} : vector<8x8xf32>, vector<8x256xf32>, vector<8x256xf32> -> vector<8x256xf32>
    %51 = arith.addf %48, %50 : vector<8x256xf32>
    %52 = vector.broadcast %46 : vector<8x1xf32> to vector<8x256xf32>
    %53 = arith.addf %51, %52 : vector<8x256xf32>
    %cst_36 = arith.constant 0.00999999977 : f32
    %54 = vector.broadcast %cst_36 : f32 to vector<8x256xf32>
    %55 = arith.mulf %54, %53 : vector<8x256xf32>
    %56 = arith.maximumf %53, %55 : vector<8x256xf32>
    %cst_37 = arith.constant dense<0.000000e+00> : vector<8x256xf32>
    %57 = tpu.matmul %56, %0, %cst_37 {dimension_numbers = #tpu.dot_dimension_numbers<[1], [0], [0], [1], [0, 0, 1, 1], [], []>} : vector<8x256xf32>, vector<256x256xf32>, vector<8x256xf32> -> vector<8x256xf32>
    %cst_38 = arith.constant 2.000000e+00 : f32
    %58 = vector.broadcast %cst_38 : f32 to vector<8x256xf32>
    %59 = arith.mulf %58, %57 : vector<8x256xf32>
    %c0_39 = arith.constant 0 : index
    %c0_40 = arith.constant 0 : index
    %60 = vector.load %arg12[%c0_39, %c0_40] : memref<8x8xf32, #tpu.memory_space<vmem>>, vector<8x8xf32>
    %c0_41 = arith.constant 0 : index
    %c0_42 = arith.constant 0 : index
    %61 = vector.load %arg13[%c0_41, %c0_42] : memref<8x1xf32, #tpu.memory_space<vmem>>, vector<8x1xf32>
    %cst_43 = arith.constant dense<0.000000e+00> : vector<8x256xf32>
    %62 = tpu.matmul %60, %24, %cst_43 {dimension_numbers = #tpu.dot_dimension_numbers<[1], [0], [0], [1], [0, 0, 1, 1], [], []>} : vector<8x8xf32>, vector<8x256xf32>, vector<8x256xf32> -> vector<8x256xf32>
    %63 = vector.broadcast %61 : vector<8x1xf32> to vector<8x256xf32>
    %64 = arith.addf %62, %63 : vector<8x256xf32>
    %cst_44 = arith.constant 0.00999999977 : f32
    %65 = vector.broadcast %cst_44 : f32 to vector<8x256xf32>
    %66 = arith.mulf %65, %64 : vector<8x256xf32>
    %67 = arith.maximumf %64, %66 : vector<8x256xf32>
    %cst_45 = arith.constant dense<0.000000e+00> : vector<8x256xf32>
    %68 = tpu.matmul %67, %0, %cst_45 {dimension_numbers = #tpu.dot_dimension_numbers<[1], [0], [0], [1], [0, 0, 1, 1], [], []>} : vector<8x256xf32>, vector<256x256xf32>, vector<8x256xf32> -> vector<8x256xf32>
    %cst_46 = arith.constant 2.000000e+00 : f32
    %69 = vector.broadcast %cst_46 : f32 to vector<8x256xf32>
    %70 = arith.mulf %69, %68 : vector<8x256xf32>
    %c0_47 = arith.constant 0 : index
    %c0_48 = arith.constant 0 : index
    %71 = vector.load %arg14[%c0_47, %c0_48] : memref<8x16xf32, #tpu.memory_space<vmem>>, vector<8x16xf32>
    %c0_49 = arith.constant 0 : index
    %c0_50 = arith.constant 0 : index
    %72 = vector.load %arg15[%c0_49, %c0_50] : memref<8x1xf32, #tpu.memory_space<vmem>>, vector<8x1xf32>
    %73 = vector.extract_strided_slice %71 {offsets = [0, 0], sizes = [8, 8], strides = [1, 1]} : vector<8x16xf32> to vector<8x8xf32>
    %cst_51 = arith.constant dense<0.000000e+00> : vector<8x256xf32>
    %74 = tpu.matmul %73, %59, %cst_51 {dimension_numbers = #tpu.dot_dimension_numbers<[1], [0], [0], [1], [0, 0, 1, 1], [], []>} : vector<8x8xf32>, vector<8x256xf32>, vector<8x256xf32> -> vector<8x256xf32>
    %75 = vector.extract_strided_slice %71 {offsets = [0, 8], sizes = [8, 8], strides = [1, 1]} : vector<8x16xf32> to vector<8x8xf32>
    %cst_52 = arith.constant dense<0.000000e+00> : vector<8x256xf32>
    %76 = tpu.matmul %75, %70, %cst_52 {dimension_numbers = #tpu.dot_dimension_numbers<[1], [0], [0], [1], [0, 0, 1, 1], [], []>} : vector<8x8xf32>, vector<8x256xf32>, vector<8x256xf32> -> vector<8x256xf32>
    %77 = arith.addf %74, %76 : vector<8x256xf32>
    %78 = vector.broadcast %72 : vector<8x1xf32> to vector<8x256xf32>
    %79 = arith.addf %77, %78 : vector<8x256xf32>
    %cst_53 = arith.constant 0.00999999977 : f32
    %80 = vector.broadcast %cst_53 : f32 to vector<8x256xf32>
    %81 = arith.mulf %80, %79 : vector<8x256xf32>
    %82 = arith.maximumf %79, %81 : vector<8x256xf32>
    %c0_54 = arith.constant 0 : index
    %c0_55 = arith.constant 0 : index
    %c0_56 = arith.constant 0 : index
    %83 = vector.load %arg22[%c0_54, %c0_55, %c0_56] : memref<1x8x256xf32, #tpu.memory_space<vmem>>, vector<1x8x256xf32>
    %84 = vector.shape_cast %83 : vector<1x8x256xf32> to vector<8x256xf32>
    %85 = vector.shape_cast %34 : vector<8x256xf32> to vector<1x8x256xf32>
    tpu.vector_store %arg22[%c0_54, %c0_55, %c0_56], %85 {strides = array<i32>} : memref<1x8x256xf32, #tpu.memory_space<vmem>>, vector<1x8x256xf32>,
    %c0_57 = arith.constant 0 : index
    %c0_58 = arith.constant 0 : index
    %c0_59 = arith.constant 0 : index
    %86 = vector.load %arg23[%c0_57, %c0_58, %c0_59] : memref<1x16x256xf32, #tpu.memory_space<vmem>>, vector<1x8x256xf32>
    %87 = vector.shape_cast %86 : vector<1x8x256xf32> to vector<8x256xf32>
    %88 = vector.shape_cast %34 : vector<8x256xf32> to vector<1x8x256xf32>
    tpu.vector_store %arg23[%c0_57, %c0_58, %c0_59], %88 {strides = array<i32>} : memref<1x16x256xf32, #tpu.memory_space<vmem>>, vector<1x8x256xf32>,
    %c0_60 = arith.constant 0 : index
    %c8 = arith.constant 8 : index
    %c0_61 = arith.constant 0 : index
    %89 = vector.load %arg23[%c0_60, %c8, %c0_61] : memref<1x16x256xf32, #tpu.memory_space<vmem>>, vector<1x8x256xf32>
    %90 = vector.shape_cast %89 : vector<1x8x256xf32> to vector<8x256xf32>
    %91 = vector.shape_cast %44 : vector<8x256xf32> to vector<1x8x256xf32>
    tpu.vector_store %arg23[%c0_60, %c8, %c0_61], %91 {strides = array<i32>} : memref<1x16x256xf32, #tpu.memory_space<vmem>>, vector<1x8x256xf32>,
    %c0_62 = arith.constant 0 : index
    %c0_63 = arith.constant 0 : index
    %92 = vector.load %arg17[%c0_62, %c0_63] : memref<256x512xf32, #tpu.memory_space<vmem>>, vector<256x512xf32>
    %cst_64 = arith.constant dense<0.000000e+00> : vector<8x512xf32>
    %93 = tpu.matmul %82, %92, %cst_64 {dimension_numbers = #tpu.dot_dimension_numbers<[1], [0], [0], [1], [0, 0, 1, 1], [], []>} : vector<8x256xf32>, vector<256x512xf32>, vector<8x512xf32> -> vector<8x512xf32>
    %c0_65 = arith.constant 0 : index
    %c0_66 = arith.constant 0 : index
    %94 = vector.load %arg18[%c0_65, %c0_66] : memref<1x512xf32, #tpu.memory_space<vmem>>, vector<1x512xf32>
    %95 = vector.broadcast %94 : vector<1x512xf32> to vector<8x512xf32>
    %96 = arith.addf %93, %95 : vector<8x512xf32>
    %cst_67 = arith.constant 0.000000e+00 : f32
    %97 = vector.broadcast %cst_67 : f32 to vector<8x512xf32>
    %98 = arith.maximumf %96, %97 : vector<8x512xf32>
    %c0_68 = arith.constant 0 : index
    %c0_69 = arith.constant 0 : index
    %99 = vector.load %arg19[%c0_68, %c0_69] : memref<512x32xf32, #tpu.memory_space<vmem>>, vector<512x32xf32>
    %cst_70 = arith.constant dense<0.000000e+00> : vector<8x32xf32>
    %100 = tpu.matmul %98, %99, %cst_70 {dimension_numbers = #tpu.dot_dimension_numbers<[1], [0], [0], [1], [0, 0, 1, 1], [], []>} : vector<8x512xf32>, vector<512x32xf32>, vector<8x32xf32> -> vector<8x32xf32>
    %c0_71 = arith.constant 0 : index
    %101 = memref.load %arg21[%c0_71] : memref<2xf32, #tpu.memory_space<smem>>
    %102 = vector.broadcast %101 : f32 to vector<8x32xf32>
    %103 = arith.addf %100, %102 : vector<8x32xf32>
    %c0_72 = arith.constant 0 : index
    %c0_73 = arith.constant 0 : index
    %104 = vector.load %arg20[%c0_72, %c0_73] : memref<512x32xf32, #tpu.memory_space<vmem>>, vector<512x32xf32>
    %cst_74 = arith.constant dense<0.000000e+00> : vector<8x32xf32>
    %105 = tpu.matmul %98, %104, %cst_74 {dimension_numbers = #tpu.dot_dimension_numbers<[1], [0], [0], [1], [0, 0, 1, 1], [], []>} : vector<8x512xf32>, vector<512x32xf32>, vector<8x32xf32> -> vector<8x32xf32>
    %c1 = arith.constant 1 : index
    %106 = memref.load %arg21[%c1] : memref<2xf32, #tpu.memory_space<smem>>
    %107 = vector.broadcast %106 : f32 to vector<8x32xf32>
    %108 = arith.addf %105, %107 : vector<8x32xf32>
    %109 = arith.maximumf %103, %108 : vector<8x32xf32>
    %110 = arith.subf %103, %109 : vector<8x32xf32>
    %111 = math.exp %110 : vector<8x32xf32>
    %112 = arith.subf %108, %109 : vector<8x32xf32>
    %113 = math.exp %112 : vector<8x32xf32>
    %114 = arith.addf %111, %113 : vector<8x32xf32>
    %115 = arith.divf %111, %114 : vector<8x32xf32>
    %c0_75 = arith.constant 0 : index
    %c0_76 = arith.constant 0 : index
    %c0_77 = arith.constant 0 : index
    %c0_78 = arith.constant 0 : index
    %116 = vector.load %arg24[%c0_75, %c0_76, %c0_77, %c0_78] : memref<1x2x8x32xf32, #tpu.memory_space<vmem>>, vector<1x1x8x32xf32>
    %117 = vector.shape_cast %116 : vector<1x1x8x32xf32> to vector<8x32xf32>
    %118 = vector.shape_cast %115 : vector<8x32xf32> to vector<1x1x8x32xf32>
    tpu.vector_store %arg24[%c0_75, %c0_76, %c0_77, %c0_78], %118 {strides = array<i32>} : memref<1x2x8x32xf32, #tpu.memory_space<vmem>>, vector<1x1x8x32xf32>,
    %119 = arith.divf %113, %114 : vector<8x32xf32>
    %c0_79 = arith.constant 0 : index
    %c1_80 = arith.constant 1 : index
    %c0_81 = arith.constant 0 : index
    %c0_82 = arith.constant 0 : index
    %120 = vector.load %arg24[%c0_79, %c1_80, %c0_81, %c0_82] : memref<1x2x8x32xf32, #tpu.memory_space<vmem>>, vector<1x1x8x32xf32>
    %121 = vector.shape_cast %120 : vector<1x1x8x32xf32> to vector<8x32xf32>
    %122 = vector.shape_cast %119 : vector<8x32xf32> to vector<1x1x8x32xf32>
    tpu.vector_store %arg24[%c0_79, %c1_80, %c0_81, %c0_82], %122 {strides = array<i32>} : memref<1x2x8x32xf32, #tpu.memory_space<vmem>>, vector<1x1x8x32xf32>,
    return
  }
  func.func @transform_0(%arg0: i32) -> (i32, i32, i32) {
    %c0_i32 = arith.constant 0 : i32
    %c0_i32_0 = arith.constant 0 : i32
    %c0_i32_1 = arith.constant 0 : i32
    return %arg0, %c0_i32, %c0_i32_0 : i32, i32, i32
  }
  func.func @transform_1(%arg0: i32) -> (i32, i32) {
    %c0_i32 = arith.constant 0 : i32
    %c0_i32_0 = arith.constant 0 : i32
    %c0_i32_1 = arith.constant 0 : i32
    return %c0_i32, %c0_i32_0 : i32, i32
  }
  func.func @transform_2(%arg0: i32) -> (i32, i32) {
    %c0_i32 = arith.constant 0 : i32
    %c0_i32_0 = arith.constant 0 : i32
    %c0_i32_1 = arith.constant 0 : i32
    return %c0_i32, %c0_i32_0 : i32, i32
  }
  func.func @transform_3(%arg0: i32) -> (i32, i32) {
    %c0_i32 = arith.constant 0 : i32
    %c0_i32_0 = arith.constant 0 : i32
    %c0_i32_1 = arith.constant 0 : i32
    return %c0_i32, %c0_i32_0 : i32, i32
  }
  func.func @transform_4(%arg0: i32) -> (i32, i32) {
    %c0_i32 = arith.constant 0 : i32
    %c0_i32_0 = arith.constant 0 : i32
    %c0_i32_1 = arith.constant 0 : i32
    return %c0_i32, %c0_i32_0 : i32, i32
  }
  func.func @transform_5(%arg0: i32) -> (i32, i32) {
    %c0_i32 = arith.constant 0 : i32
    %c0_i32_0 = arith.constant 0 : i32
    %c0_i32_1 = arith.constant 0 : i32
    return %c0_i32, %c0_i32_0 : i32, i32
  }
  func.func @transform_6(%arg0: i32) -> (i32, i32) {
    %c0_i32 = arith.constant 0 : i32
    %c0_i32_0 = arith.constant 0 : i32
    %c0_i32_1 = arith.constant 0 : i32
    return %c0_i32, %c0_i32_0 : i32, i32
  }
  func.func @transform_7(%arg0: i32) -> (i32, i32) {
    %c0_i32 = arith.constant 0 : i32
    %c0_i32_0 = arith.constant 0 : i32
    %c0_i32_1 = arith.constant 0 : i32
    return %c0_i32, %c0_i32_0 : i32, i32
  }
  func.func @transform_8(%arg0: i32) -> (i32, i32) {
    %c0_i32 = arith.constant 0 : i32
    %c0_i32_0 = arith.constant 0 : i32
    %c0_i32_1 = arith.constant 0 : i32
    return %c0_i32, %c0_i32_0 : i32, i32
  }
  func.func @transform_9(%arg0: i32) -> (i32, i32) {
    %c0_i32 = arith.constant 0 : i32
    %c0_i32_0 = arith.constant 0 : i32
    %c0_i32_1 = arith.constant 0 : i32
    return %c0_i32, %c0_i32_0 : i32, i32
  }
  func.func @transform_10(%arg0: i32) -> (i32, i32) {
    %c0_i32 = arith.constant 0 : i32
    %c0_i32_0 = arith.constant 0 : i32
    %c0_i32_1 = arith.constant 0 : i32
    return %c0_i32, %c0_i32_0 : i32, i32
  }
  func.func @transform_11(%arg0: i32) -> (i32, i32) {
    %c0_i32 = arith.constant 0 : i32
    %c0_i32_0 = arith.constant 0 : i32
    %c0_i32_1 = arith.constant 0 : i32
    return %c0_i32, %c0_i32_0 : i32, i32
  }
  func.func @transform_12(%arg0: i32) -> (i32, i32) {
    %c0_i32 = arith.constant 0 : i32
    %c0_i32_0 = arith.constant 0 : i32
    %c0_i32_1 = arith.constant 0 : i32
    return %c0_i32, %c0_i32_0 : i32, i32
  }
  func.func @transform_13(%arg0: i32) -> (i32, i32) {
    %c0_i32 = arith.constant 0 : i32
    %c0_i32_0 = arith.constant 0 : i32
    %c0_i32_1 = arith.constant 0 : i32
    return %c0_i32, %c0_i32_0 : i32, i32
  }
  func.func @transform_14(%arg0: i32) -> (i32, i32) {
    %c0_i32 = arith.constant 0 : i32
    %c0_i32_0 = arith.constant 0 : i32
    %c0_i32_1 = arith.constant 0 : i32
    return %c0_i32, %c0_i32_0 : i32, i32
  }
  func.func @transform_15(%arg0: i32) -> (i32, i32) {
    %c0_i32 = arith.constant 0 : i32
    %c0_i32_0 = arith.constant 0 : i32
    %c0_i32_1 = arith.constant 0 : i32
    return %c0_i32, %c0_i32_0 : i32, i32
  }
  func.func @transform_16(%arg0: i32) -> (i32, i32) {
    %c0_i32 = arith.constant 0 : i32
    %c0_i32_0 = arith.constant 0 : i32
    %c0_i32_1 = arith.constant 0 : i32
    return %c0_i32, %c0_i32_0 : i32, i32
  }
  func.func @transform_17(%arg0: i32) -> (i32, i32) {
    %c0_i32 = arith.constant 0 : i32
    %c0_i32_0 = arith.constant 0 : i32
    %c0_i32_1 = arith.constant 0 : i32
    return %c0_i32, %c0_i32_0 : i32, i32
  }
  func.func @transform_18(%arg0: i32) -> (i32, i32) {
    %c0_i32 = arith.constant 0 : i32
    %c0_i32_0 = arith.constant 0 : i32
    %c0_i32_1 = arith.constant 0 : i32
    return %c0_i32, %c0_i32_0 : i32, i32
  }
  func.func @transform_19(%arg0: i32) -> (i32, i32) {
    %c0_i32 = arith.constant 0 : i32
    %c0_i32_0 = arith.constant 0 : i32
    %c0_i32_1 = arith.constant 0 : i32
    return %c0_i32, %c0_i32_0 : i32, i32
  }
  func.func @transform_20(%arg0: i32) -> i32 {
    %c0_i32 = arith.constant 0 : i32
    %c0_i32_0 = arith.constant 0 : i32
    return %c0_i32 : i32
  }
  func.func @transform_21(%arg0: i32) -> (i32, i32, i32) {
    %c0_i32 = arith.constant 0 : i32
    %c0_i32_0 = arith.constant 0 : i32
    %c0_i32_1 = arith.constant 0 : i32
    return %arg0, %c0_i32, %c0_i32_0 : i32, i32, i32
  }
  func.func @transform_22(%arg0: i32) -> (i32, i32, i32) {
    %c0_i32 = arith.constant 0 : i32
    %c0_i32_0 = arith.constant 0 : i32
    %c0_i32_1 = arith.constant 0 : i32
    return %arg0, %c0_i32, %c0_i32_0 : i32, i32, i32
  }
  func.func @transform_23(%arg0: i32) -> (i32, i32, i32, i32) {
    %c0_i32 = arith.constant 0 : i32
    %c0_i32_0 = arith.constant 0 : i32
    %c0_i32_1 = arith.constant 0 : i32
    %c0_i32_2 = arith.constant 0 : i32
    return %arg0, %c0_i32, %c0_i32_0, %c0_i32_1 : i32, i32, i32, i32
  }
}

</mosaic_0001>

<llo_original>
// kernel: tile.7
$region0: #{tile.7}
  %s0 = inlined_call_operand.vmem [shape: f32[32,16], index: 0, kind: input, shape index: {}]
  %s1 = inlined_call_operand.vmem [shape: f32[1,512], index: 1, kind: output, shape index: {}]
  $region1: #{tile.7} parent=0
    #allocation0 [shape = 'u8[16384]{0}', space=vmem, size = 0x4000, scoped, tag = 'scoped mem for output reshape']
    %v2 = vld [vmem:[%s0] ss:$8 sm:$0xf]
    %vm3 = vcmask 130048
    %4 = vst.msk [vmem:[#allocation0] ss:$8 sm:$0xf] %vm3, %v2
    %s5 = scalar_lea.vmem %s0, 7
    %v6 = vld [vmem:[%s5] ss:$8 sm:$0xf]
    %7 = vrot.lane.b32.xlu0 %v6, 112
    %v8 = vpop.permute.xlu0 %7
    %vm9 = vcmask 1048448
    %10 = vst.msk [vmem:[#allocation0] ss:$8 sm:$0xf] %vm9, %v8
    %s11 = scalar_lea.vmem %s0, 6
    %v12 = vld [vmem:[%s11] ss:$8 sm:$0xf]
    %13 = vrot.lane.b32.xlu0 %v12, 96
    %v14 = vpop.permute.xlu0 %13
    %vm15 = vcmask 917248
    %16 = vst.msk [vmem:[#allocation0] ss:$8 sm:$0xf] %vm15, %v14
    %s17 = scalar_lea.vmem %s0, 5
    %v18 = vld [vmem:[%s17] ss:$8 sm:$0xf]
    %19 = vrot.lane.b32.xlu0 %v18, 80
    %v20 = vpop.permute.xlu0 %19
    %vm21 = vcmask 786048
    %22 = vst.msk [vmem:[#allocation0] ss:$8 sm:$0xf] %vm21, %v20
    %s23 = scalar_lea.vmem %s0, 4
    %v24 = vld [vmem:[%s23] ss:$8 sm:$0xf]
    %25 = vrot.lane.b32.xlu0 %v24, 64
    %v26 = vpop.permute.xlu0 %25
    %vm27 = vcmask 654848
    %28 = vst.msk [vmem:[#allocation0] ss:$8 sm:$0xf] %vm27, %v26
    %s29 = scalar_lea.vmem %s0, 3
    %v30 = vld [vmem:[%s29] ss:$8 sm:$0xf]
    %31 = vrot.lane.b32.xlu0 %v30, 48
    %v32 = vpop.permute.xlu0 %31
    %vm33 = vcmask 523648
    %34 = vst.msk [vmem:[#allocation0] ss:$8 sm:$0xf] %vm33, %v32
    %s35 = scalar_lea.vmem %s0, 2
    %v36 = vld [vmem:[%s35] ss:$8 sm:$0xf]
    %37 = vrot.lane.b32.xlu0 %v36, 32
    %v38 = vpop.permute.xlu0 %37
    %vm39 = vcmask 392448
    %40 = vst.msk [vmem:[#allocation0] ss:$8 sm:$0xf] %vm39, %v38
    %s41 = scalar_lea.vmem %s0, 1
    %v42 = vld [vmem:[%s41] ss:$8 sm:$0xf]
    %43 = vrot.lane.b32.xlu0 %v42, 16
    %v44 = vpop.permute.xlu0 %43
    %vm45 = vcmask 261248
    %46 = vst.msk [vmem:[#allocation0] ss:$8 sm:$0xf] %vm45, %v44
    %s48 = sshllo.u32 0, 1
    %v50 = vld [vmem:[#allocation0] sm:%s48]
    %s51 = sshllo.u32 0, 1
    %52 = vst [vmem:[%s1] sm:%s51] %v50
    %s53 = scalar_lea.vmem [#allocation0], 8
    %v54 = vld [vmem:[%s53] sm:%s48]
    %s55 = sshllo.u32 0, 1
    %s56 = scalar_lea.vmem %s1, 1
    %57 = vst [vmem:[%s56] sm:%s55] %v54
    %s58 = scalar_lea.vmem [#allocation0], 16
    %v59 = vld [vmem:[%s58] sm:%s48]
    %s60 = sshllo.u32 0, 1
    %s61 = smul.addr 1, 2
    %s62 = scalar_lea.vmem %s1, %s61
    %63 = vst [vmem:[%s62] sm:%s60] %v59
    %s64 = scalar_lea.vmem [#allocation0], 24
    %v65 = vld [vmem:[%s64] sm:%s48]
    %s66 = sshllo.u32 0, 1
    %s67 = smul.addr 1, 3
    %s68 = scalar_lea.vmem %s1, %s67
    %69 = vst [vmem:[%s68] sm:%s66] %v65

// kernel: tile.6
$region0: #{tile.6}
  #allocation0 [shape = 's32[1]{0}', space=sflag, size = 0x4, scoped, tag = 'scoped memory for tile.6']
  %s0 = inlined_call_operand.vmem [shape: f32[16], index: 0, kind: input, shape index: {}]
  %s1 = inlined_call_operand.vmem [shape: f32[32,16], index: 1, kind: output, shape index: {}]
  // Predicated region
  $region2: #{tile.6} parent=0 // pred_check
    _
  $region3: #{tile.6} parent=0 // pred_check_branch
    %3 = sbr.rel (0) target = $region5
  $region4: #{tile.6} parent=0 // pred_region
    _
  $region5: #{tile.6} parent=0 // pred_fallthru
    _
  %v4 = vld [vmem:[%s0] ss:$0 sm:$0xff]
  %5 = vst [vmem:[%s1] sm:$0xff] %v4
  %s6 = scalar_lea.vmem %s1, 8
  %7 = vst [vmem:[%s6] sm:$0xff] %v4
  %s8 = scalar_lea.vmem %s1, 16
  %9 = vst [vmem:[%s8] sm:$0xff] %v4
  %s10 = scalar_lea.vmem %s1, 24
  %11 = vst [vmem:[%s10] sm:$0xff] %v4

// kernel: _lambda_.1
$region0: #{_lambda_.1}
  #allocation0 [shape = 'u32[]', space=smem, size = 0x4, offset = 0x4, fixed_abs, tag = 'smem constant byte address 0x4 - core index']
  #allocation1 [shape = 'u32[144,128]{1,0:T(1,128)}', space=vmem, size = 0x12000, scoped, tag = 'internal scratch']
  %s0 = inlined_call_operand.vmem [shape: f32[2,1,256], index: 0, kind: input, shape index: {}]
  %s1 = inlined_call_operand.vmem [shape: f32[8,1], index: 1, kind: input, shape index: {}]
  %s2 = inlined_call_operand.vmem [shape: f32[8,1], index: 2, kind: input, shape index: {}]
  %s3 = inlined_call_operand.vmem [shape: f32[8,8], index: 3, kind: input, shape index: {}]
  %s4 = inlined_call_operand.vmem [shape: f32[8,1], index: 4, kind: input, shape index: {}]
  %s5 = inlined_call_operand.vmem [shape: f32[8,8], index: 5, kind: input, shape index: {}]
  %s6 = inlined_call_operand.vmem [shape: f32[8,1], index: 6, kind: input, shape index: {}]
  %s7 = inlined_call_operand.vmem [shape: f32[8,8], index: 7, kind: input, shape index: {}]
  %s8 = inlined_call_operand.vmem [shape: f32[8,1], index: 8, kind: input, shape index: {}]
  %s9 = inlined_call_operand.vmem [shape: f32[8,16], index: 9, kind: input, shape index: {}]
  %s10 = inlined_call_operand.vmem [shape: f32[8,1], index: 10, kind: input, shape index: {}]
  %s11 = inlined_call_operand.vmem [shape: f32[8,8], index: 11, kind: input, shape index: {}]
  %s12 = inlined_call_operand.vmem [shape: f32[8,1], index: 12, kind: input, shape index: {}]
  %s13 = inlined_call_operand.vmem [shape: f32[8,16], index: 13, kind: input, shape index: {}]
  %s14 = inlined_call_operand.vmem [shape: f32[8,1], index: 14, kind: input, shape index: {}]
  %s15 = inlined_call_operand.vmem [shape: f32[256,256], index: 15, kind: input, shape index: {}]
  %s16 = inlined_call_operand.vmem [shape: f32[256,512], index: 16, kind: input, shape index: {}]
  %s17 = inlined_call_operand.vmem [shape: f32[1,512], index: 17, kind: input, shape index: {}]
  %s18 = inlined_call_operand.vmem [shape: f32[512,32], index: 18, kind: input, shape index: {}]
  %s19 = inlined_call_operand.vmem [shape: f32[512,32], index: 19, kind: input, shape index: {}]
  %s20 = inlined_call_operand.vmem [shape: f32[2], index: 20, kind: input, shape index: {}]
  %s21 = inlined_call_operand.vmem [shape: f32[2,8,256], index: 21, kind: output, shape index: {0}]
  %s22 = inlined_call_operand.vmem [shape: f32[2,16,256], index: 22, kind: output, shape index: {1}]
  %s23 = inlined_call_operand.vmem [shape: f32[2,2,8,32], index: 23, kind: output, shape index: {2}]
  %24 = xla_tuple %s21, %s22, %s23
  %s25 = sld [smem:[#allocation0]]
  $region137: #{_lambda_.1} parent=0
    _
  %s27 = ssub.s32 1, %s25
  %s28 = scalar_select 0, %s27, %s25
  $region1: #{_lambda_.1} parent=0
    #allocation2 [shape = 'u8[512]{0}', space=smem, size = 0x200, scoped, tag = 'input window, operand 20, single buffered']
    #allocation3 [shape = 's32[2]{0}', space=sflag, size = 0x8, scoped, tag = 'scoped memory for _lambda_.1']
    %29 = vsyncpa [#allocation3], 0
    loop: start=0, step=1, limit=4
    $region2: #{_lambda_.1} parent=1 // loop_pre_header
      _
    $region3: #{_lambda_.1} parent=1 // loop_header
      %s31 = sphi 0, %s35
      %p32 = scmp.ge.s32.totalorder %s31, 4
      %s41 = sphi 0, %s43
      %s44 = sphi 0, %s41
      %s45 = sphi 0, %s44
      %s61 = sphi 0, %s45
      %s65 = sphi 0, %s65
      %s67 = sphi 0, %s65
      %s68 = sphi 0, %s67
      %s82 = sphi 0, %s68
      %s86 = sphi 0, %s86
      %s88 = sphi 0, %s86
      %s89 = sphi 0, %s88
      %s103 = sphi 0, %s89
      %s107 = sphi 0, %s107
      %s109 = sphi 0, %s107
      %s110 = sphi 0, %s109
      %s124 = sphi 0, %s110
      %s128 = sphi 0, %s128
      %s130 = sphi 0, %s128
      %s131 = sphi 0, %s130
      %s145 = sphi 0, %s131
      %s149 = sphi 0, %s149
      %s151 = sphi 0, %s149
      %s152 = sphi 0, %s151
      %s166 = sphi 0, %s152
      %s170 = sphi 0, %s170
      %s172 = sphi 0, %s170
      %s173 = sphi 0, %s172
      %s187 = sphi 0, %s173
      %s191 = sphi 0, %s191
      %s193 = sphi 0, %s191
      %s194 = sphi 0, %s193
      %s208 = sphi 0, %s194
      %s212 = sphi 0, %s212
      %s214 = sphi 0, %s212
      %s215 = sphi 0, %s214
      %s229 = sphi 0, %s215
      %s233 = sphi 0, %s233
      %s235 = sphi 0, %s233
      %s236 = sphi 0, %s235
      %s250 = sphi 0, %s236
      %s254 = sphi 0, %s254
      %s256 = sphi 0, %s254
      %s257 = sphi 0, %s256
      %s271 = sphi 0, %s257
      %s275 = sphi 0, %s275
      %s277 = sphi 0, %s275
      %s278 = sphi 0, %s277
      %s292 = sphi 0, %s278
      %s296 = sphi 0, %s296
      %s298 = sphi 0, %s296
      %s299 = sphi 0, %s298
      %s313 = sphi 0, %s299
      %s317 = sphi 0, %s317
      %s319 = sphi 0, %s317
      %s320 = sphi 0, %s319
      %s334 = sphi 0, %s320
      %s338 = sphi 0, %s338
      %s340 = sphi 0, %s338
      %s341 = sphi 0, %s340
      %s355 = sphi 0, %s341
      %s359 = sphi 0, %s359
      %s361 = sphi 0, %s359
      %s362 = sphi 0, %s361
      %s376 = sphi 0, %s362
      %s380 = sphi 0, %s380
      %s382 = sphi 0, %s380
      %s383 = sphi 0, %s382
      %s397 = sphi 0, %s383
      %s401 = sphi 0, %s401
      %s403 = sphi 0, %s401
      %s404 = sphi 0, %s403
      %s418 = sphi 0, %s404
      %s422 = sphi 0, %s422
      %s424 = sphi 0, %s422
      %s425 = sphi 0, %s424
      %s439 = sphi 0, %s425
      %s443 = sphi 0, %s443
      %s445 = sphi 0, %s443
      %s446 = sphi 0, %s445
      %s460 = sphi 0, %s446
      %s464 = sphi 0, %s464
      %s466 = sphi 0, %s464
      %s467 = sphi 0, %s466
      %s481 = sphi 0, %s467
      %s487 = sphi 0, %s489
      %s490 = sphi 0, %s487
      %s491 = sphi 0, %s490
      %s507 = sphi 0, %s491
      %s513 = sphi 0, %s515
      %s516 = sphi 0, %s513
      %s517 = sphi 0, %s516
      %s533 = sphi 0, %s517
      %s539 = sphi 0, %s541
      %s542 = sphi 0, %s539
      %s543 = sphi 0, %s542
      %s559 = sphi 0, %s543
    $region4: #{_lambda_.1} parent=1 // loop_header_branch
      %34 = sbr.rel (%p32) target = $region8
    $region5: #{_lambda_.1} parent=1 // loop_body
      %s36 = ssub.s32 %s31, 1
      %s37 = ssub.s32 %s31, 2
      %s38 = sadd.s32 %s31, 1
      %s39 = ssub.s32 %s31, %s38
      %p40 = scmp.eq.s32.totalorder %s39, 0
      %s42 = sadd.s32 %s41, 1
      %s43 = scalar_select %p40, %s41, %s42
      %p46 = pneg %p40
      %p47 = scmp.eq.s32.totalorder %s31, 1
      %p48 = por %p46, %p47
      %p49 = scmp.ne.s32.totalorder %s41, %s44
      %p50 = scmp.eq.s32.totalorder %s31, 0
      %p51 = por %p49, %p50
      %p52 = scmp.ne.s32.totalorder %s41, %s44
      %p53 = scmp.eq.s32.totalorder %s36, 1
      %p54 = por %p52, %p53
      %p55 = scmp.ne.s32.totalorder %s44, %s45
      %p56 = scmp.eq.s32.totalorder %s36, 0
      %p57 = por %p55, %p56
      %p58 = scmp.ne.s32.totalorder %s44, %s45
      %p59 = scmp.eq.s32.totalorder %s37, 1
      %p60 = por %p58, %p59
      %p62 = scmp.ne.s32.totalorder %s45, %s61
      %p63 = scmp.eq.s32.totalorder %s37, 0
      %p64 = por %p62, %p63
      %s66 = sadd.s32 %s65, 1
      %p69 = scmp.eq.s32.totalorder %s31, 1
      %p70 = scmp.ne.s32.totalorder %s65, %s67
      %p71 = scmp.eq.s32.totalorder %s31, 0
      %p72 = por %p70, %p71
      %p73 = scmp.ne.s32.totalorder %s65, %s67
      %p74 = scmp.eq.s32.totalorder %s36, 1
      %p75 = por %p73, %p74
      %p76 = scmp.ne.s32.totalorder %s67, %s68
      %p77 = scmp.eq.s32.totalorder %s36, 0
      %p78 = por %p76, %p77
      %p79 = scmp.ne.s32.totalorder %s67, %s68
      %p80 = scmp.eq.s32.totalorder %s37, 1
      %p81 = por %p79, %p80
      %p83 = scmp.ne.s32.totalorder %s68, %s82
      %p84 = scmp.eq.s32.totalorder %s37, 0
      %p85 = por %p83, %p84
      %s87 = sadd.s32 %s86, 1
      %p90 = scmp.eq.s32.totalorder %s31, 1
      %p91 = scmp.ne.s32.totalorder %s86, %s88
      %p92 = scmp.eq.s32.totalorder %s31, 0
      %p93 = por %p91, %p92
      %p94 = scmp.ne.s32.totalorder %s86, %s88
      %p95 = scmp.eq.s32.totalorder %s36, 1
      %p96 = por %p94, %p95
      %p97 = scmp.ne.s32.totalorder %s88, %s89
      %p98 = scmp.eq.s32.totalorder %s36, 0
      %p99 = por %p97, %p98
      %p100 = scmp.ne.s32.totalorder %s88, %s89
      %p101 = scmp.eq.s32.totalorder %s37, 1
      %p102 = por %p100, %p101
      %p104 = scmp.ne.s32.totalorder %s89, %s103
      %p105 = scmp.eq.s32.totalorder %s37, 0
      %p106 = por %p104, %p105
      %s108 = sadd.s32 %s107, 1
      %p111 = scmp.eq.s32.totalorder %s31, 1
      %p112 = scmp.ne.s32.totalorder %s107, %s109
      %p113 = scmp.eq.s32.totalorder %s31, 0
      %p114 = por %p112, %p113
      %p115 = scmp.ne.s32.totalorder %s107, %s109
      %p116 = scmp.eq.s32.totalorder %s36, 1
      %p117 = por %p115, %p116
      %p118 = scmp.ne.s32.totalorder %s109, %s110
      %p119 = scmp.eq.s32.totalorder %s36, 0
      %p120 = por %p118, %p119
      %p121 = scmp.ne.s32.totalorder %s109, %s110
      %p122 = scmp.eq.s32.totalorder %s37, 1
      %p123 = por %p121, %p122
      %p125 = scmp.ne.s32.totalorder %s110, %s124
      %p126 = scmp.eq.s32.totalorder %s37, 0
      %p127 = por %p125, %p126
      %s129 = sadd.s32 %s128, 1
      %p132 = scmp.eq.s32.totalorder %s31, 1
      %p133 = scmp.ne.s32.totalorder %s128, %s130
      %p134 = scmp.eq.s32.totalorder %s31, 0
      %p135 = por %p133, %p134
      %p136 = scmp.ne.s32.totalorder %s128, %s130
      %p137 = scmp.eq.s32.totalorder %s36, 1
      %p138 = por %p136, %p137
      %p139 = scmp.ne.s32.totalorder %s130, %s131
      %p140 = scmp.eq.s32.totalorder %s36, 0
      %p141 = por %p139, %p140
      %p142 = scmp.ne.s32.totalorder %s130, %s131
      %p143 = scmp.eq.s32.totalorder %s37, 1
      %p144 = por %p142, %p143
      %p146 = scmp.ne.s32.totalorder %s131, %s145
      %p147 = scmp.eq.s32.totalorder %s37, 0
      %p148 = por %p146, %p147
      %s150 = sadd.s32 %s149, 1
      %p153 = scmp.eq.s32.totalorder %s31, 1
      %p154 = scmp.ne.s32.totalorder %s149, %s151
      %p155 = scmp.eq.s32.totalorder %s31, 0
      %p156 = por %p154, %p155
      %p157 = scmp.ne.s32.totalorder %s149, %s151
      %p158 = scmp.eq.s32.totalorder %s36, 1
      %p159 = por %p157, %p158
      %p160 = scmp.ne.s32.totalorder %s151, %s152
      %p161 = scmp.eq.s32.totalorder %s36, 0
      %p162 = por %p160, %p161
      %p163 = scmp.ne.s32.totalorder %s151, %s152
      %p164 = scmp.eq.s32.totalorder %s37, 1
      %p165 = por %p163, %p164
      %p167 = scmp.ne.s32.totalorder %s152, %s166
      %p168 = scmp.eq.s32.totalorder %s37, 0
      %p169 = por %p167, %p168
      %s171 = sadd.s32 %s170, 1
      %p174 = scmp.eq.s32.totalorder %s31, 1
      %p175 = scmp.ne.s32.totalorder %s170, %s172
      %p176 = scmp.eq.s32.totalorder %s31, 0
      %p177 = por %p175, %p176
      %p178 = scmp.ne.s32.totalorder %s170, %s172
      %p179 = scmp.eq.s32.totalorder %s36, 1
      %p180 = por %p178, %p179
      %p181 = scmp.ne.s32.totalorder %s172, %s173
      %p182 = scmp.eq.s32.totalorder %s36, 0
      %p183 = por %p181, %p182
      %p184 = scmp.ne.s32.totalorder %s172, %s173
      %p185 = scmp.eq.s32.totalorder %s37, 1
      %p186 = por %p184, %p185
      %p188 = scmp.ne.s32.totalorder %s173, %s187
      %p189 = scmp.eq.s32.totalorder %s37, 0
      %p190 = por %p188, %p189
      %s192 = sadd.s32 %s191, 1
      %p195 = scmp.eq.s32.totalorder %s31, 1
      %p196 = scmp.ne.s32.totalorder %s191, %s193
      %p197 = scmp.eq.s32.totalorder %s31, 0
      %p198 = por %p196, %p197
      %p199 = scmp.ne.s32.totalorder %s191, %s193
      %p200 = scmp.eq.s32.totalorder %s36, 1
      %p201 = por %p199, %p200
      %p202 = scmp.ne.s32.totalorder %s193, %s194
      %p203 = scmp.eq.s32.totalorder %s36, 0
      %p204 = por %p202, %p203
      %p205 = scmp.ne.s32.totalorder %s193, %s194
      %p206 = scmp.eq.s32.totalorder %s37, 1
      %p207 = por %p205, %p206
      %p209 = scmp.ne.s32.totalorder %s194, %s208
      %p210 = scmp.eq.s32.totalorder %s37, 0
      %p211 = por %p209, %p210
      %s213 = sadd.s32 %s212, 1
      %p216 = scmp.eq.s32.totalorder %s31, 1
      %p217 = scmp.ne.s32.totalorder %s212, %s214
      %p218 = scmp.eq.s32.totalorder %s31, 0
      %p219 = por %p217, %p218
      %p220 = scmp.ne.s32.totalorder %s212, %s214
      %p221 = scmp.eq.s32.totalorder %s36, 1
      %p222 = por %p220, %p221
      %p223 = scmp.ne.s32.totalorder %s214, %s215
      %p224 = scmp.eq.s32.totalorder %s36, 0
      %p225 = por %p223, %p224
      %p226 = scmp.ne.s32.totalorder %s214, %s215
      %p227 = scmp.eq.s32.totalorder %s37, 1
      %p228 = por %p226, %p227
      %p230 = scmp.ne.s32.totalorder %s215, %s229
      %p231 = scmp.eq.s32.totalorder %s37, 0
      %p232 = por %p230, %p231
      %s234 = sadd.s32 %s233, 1
      %p237 = scmp.eq.s32.totalorder %s31, 1
      %p238 = scmp.ne.s32.totalorder %s233, %s235
      %p239 = scmp.eq.s32.totalorder %s31, 0
      %p240 = por %p238, %p239
      %p241 = scmp.ne.s32.totalorder %s233, %s235
      %p242 = scmp.eq.s32.totalorder %s36, 1
      %p243 = por %p241, %p242
      %p244 = scmp.ne.s32.totalorder %s235, %s236
      %p245 = scmp.eq.s32.totalorder %s36, 0
      %p246 = por %p244, %p245
      %p247 = scmp.ne.s32.totalorder %s235, %s236
      %p248 = scmp.eq.s32.totalorder %s37, 1
      %p249 = por %p247, %p248
      %p251 = scmp.ne.s32.totalorder %s236, %s250
      %p252 = scmp.eq.s32.totalorder %s37, 0
      %p253 = por %p251, %p252
      %s255 = sadd.s32 %s254, 1
      %p258 = scmp.eq.s32.totalorder %s31, 1
      %p259 = scmp.ne.s32.totalorder %s254, %s256
      %p260 = scmp.eq.s32.totalorder %s31, 0
      %p261 = por %p259, %p260
      %p262 = scmp.ne.s32.totalorder %s254, %s256
      %p263 = scmp.eq.s32.totalorder %s36, 1
      %p264 = por %p262, %p263
      %p265 = scmp.ne.s32.totalorder %s256, %s257
      %p266 = scmp.eq.s32.totalorder %s36, 0
      %p267 = por %p265, %p266
      %p268 = scmp.ne.s32.totalorder %s256, %s257
      %p269 = scmp.eq.s32.totalorder %s37, 1
      %p270 = por %p268, %p269
      %p272 = scmp.ne.s32.totalorder %s257, %s271
      %p273 = scmp.eq.s32.totalorder %s37, 0
      %p274 = por %p272, %p273
      %s276 = sadd.s32 %s275, 1
      %p279 = scmp.eq.s32.totalorder %s31, 1
      %p280 = scmp.ne.s32.totalorder %s275, %s277
      %p281 = scmp.eq.s32.totalorder %s31, 0
      %p282 = por %p280, %p281
      %p283 = scmp.ne.s32.totalorder %s275, %s277
      %p284 = scmp.eq.s32.totalorder %s36, 1
      %p285 = por %p283, %p284
      %p286 = scmp.ne.s32.totalorder %s277, %s278
      %p287 = scmp.eq.s32.totalorder %s36, 0
      %p288 = por %p286, %p287
      %p289 = scmp.ne.s32.totalorder %s277, %s278
      %p290 = scmp.eq.s32.totalorder %s37, 1
      %p291 = por %p289, %p290
      %p293 = scmp.ne.s32.totalorder %s278, %s292
      %p294 = scmp.eq.s32.totalorder %s37, 0
      %p295 = por %p293, %p294
      %s297 = sadd.s32 %s296, 1
      %p300 = scmp.eq.s32.totalorder %s31, 1
      %p301 = scmp.ne.s32.totalorder %s296, %s298
      %p302 = scmp.eq.s32.totalorder %s31, 0
      %p303 = por %p301, %p302
      %p304 = scmp.ne.s32.totalorder %s296, %s298
      %p305 = scmp.eq.s32.totalorder %s36, 1
      %p306 = por %p304, %p305
      %p307 = scmp.ne.s32.totalorder %s298, %s299
      %p308 = scmp.eq.s32.totalorder %s36, 0
      %p309 = por %p307, %p308
      %p310 = scmp.ne.s32.totalorder %s298, %s299
      %p311 = scmp.eq.s32.totalorder %s37, 1
      %p312 = por %p310, %p311
      %p314 = scmp.ne.s32.totalorder %s299, %s313
      %p315 = scmp.eq.s32.totalorder %s37, 0
      %p316 = por %p314, %p315
      %s318 = sadd.s32 %s317, 1
      %p321 = scmp.eq.s32.totalorder %s31, 1
      %p322 = scmp.ne.s32.totalorder %s317, %s319
      %p323 = scmp.eq.s32.totalorder %s31, 0
      %p324 = por %p322, %p323
      %p325 = scmp.ne.s32.totalorder %s317, %s319
      %p326 = scmp.eq.s32.totalorder %s36, 1
      %p327 = por %p325, %p326
      %p328 = scmp.ne.s32.totalorder %s319, %s320
      %p329 = scmp.eq.s32.totalorder %s36, 0
      %p330 = por %p328, %p329
      %p331 = scmp.ne.s32.totalorder %s319, %s320
      %p332 = scmp.eq.s32.totalorder %s37, 1
      %p333 = por %p331, %p332
      %p335 = scmp.ne.s32.totalorder %s320, %s334
      %p336 = scmp.eq.s32.totalorder %s37, 0
      %p337 = por %p335, %p336
      %s339 = sadd.s32 %s338, 1
      %p342 = scmp.eq.s32.totalorder %s31, 1
      %p343 = scmp.ne.s32.totalorder %s338, %s340
      %p344 = scmp.eq.s32.totalorder %s31, 0
      %p345 = por %p343, %p344
      %p346 = scmp.ne.s32.totalorder %s338, %s340
      %p347 = scmp.eq.s32.totalorder %s36, 1
      %p348 = por %p346, %p347
      %p349 = scmp.ne.s32.totalorder %s340, %s341
      %p350 = scmp.eq.s32.totalorder %s36, 0
      %p351 = por %p349, %p350
      %p352 = scmp.ne.s32.totalorder %s340, %s341
      %p353 = scmp.eq.s32.totalorder %s37, 1
      %p354 = por %p352, %p353
      %p356 = scmp.ne.s32.totalorder %s341, %s355
      %p357 = scmp.eq.s32.totalorder %s37, 0
      %p358 = por %p356, %p357
      %s360 = sadd.s32 %s359, 1
      %p363 = scmp.eq.s32.totalorder %s31, 1
      %p364 = scmp.ne.s32.totalorder %s359, %s361
      %p365 = scmp.eq.s32.totalorder %s31, 0
      %p366 = por %p364, %p365
      %p367 = scmp.ne.s32.totalorder %s359, %s361
      %p368 = scmp.eq.s32.totalorder %s36, 1
      %p369 = por %p367, %p368
      %p370 = scmp.ne.s32.totalorder %s361, %s362
      %p371 = scmp.eq.s32.totalorder %s36, 0
      %p372 = por %p370, %p371
      %p373 = scmp.ne.s32.totalorder %s361, %s362
      %p374 = scmp.eq.s32.totalorder %s37, 1
      %p375 = por %p373, %p374
      %p377 = scmp.ne.s32.totalorder %s362, %s376
      %p378 = scmp.eq.s32.totalorder %s37, 0
      %p379 = por %p377, %p378
      %s381 = sadd.s32 %s380, 1
      %p384 = scmp.eq.s32.totalorder %s31, 1
      %p385 = scmp.ne.s32.totalorder %s380, %s382
      %p386 = scmp.eq.s32.totalorder %s31, 0
      %p387 = por %p385, %p386
      %p388 = scmp.ne.s32.totalorder %s380, %s382
      %p389 = scmp.eq.s32.totalorder %s36, 1
      %p390 = por %p388, %p389
      %p391 = scmp.ne.s32.totalorder %s382, %s383
      %p392 = scmp.eq.s32.totalorder %s36, 0
      %p393 = por %p391, %p392
      %p394 = scmp.ne.s32.totalorder %s382, %s383
      %p395 = scmp.eq.s32.totalorder %s37, 1
      %p396 = por %p394, %p395
      %p398 = scmp.ne.s32.totalorder %s383, %s397
      %p399 = scmp.eq.s32.totalorder %s37, 0
      %p400 = por %p398, %p399
      %s402 = sadd.s32 %s401, 1
      %p405 = scmp.eq.s32.totalorder %s31, 1
      %p406 = scmp.ne.s32.totalorder %s401, %s403
      %p407 = scmp.eq.s32.totalorder %s31, 0
      %p408 = por %p406, %p407
      %p409 = scmp.ne.s32.totalorder %s401, %s403
      %p410 = scmp.eq.s32.totalorder %s36, 1
      %p411 = por %p409, %p410
      %p412 = scmp.ne.s32.totalorder %s403, %s404
      %p413 = scmp.eq.s32.totalorder %s36, 0
      %p414 = por %p412, %p413
      %p415 = scmp.ne.s32.totalorder %s403, %s404
      %p416 = scmp.eq.s32.totalorder %s37, 1
      %p417 = por %p415, %p416
      %p419 = scmp.ne.s32.totalorder %s404, %s418
      %p420 = scmp.eq.s32.totalorder %s37, 0
      %p421 = por %p419, %p420
      %s423 = sadd.s32 %s422, 1
      %p426 = scmp.eq.s32.totalorder %s31, 1
      %p427 = scmp.ne.s32.totalorder %s422, %s424
      %p428 = scmp.eq.s32.totalorder %s31, 0
      %p429 = por %p427, %p428
      %p430 = scmp.ne.s32.totalorder %s422, %s424
      %p431 = scmp.eq.s32.totalorder %s36, 1
      %p432 = por %p430, %p431
      %p433 = scmp.ne.s32.totalorder %s424, %s425
      %p434 = scmp.eq.s32.totalorder %s36, 0
      %p435 = por %p433, %p434
      %p436 = scmp.ne.s32.totalorder %s424, %s425
      %p437 = scmp.eq.s32.totalorder %s37, 1
      %p438 = por %p436, %p437
      %p440 = scmp.ne.s32.totalorder %s425, %s439
      %p441 = scmp.eq.s32.totalorder %s37, 0
      %p442 = por %p440, %p441
      %s444 = sadd.s32 %s443, 1
      %p447 = scmp.eq.s32.totalorder %s31, 1
      %p448 = scmp.ne.s32.totalorder %s443, %s445
      %p449 = scmp.eq.s32.totalorder %s31, 0
      %p450 = por %p448, %p449
      %p451 = scmp.ne.s32.totalorder %s443, %s445
      %p452 = scmp.eq.s32.totalorder %s36, 1
      %p453 = por %p451, %p452
      %p454 = scmp.ne.s32.totalorder %s445, %s446
      %p455 = scmp.eq.s32.totalorder %s36, 0
      %p456 = por %p454, %p455
      %p457 = scmp.ne.s32.totalorder %s445, %s446
      %p458 = scmp.eq.s32.totalorder %s37, 1
      %p459 = por %p457, %p458
      %p461 = scmp.ne.s32.totalorder %s446, %s460
      %p462 = scmp.eq.s32.totalorder %s37, 0
      %p463 = por %p461, %p462
      %s465 = sadd.s32 %s464, 1
      %p468 = scmp.eq.s32.totalorder %s31, 1
      %p469 = scmp.ne.s32.totalorder %s464, %s466
      %p470 = scmp.eq.s32.totalorder %s31, 0
      %p471 = por %p469, %p470
      %p472 = scmp.ne.s32.totalorder %s464, %s466
      %p473 = scmp.eq.s32.totalorder %s36, 1
      %p474 = por %p472, %p473
      %p475 = scmp.ne.s32.totalorder %s466, %s467
      %p476 = scmp.eq.s32.totalorder %s36, 0
      %p477 = por %p475, %p476
      %p478 = scmp.ne.s32.totalorder %s466, %s467
      %p479 = scmp.eq.s32.totalorder %s37, 1
      %p480 = por %p478, %p479
      %p482 = scmp.ne.s32.totalorder %s467, %s481
      %p483 = scmp.eq.s32.totalorder %s37, 0
      %p484 = por %p482, %p483
      %s485 = ssub.s32 %s31, %s38
      %p486 = scmp.eq.s32.totalorder %s485, 0
      %s488 = sadd.s32 %s487, 1
      %s489 = scalar_select %p486, %s487, %s488
      %p492 = pneg %p486
      %p493 = scmp.eq.s32.totalorder %s31, 1
      %p494 = por %p492, %p493
      %p495 = scmp.ne.s32.totalorder %s487, %s490
      %p496 = scmp.eq.s32.totalorder %s31, 0
      %p497 = por %p495, %p496
      %p498 = scmp.ne.s32.totalorder %s487, %s490
      %p499 = scmp.eq.s32.totalorder %s36, 1
      %p500 = por %p498, %p499
      %p501 = scmp.ne.s32.totalorder %s490, %s491
      %p502 = scmp.eq.s32.totalorder %s36, 0
      %p503 = por %p501, %p502
      %p504 = scmp.ne.s32.totalorder %s490, %s491
      %p505 = scmp.eq.s32.totalorder %s37, 1
      %p506 = por %p504, %p505
      %p508 = scmp.ne.s32.totalorder %s491, %s507
      %p509 = scmp.eq.s32.totalorder %s37, 0
      %p510 = por %p508, %p509
      %s511 = ssub.s32 %s31, %s38
      %p512 = scmp.eq.s32.totalorder %s511, 0
      %s514 = sadd.s32 %s513, 1
      %s515 = scalar_select %p512, %s513, %s514
      %p518 = pneg %p512
      %p519 = scmp.eq.s32.totalorder %s31, 1
      %p520 = por %p518, %p519
      %p521 = scmp.ne.s32.totalorder %s513, %s516
      %p522 = scmp.eq.s32.totalorder %s31, 0
      %p523 = por %p521, %p522
      %p524 = scmp.ne.s32.totalorder %s513, %s516
      %p525 = scmp.eq.s32.totalorder %s36, 1
      %p526 = por %p524, %p525
      %p527 = scmp.ne.s32.totalorder %s516, %s517
      %p528 = scmp.eq.s32.totalorder %s36, 0
      %p529 = por %p527, %p528
      %p530 = scmp.ne.s32.totalorder %s516, %s517
      %p531 = scmp.eq.s32.totalorder %s37, 1
      %p532 = por %p530, %p531
      %p534 = scmp.ne.s32.totalorder %s517, %s533
      %p535 = scmp.eq.s32.totalorder %s37, 0
      %p536 = por %p534, %p535
      %s537 = ssub.s32 %s31, %s38
      %p538 = scmp.eq.s32.totalorder %s537, 0
      %s540 = sadd.s32 %s539, 1
      %s541 = scalar_select %p538, %s539, %s540
      %p544 = pneg %p538
      %p545 = scmp.eq.s32.totalorder %s31, 1
      %p546 = por %p544, %p545
      %p547 = scmp.ne.s32.totalorder %s539, %s542
      %p548 = scmp.eq.s32.totalorder %s31, 0
      %p549 = por %p547, %p548
      %p550 = scmp.ne.s32.totalorder %s539, %s542
      %p551 = scmp.eq.s32.totalorder %s36, 1
      %p552 = por %p550, %p551
      %p553 = scmp.ne.s32.totalorder %s542, %s543
      %p554 = scmp.eq.s32.totalorder %s36, 0
      %p555 = por %p553, %p554
      %p556 = scmp.ne.s32.totalorder %s542, %s543
      %p557 = scmp.eq.s32.totalorder %s37, 1
      %p558 = por %p556, %p557
      %p560 = scmp.ne.s32.totalorder %s543, %s559
      %p561 = scmp.eq.s32.totalorder %s37, 0
      %p562 = por %p560, %p561
      %p563 = scmp.le.s32.totalorder 1, %s31
      %p564 = scmp.lt.s32.totalorder %s31, 3
      %p565 = pnand %p563, %p564
      %p566 = pneg %p565
      // Predicated region
      $region9: #{_lambda_.1} parent=5 // pred_check
        _
      $region10: #{_lambda_.1} parent=5 // pred_check_branch
        %568 = sbr.rel (%p565) target = $region12
      $region11: #{_lambda_.1} parent=5 // pred_region
        %s569 = ssub.s32 %s31, 1
        // Predicated region
        $region13: #{_lambda_.1} parent=11 // pred_check
          %p570 = pneg %p78
        $region14: #{_lambda_.1} parent=11 // pred_check_branch
          %572 = sbr.rel (%p570) target = $region16
        $region15: #{_lambda_.1} parent=11 // pred_region
          _
        $region16: #{_lambda_.1} parent=11 // pred_fallthru
          _
        // Predicated region
        $region17: #{_lambda_.1} parent=11 // pred_check
          %p573 = pneg %p99
        $region18: #{_lambda_.1} parent=11 // pred_check_branch
          %575 = sbr.rel (%p573) target = $region20
        $region19: #{_lambda_.1} parent=11 // pred_region
          _
        $region20: #{_lambda_.1} parent=11 // pred_fallthru
          _
        // Predicated region
        $region21: #{_lambda_.1} parent=11 // pred_check
          %p576 = pneg %p120
        $region22: #{_lambda_.1} parent=11 // pred_check_branch
          %578 = sbr.rel (%p576) target = $region24
        $region23: #{_lambda_.1} parent=11 // pred_region
          _
        $region24: #{_lambda_.1} parent=11 // pred_fallthru
          _
        // Predicated region
        $region25: #{_lambda_.1} parent=11 // pred_check
          %p579 = pneg %p141
        $region26: #{_lambda_.1} parent=11 // pred_check_branch
          %581 = sbr.rel (%p579) target = $region28
        $region27: #{_lambda_.1} parent=11 // pred_region
          _
        $region28: #{_lambda_.1} parent=11 // pred_fallthru
          _
        // Predicated region
        $region29: #{_lambda_.1} parent=11 // pred_check
          %p582 = pneg %p162
        $region30: #{_lambda_.1} parent=11 // pred_check_branch
          %584 = sbr.rel (%p582) target = $region32
        $region31: #{_lambda_.1} parent=11 // pred_region
          _
        $region32: #{_lambda_.1} parent=11 // pred_fallthru
          _
        // Predicated region
        $region33: #{_lambda_.1} parent=11 // pred_check
          %p585 = pneg %p183
        $region34: #{_lambda_.1} parent=11 // pred_check_branch
          %587 = sbr.rel (%p585) target = $region36
        $region35: #{_lambda_.1} parent=11 // pred_region
          _
        $region36: #{_lambda_.1} parent=11 // pred_fallthru
          _
        // Predicated region
        $region37: #{_lambda_.1} parent=11 // pred_check
          %p588 = pneg %p204
        $region38: #{_lambda_.1} parent=11 // pred_check_branch
          %590 = sbr.rel (%p588) target = $region40
        $region39: #{_lambda_.1} parent=11 // pred_region
          _
        $region40: #{_lambda_.1} parent=11 // pred_fallthru
          _
        // Predicated region
        $region41: #{_lambda_.1} parent=11 // pred_check
          %p591 = pneg %p225
        $region42: #{_lambda_.1} parent=11 // pred_check_branch
          %593 = sbr.rel (%p591) target = $region44
        $region43: #{_lambda_.1} parent=11 // pred_region
          _
        $region44: #{_lambda_.1} parent=11 // pred_fallthru
          _
        // Predicated region
        $region45: #{_lambda_.1} parent=11 // pred_check
          %p594 = pneg %p246
        $region46: #{_lambda_.1} parent=11 // pred_check_branch
          %596 = sbr.rel (%p594) target = $region48
        $region47: #{_lambda_.1} parent=11 // pred_region
          _
        $region48: #{_lambda_.1} parent=11 // pred_fallthru
          _
        // Predicated region
        $region49: #{_lambda_.1} parent=11 // pred_check
          %p597 = pneg %p267
        $region50: #{_lambda_.1} parent=11 // pred_check_branch
          %599 = sbr.rel (%p597) target = $region52
        $region51: #{_lambda_.1} parent=11 // pred_region
          _
        $region52: #{_lambda_.1} parent=11 // pred_fallthru
          _
        // Predicated region
        $region53: #{_lambda_.1} parent=11 // pred_check
          %p600 = pneg %p288
        $region54: #{_lambda_.1} parent=11 // pred_check_branch
          %602 = sbr.rel (%p600) target = $region56
        $region55: #{_lambda_.1} parent=11 // pred_region
          _
        $region56: #{_lambda_.1} parent=11 // pred_fallthru
          _
        // Predicated region
        $region57: #{_lambda_.1} parent=11 // pred_check
          %p603 = pneg %p309
        $region58: #{_lambda_.1} parent=11 // pred_check_branch
          %605 = sbr.rel (%p603) target = $region60
        $region59: #{_lambda_.1} parent=11 // pred_region
          _
        $region60: #{_lambda_.1} parent=11 // pred_fallthru
          _
        // Predicated region
        $region61: #{_lambda_.1} parent=11 // pred_check
          %p606 = pneg %p330
        $region62: #{_lambda_.1} parent=11 // pred_check_branch
          %608 = sbr.rel (%p606) target = $region64
        $region63: #{_lambda_.1} parent=11 // pred_region
          _
        $region64: #{_lambda_.1} parent=11 // pred_fallthru
          _
        // Predicated region
        $region65: #{_lambda_.1} parent=11 // pred_check
          %p609 = pneg %p351
        $region66: #{_lambda_.1} parent=11 // pred_check_branch
          %611 = sbr.rel (%p609) target = $region68
        $region67: #{_lambda_.1} parent=11 // pred_region
          _
        $region68: #{_lambda_.1} parent=11 // pred_fallthru
          _
        // Predicated region
        $region69: #{_lambda_.1} parent=11 // pred_check
          %p612 = pneg %p372
        $region70: #{_lambda_.1} parent=11 // pred_check_branch
          %614 = sbr.rel (%p612) target = $region72
        $region71: #{_lambda_.1} parent=11 // pred_region
          _
        $region72: #{_lambda_.1} parent=11 // pred_fallthru
          _
        // Predicated region
        $region73: #{_lambda_.1} parent=11 // pred_check
          %p615 = pneg %p393
        $region74: #{_lambda_.1} parent=11 // pred_check_branch
          %617 = sbr.rel (%p615) target = $region76
        $region75: #{_lambda_.1} parent=11 // pred_region
          _
        $region76: #{_lambda_.1} parent=11 // pred_fallthru
          _
        // Predicated region
        $region77: #{_lambda_.1} parent=11 // pred_check
          %p618 = pneg %p414
        $region78: #{_lambda_.1} parent=11 // pred_check_branch
          %620 = sbr.rel (%p618) target = $region80
        $region79: #{_lambda_.1} parent=11 // pred_region
          _
        $region80: #{_lambda_.1} parent=11 // pred_fallthru
          _
        // Predicated region
        $region81: #{_lambda_.1} parent=11 // pred_check
          %p621 = pneg %p435
        $region82: #{_lambda_.1} parent=11 // pred_check_branch
          %623 = sbr.rel (%p621) target = $region84
        $region83: #{_lambda_.1} parent=11 // pred_region
          _
        $region84: #{_lambda_.1} parent=11 // pred_fallthru
          _
        // Predicated region
        $region85: #{_lambda_.1} parent=11 // pred_check
          %p624 = pneg %p456
        $region86: #{_lambda_.1} parent=11 // pred_check_branch
          %626 = sbr.rel (%p624) target = $region88
        $region87: #{_lambda_.1} parent=11 // pred_region
          _
        $region88: #{_lambda_.1} parent=11 // pred_fallthru
          _
        // Predicated region
        $region89: #{_lambda_.1} parent=11 // pred_check
          %p627 = pneg %p477
        $region90: #{_lambda_.1} parent=11 // pred_check_branch
          %629 = sbr.rel (%p627) target = $region92
        $region91: #{_lambda_.1} parent=11 // pred_region
          %s631 = ssub.s32 16, 16
          %632 = vsyncadd [#allocation3], %s631
          %s634 = sshll.u32 %s20, 4
          %s635 = int_to_ptr.vmem [resolvable:$true] %s634
          %637 = dma.vmem_to_smem %s635, 16, [#allocation2], [#allocation3]
        $region92: #{_lambda_.1} parent=11 // pred_fallthru
          _
      $region12: #{_lambda_.1} parent=5 // pred_fallthru
        _
      %p638 = scmp.lt.s32.totalorder %s31, 2
      // Predicated region
      $region93: #{_lambda_.1} parent=5 // pred_check
        %p639 = pneg %p638
      $region94: #{_lambda_.1} parent=5 // pred_check_branch
        %641 = sbr.rel (%p639) target = $region96
      $region95: #{_lambda_.1} parent=5 // pred_region
        // Predicated region
        $region97: #{_lambda_.1} parent=95 // pred_check
          %p642 = pneg %p51
        $region98: #{_lambda_.1} parent=95 // pred_check_branch
          %644 = sbr.rel (%p642) target = $region100
        $region99: #{_lambda_.1} parent=95 // pred_region
          %p645 = scmp.lt.s32.totalorder %s31, 1
          %s646 = scalar_select %p645, %s31, 1
          %s647 = smul.addr %s646, 2
          %s648 = scalar_lea.vmem %s0, %s647
        $region100: #{_lambda_.1} parent=95 // pred_fallthru
          _
      $region96: #{_lambda_.1} parent=5 // pred_fallthru
        _
      %p649 = scmp.le.s32.totalorder 1, %s31
      %p650 = scmp.lt.s32.totalorder %s31, 3
      %p651 = pnand %p649, %p650
      %p652 = pneg %p651
      // Predicated region
      $region101: #{_lambda_.1} parent=5 // pred_check
        _
      $region102: #{_lambda_.1} parent=5 // pred_check_branch
        %654 = sbr.rel (%p651) target = $region104
      $region103: #{_lambda_.1} parent=5 // pred_region
        %s655 = ssub.s32 %s31, 1
        // Predicated region
        $region105: #{_lambda_.1} parent=103 // pred_check
          %p656 = pneg %p477
        $region106: #{_lambda_.1} parent=103 // pred_check_branch
          %658 = sbr.rel (%p656) target = $region108
        $region107: #{_lambda_.1} parent=103 // pred_region
          %659 = dma.done [#allocation3], 16
        $region108: #{_lambda_.1} parent=103 // pred_fallthru
          _
        %660 = sfence
        %p661 = scmp.lt.s32.totalorder %s36, 1
        %s662 = scalar_select %p661, %s36, 1
        %s663 = smul.addr %s662, 2
        %s664 = scalar_lea.vmem %s0, %s663
        %p665 = pneg %p57
        %p666 = pneg %p54
        %p667 = pneg %p78
        %p668 = pneg %p75
        %p669 = pneg %p99
        %p670 = pneg %p96
        %p671 = pneg %p120
        %p672 = pneg %p117
        %p673 = pneg %p141
        %p674 = pneg %p138
        %p675 = pneg %p162
        %p676 = pneg %p159
        %p677 = pneg %p183
        %p678 = pneg %p180
        %p679 = pneg %p204
        %p680 = pneg %p201
        %p681 = pneg %p225
        %p682 = pneg %p222
        %p683 = pneg %p246
        %p684 = pneg %p243
        %p685 = pneg %p267
        %p686 = pneg %p264
        %p687 = pneg %p288
        %p688 = pneg %p285
        %p689 = pneg %p309
        %p690 = pneg %p306
        %p691 = pneg %p330
        %p692 = pneg %p327
        %p693 = pneg %p351
        %p694 = pneg %p348
        %p695 = pneg %p372
        %p696 = pneg %p369
        %p697 = pneg %p393
        %p698 = pneg %p390
        %p699 = pneg %p414
        %p700 = pneg %p411
        %p701 = pneg %p435
        %p702 = pneg %p432
        %p703 = pneg %p456
        %p704 = pneg %p453
        %p705 = pneg %p477
        %p706 = pneg %p474
        %p707 = pneg %p503
        %p708 = pneg %p500
        %p709 = scmp.lt.s32.totalorder %s36, 1
        %s710 = scalar_select %p709, %s36, 1
        %s711 = smul.addr %s710, 2
        %s712 = smul.addr %s711, 8
        %s713 = scalar_lea.vmem %s21, %s712
        %p714 = pneg %p529
        %p715 = pneg %p526
        %p716 = scmp.lt.s32.totalorder %s36, 1
        %s717 = scalar_select %p716, %s36, 1
        %s718 = smul.addr %s717, 4
        %s719 = smul.addr %s718, 8
        %s720 = scalar_lea.vmem %s22, %s719
        %p721 = pneg %p555
        %p722 = pneg %p552
        %p723 = scmp.lt.s32.totalorder %s36, 1
        %s724 = scalar_select %p723, %s36, 1
        %s725 = smul.addr %s724, 2
        %s726 = smul.addr %s725, 8
        %s727 = scalar_lea.vmem %s23, %s726
        %p728 = scmp.lt.s32.totalorder %s36, 1
        %s729 = scalar_select %p728, %s36, 1
        %s730 = smul.addr %s729, 2
        %s731 = scalar_lea.vmem %s0, %s730
        %p732 = scmp.lt.s32.totalorder %s36, 1
        %s733 = scalar_select %p732, %s36, 1
        %s734 = smul.addr %s733, 2
        %s735 = smul.addr %s734, 8
        %s736 = scalar_lea.vmem %s21, %s735
        %p737 = scmp.lt.s32.totalorder %s36, 1
        %s738 = scalar_select %p737, %s36, 1
        %s739 = smul.addr %s738, 4
        %s740 = smul.addr %s739, 8
        %s741 = scalar_lea.vmem %s22, %s740
        %p742 = scmp.lt.s32.totalorder %s36, 1
        %s743 = scalar_select %p742, %s36, 1
        %s744 = smul.addr %s743, 2
        %s745 = smul.addr %s744, 8
        %s746 = scalar_lea.vmem %s23, %s745
        %v747 = vld [vmem:[%s15] sm:$0xff]
        %v748 = vld [vmem:[%s15 + $0x8] sm:$0xff]
        %v749 = vld [vmem:[%s15 + $0x10] sm:$0xff]
        %v750 = vld [vmem:[%s15 + $0x18] sm:$0xff]
        %v751 = vld [vmem:[%s15 + $0x20] sm:$0xff]
        %v752 = vld [vmem:[%s15 + $0x28] sm:$0xff]
        %v753 = vld [vmem:[%s15 + $0x30] sm:$0xff]
        %v754 = vld [vmem:[%s15 + $0x38] sm:$0xff]
        %v755 = vld [vmem:[%s15 + $0x40] sm:$0xff]
        %v756 = vld [vmem:[%s15 + $0x48] sm:$0xff]
        %v757 = vld [vmem:[%s15 + $0x50] sm:$0xff]
        %v758 = vld [vmem:[%s15 + $0x58] sm:$0xff]
        %v759 = vld [vmem:[%s15 + $0x60] sm:$0xff]
        %v760 = vld [vmem:[%s15 + $0x68] sm:$0xff]
        %v761 = vld [vmem:[%s15 + $0x70] sm:$0xff]
        %v762 = vld [vmem:[%s15 + $0x78] sm:$0xff]
        %v763 = vld [vmem:[%s15 + $0x80] sm:$0xff]
        %v764 = vld [vmem:[%s15 + $0x88] sm:$0xff]
        %v765 = vld [vmem:[%s15 + $0x90] sm:$0xff]
        %v766 = vld [vmem:[%s15 + $0x98] sm:$0xff]
        %v767 = vld [vmem:[%s15 + $0xa0] sm:$0xff]
        %v768 = vld [vmem:[%s15 + $0xa8] sm:$0xff]
        %v769 = vld [vmem:[%s15 + $0xb0] sm:$0xff]
        %v770 = vld [vmem:[%s15 + $0xb8] sm:$0xff]
        %v771 = vld [vmem:[%s15 + $0xc0] sm:$0xff]
        %v772 = vld [vmem:[%s15 + $0xc8] sm:$0xff]
        %v773 = vld [vmem:[%s15 + $0xd0] sm:$0xff]
        %v774 = vld [vmem:[%s15 + $0xd8] sm:$0xff]
        %v775 = vld [vmem:[%s15 + $0xe0] sm:$0xff]
        %v776 = vld [vmem:[%s15 + $0xe8] sm:$0xff]
        %v777 = vld [vmem:[%s15 + $0xf0] sm:$0xff]
        %v778 = vld [vmem:[%s15 + $0xf8] sm:$0xff]
        %v779 = vld [vmem:[%s15 + $0x100] sm:$0xff]
        %v780 = vld [vmem:[%s15 + $0x108] sm:$0xff]
        %v781 = vld [vmem:[%s15 + $0x110] sm:$0xff]
        %v782 = vld [vmem:[%s15 + $0x118] sm:$0xff]
        %v783 = vld [vmem:[%s15 + $0x120] sm:$0xff]
        %v784 = vld [vmem:[%s15 + $0x128] sm:$0xff]
        %v785 = vld [vmem:[%s15 + $0x130] sm:$0xff]
        %v786 = vld [vmem:[%s15 + $0x138] sm:$0xff]
        %v787 = vld [vmem:[%s15 + $0x140] sm:$0xff]
        %v788 = vld [vmem:[%s15 + $0x148] sm:$0xff]
        %v789 = vld [vmem:[%s15 + $0x150] sm:$0xff]
        %v790 = vld [vmem:[%s15 + $0x158] sm:$0xff]
        %v791 = vld [vmem:[%s15 + $0x160] sm:$0xff]
        %v792 = vld [vmem:[%s15 + $0x168] sm:$0xff]
        %v793 = vld [vmem:[%s15 + $0x170] sm:$0xff]
        %v794 = vld [vmem:[%s15 + $0x178] sm:$0xff]
        %v795 = vld [vmem:[%s15 + $0x180] sm:$0xff]
        %v796 = vld [vmem:[%s15 + $0x188] sm:$0xff]
        %v797 = vld [vmem:[%s15 + $0x190] sm:$0xff]
        %v798 = vld [vmem:[%s15 + $0x198] sm:$0xff]
        %v799 = vld [vmem:[%s15 + $0x1a0] sm:$0xff]
        %v800 = vld [vmem:[%s15 + $0x1a8] sm:$0xff]
        %v801 = vld [vmem:[%s15 + $0x1b0] sm:$0xff]
        %v802 = vld [vmem:[%s15 + $0x1b8] sm:$0xff]
        %v803 = vld [vmem:[%s15 + $0x1c0] sm:$0xff]
        %v804 = vld [vmem:[%s15 + $0x1c8] sm:$0xff]
        %v805 = vld [vmem:[%s15 + $0x1d0] sm:$0xff]
        %v806 = vld [vmem:[%s15 + $0x1d8] sm:$0xff]
        %v807 = vld [vmem:[%s15 + $0x1e0] sm:$0xff]
        %v808 = vld [vmem:[%s15 + $0x1e8] sm:$0xff]
        %v809 = vld [vmem:[%s15 + $0x1f0] sm:$0xff]
        %v810 = vld [vmem:[%s15 + $0x1f8] sm:$0xff]
        %v811 = vld [vmem:[%s731] sm:$0x3]
        %v812 = vld [vmem:[%s1] sm:$0xff]
        %v813 = vld [vmem:[%s2] sm:$0xff]
        %815 = vset.pattern.permute.xlu0 0
        %816 = vperm.xlu0 %815, %v812
        %v817 = vpop.permute.xlu0 %816
        %v820 = vlaneseq
        %v821 = vshrl.u32 %v820, 7
        %v822 = vsub.s32 0, %v821
        %v823 = vrot.slane %v811, %v822
        %v824 = vlaneseq
        %v825 = vshrl.u32 %v824, 7
        %v826 = vsub.s32 1, %v825
        %v827 = vrot.slane %v811, %v826
        %v830 = vmul.f32 %v817, %v823
        %v831 = vmul.f32 %v817, %v827
        %833 = vset.pattern.permute.xlu0 0
        %834 = vperm.xlu0 %833, %v813
        %v835 = vpop.permute.xlu0 %834
        %v837 = vadd.f32 %v830, %v835
        %v838 = vadd.f32 %v831, %v835
        %v839 = vmul.f32 %v837, 0.01
        %v840 = vmul.f32 %v838, 0.01
        %v841 = vmax.f32 %v837, %v839
        %v842 = vmax.f32 %v838, %v840
        %843 = vmatprep.subr.mxu0 %v748
        %844 = vmatpush1.msra.mxu0 %v747
        %845 = vmatprep.subr.mxu0 %v750
        %846 = vmatpush1.msra.mxu0 %v749
        %847 = vmatprep.subr.mxu0 %v752
        %848 = vmatpush1.msra.mxu0 %v751
        %849 = vmatprep.subr.mxu0 %v754
        %850 = vmatpush1.msra.mxu0 %v753
        %851 = vmatprep.subr.mxu0 %v756
        %852 = vmatpush1.msra.mxu0 %v755
        %853 = vmatprep.subr.mxu0 %v758
        %854 = vmatpush1.msra.mxu0 %v757
        %855 = vmatprep.subr.mxu0 %v760
        %856 = vmatpush1.msra.mxu0 %v759
        %857 = vmatprep.subr.mxu0 %v762
        %858 = vmatpush1.msra.mxu0 %v761
        %859 = vmatprep.subr.mxu0 %v764
        %860 = vmatpush1.msra.mxu0 %v763
        %861 = vmatprep.subr.mxu0 %v766
        %862 = vmatpush1.msra.mxu0 %v765
        %863 = vmatprep.subr.mxu0 %v768
        %864 = vmatpush1.msra.mxu0 %v767
        %865 = vmatprep.subr.mxu0 %v770
        %866 = vmatpush1.msra.mxu0 %v769
        %867 = vmatprep.subr.mxu0 %v772
        %868 = vmatpush1.msra.mxu0 %v771
        %869 = vmatprep.subr.mxu0 %v774
        %870 = vmatpush1.msra.mxu0 %v773
        %871 = vmatprep.subr.mxu0 %v776
        %872 = vmatpush1.msra.mxu0 %v775
        %873 = vmatprep.subr.mxu0 %v778
        %874 = vmatpush1.msra.mxu0 %v777
        %875 = vmatprep.subr.mxu0 %v780
        %876 = vmatpush1.msra.mxu0 %v779
        %877 = vmatprep.subr.mxu0 %v782
        %878 = vmatpush1.msra.mxu0 %v781
        %879 = vmatprep.subr.mxu0 %v784
        %880 = vmatpush1.msra.mxu0 %v783
        %881 = vmatprep.subr.mxu0 %v786
        %882 = vmatpush1.msra.mxu0 %v785
        %883 = vmatprep.subr.mxu0 %v788
        %884 = vmatpush1.msra.mxu0 %v787
        %885 = vmatprep.subr.mxu0 %v790
        %886 = vmatpush1.msra.mxu0 %v789
        %887 = vmatprep.subr.mxu0 %v792
        %888 = vmatpush1.msra.mxu0 %v791
        %889 = vmatprep.subr.mxu0 %v794
        %890 = vmatpush1.msra.mxu0 %v793
        %891 = vmatprep.subr.mxu0 %v796
        %892 = vmatpush1.msra.mxu0 %v795
        %893 = vmatprep.subr.mxu0 %v798
        %894 = vmatpush1.msra.mxu0 %v797
        %895 = vmatprep.subr.mxu0 %v800
        %896 = vmatpush1.msra.mxu0 %v799
        %897 = vmatprep.subr.mxu0 %v802
        %898 = vmatpush1.msra.mxu0 %v801
        %899 = vmatprep.subr.mxu0 %v804
        %900 = vmatpush1.msra.mxu0 %v803
        %901 = vmatprep.subr.mxu0 %v806
        %902 = vmatpush1.msra.mxu0 %v805
        %903 = vmatprep.subr.mxu0 %v808
        %904 = vmatpush1.msra.mxu0 %v807
        %905 = vmatprep.subr.mxu0 %v810
        %906 = vmatpush1.msra.mxu0 %v809
        %907 = vmatprep.mubr.f32.mxu0 %v842
        %908 = vmatmul.mubr.f32.gmra.mrb[0].mxu0 %v841
        %v909 = vpop.f32.mrb[0].mxu0
        %v910 = vadd.f32 0.0, %v909
        %v911 = vpop.f32.mrb[0].mxu0
        %v912 = vadd.f32 0.0, %v911
        %913 = vdwg.mxu0
        %v914 = vadd.f32 %v841, %v910
        %v915 = vadd.f32 %v842, %v912
        %v916 = vld [vmem:[%s3] sm:$0xff]
        %v917 = vld [vmem:[%s4] sm:$0xff]
        %919 = vset.pattern.permute.xlu0 0
        %920 = vperm.xlu0 %919, %v917
        %v921 = vpop.permute.xlu0 %920
        %vm923 = vcmask 64512
        %v925 = vsel %vm923, %v916, 0
        %927 = vmatprep.subr.mxu0 %v915
        %928 = vmatpush1.msra.mxu0 %v914
        %929 = vmatprep.subr.mxu0 0.0
        %930 = vmatpush1.msra.mxu0 0.0
        %931 = vmatprep.subr.mxu0 0.0
        %932 = vmatpush1.msra.mxu0 0.0
        %933 = vmatprep.subr.mxu0 0.0
        %934 = vmatpush1.msra.mxu0 0.0
        %935 = vmatprep.subr.mxu0 0.0
        %936 = vmatpush1.msra.mxu0 0.0
        %937 = vmatprep.subr.mxu0 0.0
        %938 = vmatpush1.msra.mxu0 0.0
        %939 = vmatprep.subr.mxu0 0.0
        %940 = vmatpush1.msra.mxu0 0.0
        %941 = vmatprep.subr.mxu0 0.0
        %942 = vmatpush1.msra.mxu0 0.0
        %943 = vmatprep.subr.mxu0 0.0
        %944 = vmatpush1.msra.mxu0 0.0
        %945 = vmatprep.subr.mxu0 0.0
        %946 = vmatpush1.msra.mxu0 0.0
        %947 = vmatprep.subr.mxu0 0.0
        %948 = vmatpush1.msra.mxu0 0.0
        %949 = vmatprep.subr.mxu0 0.0
        %950 = vmatpush1.msra.mxu0 0.0
        %951 = vmatprep.subr.mxu0 0.0
        %952 = vmatpush1.msra.mxu0 0.0
        %953 = vmatprep.subr.mxu0 0.0
        %954 = vmatpush1.msra.mxu0 0.0
        %955 = vmatprep.subr.mxu0 0.0
        %956 = vmatpush1.msra.mxu0 0.0
        %957 = vmatprep.subr.mxu0 0.0
        %958 = vmatpush1.msra.mxu0 0.0
        %959 = vmatprep.subr.mxu0 0.0
        %960 = vmatpush1.msra.mxu0 0.0
        %961 = vmatprep.subr.mxu0 0.0
        %962 = vmatpush1.msra.mxu0 0.0
        %963 = vmatprep.subr.mxu0 0.0
        %964 = vmatpush1.msra.mxu0 0.0
        %965 = vmatprep.subr.mxu0 0.0
        %966 = vmatpush1.msra.mxu0 0.0
        %967 = vmatprep.subr.mxu0 0.0
        %968 = vmatpush1.msra.mxu0 0.0
        %969 = vmatprep.subr.mxu0 0.0
        %970 = vmatpush1.msra.mxu0 0.0
        %971 = vmatprep.subr.mxu0 0.0
        %972 = vmatpush1.msra.mxu0 0.0
        %973 = vmatprep.subr.mxu0 0.0
        %974 = vmatpush1.msra.mxu0 0.0
        %975 = vmatprep.subr.mxu0 0.0
        %976 = vmatpush1.msra.mxu0 0.0
        %977 = vmatprep.subr.mxu0 0.0
        %978 = vmatpush1.msra.mxu0 0.0
        %979 = vmatprep.subr.mxu0 0.0
        %980 = vmatpush1.msra.mxu0 0.0
        %981 = vmatprep.subr.mxu0 0.0
        %982 = vmatpush1.msra.mxu0 0.0
        %983 = vmatprep.subr.mxu0 0.0
        %984 = vmatpush1.msra.mxu0 0.0
        %985 = vmatprep.subr.mxu0 0.0
        %986 = vmatpush1.msra.mxu0 0.0
        %987 = vmatprep.subr.mxu0 0.0
        %988 = vmatpush1.msra.mxu0 0.0
        %989 = vmatprep.subr.mxu0 0.0
        %990 = vmatpush1.msra.mxu0 0.0
        %991 = vmatprep.mubr.f32.mxu0 0.0
        %992 = vmatmul.mubr.f32.gmra.mrb[0].mxu0 %v925
        %v993 = vpop.f32.mrb[0].mxu0
        %v994 = vadd.f32 %v921, %v993
        %v995 = vpop.f32.mrb[0].mxu0
        %v996 = vadd.f32 %v921, %v995
        %997 = vdwg.mxu0
        %v998 = vmul.f32 %v994, 0.01
        %v999 = vmul.f32 %v996, 0.01
        %v1000 = vmax.f32 %v994, %v998
        %v1001 = vmax.f32 %v996, %v999
        %1002 = vmatprep.subr.mxu0 %v748
        %1003 = vmatpush1.msra.mxu0 %v747
        %1004 = vmatprep.subr.mxu0 %v750
        %1005 = vmatpush1.msra.mxu0 %v749
        %1006 = vmatprep.subr.mxu0 %v752
        %1007 = vmatpush1.msra.mxu0 %v751
        %1008 = vmatprep.subr.mxu0 %v754
        %1009 = vmatpush1.msra.mxu0 %v753
        %1010 = vmatprep.subr.mxu0 %v756
        %1011 = vmatpush1.msra.mxu0 %v755
        %1012 = vmatprep.subr.mxu0 %v758
        %1013 = vmatpush1.msra.mxu0 %v757
        %1014 = vmatprep.subr.mxu0 %v760
        %1015 = vmatpush1.msra.mxu0 %v759
        %1016 = vmatprep.subr.mxu0 %v762
        %1017 = vmatpush1.msra.mxu0 %v761
        %1018 = vmatprep.subr.mxu0 %v764
        %1019 = vmatpush1.msra.mxu0 %v763
        %1020 = vmatprep.subr.mxu0 %v766
        %1021 = vmatpush1.msra.mxu0 %v765
        %1022 = vmatprep.subr.mxu0 %v768
        %1023 = vmatpush1.msra.mxu0 %v767
        %1024 = vmatprep.subr.mxu0 %v770
        %1025 = vmatpush1.msra.mxu0 %v769
        %1026 = vmatprep.subr.mxu0 %v772
        %1027 = vmatpush1.msra.mxu0 %v771
        %1028 = vmatprep.subr.mxu0 %v774
        %1029 = vmatpush1.msra.mxu0 %v773
        %1030 = vmatprep.subr.mxu0 %v776
        %1031 = vmatpush1.msra.mxu0 %v775
        %1032 = vmatprep.subr.mxu0 %v778
        %1033 = vmatpush1.msra.mxu0 %v777
        %1034 = vmatprep.subr.mxu0 %v780
        %1035 = vmatpush1.msra.mxu0 %v779
        %1036 = vmatprep.subr.mxu0 %v782
        %1037 = vmatpush1.msra.mxu0 %v781
        %1038 = vmatprep.subr.mxu0 %v784
        %1039 = vmatpush1.msra.mxu0 %v783
        %1040 = vmatprep.subr.mxu0 %v786
        %1041 = vmatpush1.msra.mxu0 %v785
        %1042 = vmatprep.subr.mxu0 %v788
        %1043 = vmatpush1.msra.mxu0 %v787
        %1044 = vmatprep.subr.mxu0 %v790
        %1045 = vmatpush1.msra.mxu0 %v789
        %1046 = vmatprep.subr.mxu0 %v792
        %1047 = vmatpush1.msra.mxu0 %v791
        %1048 = vmatprep.subr.mxu0 %v794
        %1049 = vmatpush1.msra.mxu0 %v793
        %1050 = vmatprep.subr.mxu0 %v796
        %1051 = vmatpush1.msra.mxu0 %v795
        %1052 = vmatprep.subr.mxu0 %v798
        %1053 = vmatpush1.msra.mxu0 %v797
        %1054 = vmatprep.subr.mxu0 %v800
        %1055 = vmatpush1.msra.mxu0 %v799
        %1056 = vmatprep.subr.mxu0 %v802
        %1057 = vmatpush1.msra.mxu0 %v801
        %1058 = vmatprep.subr.mxu0 %v804
        %1059 = vmatpush1.msra.mxu0 %v803
        %1060 = vmatprep.subr.mxu0 %v806
        %1061 = vmatpush1.msra.mxu0 %v805
        %1062 = vmatprep.subr.mxu0 %v808
        %1063 = vmatpush1.msra.mxu0 %v807
        %1064 = vmatprep.subr.mxu0 %v810
        %1065 = vmatpush1.msra.mxu0 %v809
        %1066 = vmatprep.mubr.f32.mxu0 %v1001
        %1067 = vmatmul.mubr.f32.gmra.mrb[0].mxu0 %v1000
        %v1068 = vpop.f32.mrb[0].mxu0
        %v1069 = vadd.f32 0.0, %v1068
        %v1070 = vpop.f32.mrb[0].mxu0
        %v1071 = vadd.f32 0.0, %v1070
        %1072 = vdwg.mxu0
        %v1073 = vadd.f32 %v1000, %v1069
        %v1074 = vadd.f32 %v1001, %v1071
        %v1075 = vld [vmem:[%s5] sm:$0xff]
        %v1076 = vld [vmem:[%s6] sm:$0xff]
        %1078 = vset.pattern.permute.xlu0 0
        %1079 = vperm.xlu0 %1078, %v1076
        %v1080 = vpop.permute.xlu0 %1079
        %v1083 = vsel %vm923, %v1075, 0
        %1085 = vmatprep.subr.mxu0 %v1074
        %1086 = vmatpush1.msra.mxu0 %v1073
        %1087 = vmatprep.subr.mxu0 0.0
        %1088 = vmatpush1.msra.mxu0 0.0
        %1089 = vmatprep.subr.mxu0 0.0
        %1090 = vmatpush1.msra.mxu0 0.0
        %1091 = vmatprep.subr.mxu0 0.0
        %1092 = vmatpush1.msra.mxu0 0.0
        %1093 = vmatprep.subr.mxu0 0.0
        %1094 = vmatpush1.msra.mxu0 0.0
        %1095 = vmatprep.subr.mxu0 0.0
        %1096 = vmatpush1.msra.mxu0 0.0
        %1097 = vmatprep.subr.mxu0 0.0
        %1098 = vmatpush1.msra.mxu0 0.0
        %1099 = vmatprep.subr.mxu0 0.0
        %1100 = vmatpush1.msra.mxu0 0.0
        %1101 = vmatprep.subr.mxu0 0.0
        %1102 = vmatpush1.msra.mxu0 0.0
        %1103 = vmatprep.subr.mxu0 0.0
        %1104 = vmatpush1.msra.mxu0 0.0
        %1105 = vmatprep.subr.mxu0 0.0
        %1106 = vmatpush1.msra.mxu0 0.0
        %1107 = vmatprep.subr.mxu0 0.0
        %1108 = vmatpush1.msra.mxu0 0.0
        %1109 = vmatprep.subr.mxu0 0.0
        %1110 = vmatpush1.msra.mxu0 0.0
        %1111 = vmatprep.subr.mxu0 0.0
        %1112 = vmatpush1.msra.mxu0 0.0
        %1113 = vmatprep.subr.mxu0 0.0
        %1114 = vmatpush1.msra.mxu0 0.0
        %1115 = vmatprep.subr.mxu0 0.0
        %1116 = vmatpush1.msra.mxu0 0.0
        %1117 = vmatprep.subr.mxu0 0.0
        %1118 = vmatpush1.msra.mxu0 0.0
        %1119 = vmatprep.subr.mxu0 0.0
        %1120 = vmatpush1.msra.mxu0 0.0
        %1121 = vmatprep.subr.mxu0 0.0
        %1122 = vmatpush1.msra.mxu0 0.0
        %1123 = vmatprep.subr.mxu0 0.0
        %1124 = vmatpush1.msra.mxu0 0.0
        %1125 = vmatprep.subr.mxu0 0.0
        %1126 = vmatpush1.msra.mxu0 0.0
        %1127 = vmatprep.subr.mxu0 0.0
        %1128 = vmatpush1.msra.mxu0 0.0
        %1129 = vmatprep.subr.mxu0 0.0
        %1130 = vmatpush1.msra.mxu0 0.0
        %1131 = vmatprep.subr.mxu0 0.0
        %1132 = vmatpush1.msra.mxu0 0.0
        %1133 = vmatprep.subr.mxu0 0.0
        %1134 = vmatpush1.msra.mxu0 0.0
        %1135 = vmatprep.subr.mxu0 0.0
        %1136 = vmatpush1.msra.mxu0 0.0
        %1137 = vmatprep.subr.mxu0 0.0
        %1138 = vmatpush1.msra.mxu0 0.0
        %1139 = vmatprep.subr.mxu0 0.0
        %1140 = vmatpush1.msra.mxu0 0.0
        %1141 = vmatprep.subr.mxu0 0.0
        %1142 = vmatpush1.msra.mxu0 0.0
        %1143 = vmatprep.subr.mxu0 0.0
        %1144 = vmatpush1.msra.mxu0 0.0
        %1145 = vmatprep.subr.mxu0 0.0
        %1146 = vmatpush1.msra.mxu0 0.0
        %1147 = vmatprep.subr.mxu0 0.0
        %1148 = vmatpush1.msra.mxu0 0.0
        %1149 = vmatprep.mubr.f32.mxu0 0.0
        %1150 = vmatmul.mubr.f32.gmra.mrb[0].mxu0 %v1083
        %v1151 = vpop.f32.mrb[0].mxu0
        %v1152 = vadd.f32 %v1080, %v1151
        %v1153 = vpop.f32.mrb[0].mxu0
        %v1154 = vadd.f32 %v1080, %v1153
        %1155 = vdwg.mxu0
        %v1156 = vmul.f32 %v1152, 0.01
        %v1157 = vmul.f32 %v1154, 0.01
        %v1158 = vmax.f32 %v1152, %v1156
        %v1159 = vmax.f32 %v1154, %v1157
        %1160 = vmatprep.subr.mxu0 %v748
        %1161 = vmatpush1.msra.mxu0 %v747
        %1162 = vmatprep.subr.mxu0 %v750
        %1163 = vmatpush1.msra.mxu0 %v749
        %1164 = vmatprep.subr.mxu0 %v752
        %1165 = vmatpush1.msra.mxu0 %v751
        %1166 = vmatprep.subr.mxu0 %v754
        %1167 = vmatpush1.msra.mxu0 %v753
        %1168 = vmatprep.subr.mxu0 %v756
        %1169 = vmatpush1.msra.mxu0 %v755
        %1170 = vmatprep.subr.mxu0 %v758
        %1171 = vmatpush1.msra.mxu0 %v757
        %1172 = vmatprep.subr.mxu0 %v760
        %1173 = vmatpush1.msra.mxu0 %v759
        %1174 = vmatprep.subr.mxu0 %v762
        %1175 = vmatpush1.msra.mxu0 %v761
        %1176 = vmatprep.subr.mxu0 %v764
        %1177 = vmatpush1.msra.mxu0 %v763
        %1178 = vmatprep.subr.mxu0 %v766
        %1179 = vmatpush1.msra.mxu0 %v765
        %1180 = vmatprep.subr.mxu0 %v768
        %1181 = vmatpush1.msra.mxu0 %v767
        %1182 = vmatprep.subr.mxu0 %v770
        %1183 = vmatpush1.msra.mxu0 %v769
        %1184 = vmatprep.subr.mxu0 %v772
        %1185 = vmatpush1.msra.mxu0 %v771
        %1186 = vmatprep.subr.mxu0 %v774
        %1187 = vmatpush1.msra.mxu0 %v773
        %1188 = vmatprep.subr.mxu0 %v776
        %1189 = vmatpush1.msra.mxu0 %v775
        %1190 = vmatprep.subr.mxu0 %v778
        %1191 = vmatpush1.msra.mxu0 %v777
        %1192 = vmatprep.subr.mxu0 %v780
        %1193 = vmatpush1.msra.mxu0 %v779
        %1194 = vmatprep.subr.mxu0 %v782
        %1195 = vmatpush1.msra.mxu0 %v781
        %1196 = vmatprep.subr.mxu0 %v784
        %1197 = vmatpush1.msra.mxu0 %v783
        %1198 = vmatprep.subr.mxu0 %v786
        %1199 = vmatpush1.msra.mxu0 %v785
        %1200 = vmatprep.subr.mxu0 %v788
        %1201 = vmatpush1.msra.mxu0 %v787
        %1202 = vmatprep.subr.mxu0 %v790
        %1203 = vmatpush1.msra.mxu0 %v789
        %1204 = vmatprep.subr.mxu0 %v792
        %1205 = vmatpush1.msra.mxu0 %v791
        %1206 = vmatprep.subr.mxu0 %v794
        %1207 = vmatpush1.msra.mxu0 %v793
        %1208 = vmatprep.subr.mxu0 %v796
        %1209 = vmatpush1.msra.mxu0 %v795
        %1210 = vmatprep.subr.mxu0 %v798
        %1211 = vmatpush1.msra.mxu0 %v797
        %1212 = vmatprep.subr.mxu0 %v800
        %1213 = vmatpush1.msra.mxu0 %v799
        %1214 = vmatprep.subr.mxu0 %v802
        %1215 = vmatpush1.msra.mxu0 %v801
        %1216 = vmatprep.subr.mxu0 %v804
        %1217 = vmatpush1.msra.mxu0 %v803
        %1218 = vmatprep.subr.mxu0 %v806
        %1219 = vmatpush1.msra.mxu0 %v805
        %1220 = vmatprep.subr.mxu0 %v808
        %1221 = vmatpush1.msra.mxu0 %v807
        %1222 = vmatprep.subr.mxu0 %v810
        %1223 = vmatpush1.msra.mxu0 %v809
        %1224 = vmatprep.mubr.f32.mxu0 %v1159
        %1225 = vmatmul.mubr.f32.gmra.mrb[0].mxu0 %v1158
        %v1226 = vpop.f32.mrb[0].mxu0
        %v1227 = vadd.f32 0.0, %v1226
        %v1228 = vpop.f32.mrb[0].mxu0
        %v1229 = vadd.f32 0.0, %v1228
        %1230 = vdwg.mxu0
        %v1231 = vadd.f32 %v1158, %v1227
        %v1232 = vadd.f32 %v1159, %v1229
        %v1233 = vld [vmem:[%s7] sm:$0xff]
        %v1234 = vld [vmem:[%s8] sm:$0xff]
        %1236 = vset.pattern.permute.xlu0 0
        %1237 = vperm.xlu0 %1236, %v1234
        %v1238 = vpop.permute.xlu0 %1237
        %v1241 = vsel %vm923, %v1233, 0
        %1243 = vmatprep.subr.mxu0 %v915
        %1244 = vmatpush1.msra.mxu0 %v914
        %1245 = vmatprep.subr.mxu0 0.0
        %1246 = vmatpush1.msra.mxu0 0.0
        %1247 = vmatprep.subr.mxu0 0.0
        %1248 = vmatpush1.msra.mxu0 0.0
        %1249 = vmatprep.subr.mxu0 0.0
        %1250 = vmatpush1.msra.mxu0 0.0
        %1251 = vmatprep.subr.mxu0 0.0
        %1252 = vmatpush1.msra.mxu0 0.0
        %1253 = vmatprep.subr.mxu0 0.0
        %1254 = vmatpush1.msra.mxu0 0.0
        %1255 = vmatprep.subr.mxu0 0.0
        %1256 = vmatpush1.msra.mxu0 0.0
        %1257 = vmatprep.subr.mxu0 0.0
        %1258 = vmatpush1.msra.mxu0 0.0
        %1259 = vmatprep.subr.mxu0 0.0
        %1260 = vmatpush1.msra.mxu0 0.0
        %1261 = vmatprep.subr.mxu0 0.0
        %1262 = vmatpush1.msra.mxu0 0.0
        %1263 = vmatprep.subr.mxu0 0.0
        %1264 = vmatpush1.msra.mxu0 0.0
        %1265 = vmatprep.subr.mxu0 0.0
        %1266 = vmatpush1.msra.mxu0 0.0
        %1267 = vmatprep.subr.mxu0 0.0
        %1268 = vmatpush1.msra.mxu0 0.0
        %1269 = vmatprep.subr.mxu0 0.0
        %1270 = vmatpush1.msra.mxu0 0.0
        %1271 = vmatprep.subr.mxu0 0.0
        %1272 = vmatpush1.msra.mxu0 0.0
        %1273 = vmatprep.subr.mxu0 0.0
        %1274 = vmatpush1.msra.mxu0 0.0
        %1275 = vmatprep.subr.mxu0 0.0
        %1276 = vmatpush1.msra.mxu0 0.0
        %1277 = vmatprep.subr.mxu0 0.0
        %1278 = vmatpush1.msra.mxu0 0.0
        %1279 = vmatprep.subr.mxu0 0.0
        %1280 = vmatpush1.msra.mxu0 0.0
        %1281 = vmatprep.subr.mxu0 0.0
        %1282 = vmatpush1.msra.mxu0 0.0
        %1283 = vmatprep.subr.mxu0 0.0
        %1284 = vmatpush1.msra.mxu0 0.0
        %1285 = vmatprep.subr.mxu0 0.0
        %1286 = vmatpush1.msra.mxu0 0.0
        %1287 = vmatprep.subr.mxu0 0.0
        %1288 = vmatpush1.msra.mxu0 0.0
        %1289 = vmatprep.subr.mxu0 0.0
        %1290 = vmatpush1.msra.mxu0 0.0
        %1291 = vmatprep.subr.mxu0 0.0
        %1292 = vmatpush1.msra.mxu0 0.0
        %1293 = vmatprep.subr.mxu0 0.0
        %1294 = vmatpush1.msra.mxu0 0.0
        %1295 = vmatprep.subr.mxu0 0.0
        %1296 = vmatpush1.msra.mxu0 0.0
        %1297 = vmatprep.subr.mxu0 0.0
        %1298 = vmatpush1.msra.mxu0 0.0
        %1299 = vmatprep.subr.mxu0 0.0
        %1300 = vmatpush1.msra.mxu0 0.0
        %1301 = vmatprep.subr.mxu0 0.0
        %1302 = vmatpush1.msra.mxu0 0.0
        %1303 = vmatprep.subr.mxu0 0.0
        %1304 = vmatpush1.msra.mxu0 0.0
        %1305 = vmatprep.subr.mxu0 0.0
        %1306 = vmatpush1.msra.mxu0 0.0
        %1307 = vmatprep.mubr.f32.mxu0 0.0
        %1308 = vmatmul.mubr.f32.gmra.mrb[0].mxu0 %v1241
        %v1309 = vpop.f32.mrb[0].mxu0
        %v1310 = vadd.f32 %v1238, %v1309
        %v1311 = vpop.f32.mrb[0].mxu0
        %v1312 = vadd.f32 %v1238, %v1311
        %1313 = vdwg.mxu0
        %v1314 = vmul.f32 %v1310, 0.01
        %v1315 = vmul.f32 %v1312, 0.01
        %v1316 = vmax.f32 %v1310, %v1314
        %v1317 = vmax.f32 %v1312, %v1315
        %1318 = vmatprep.subr.mxu0 %v748
        %1319 = vmatpush1.msra.mxu0 %v747
        %1320 = vmatprep.subr.mxu0 %v750
        %1321 = vmatpush1.msra.mxu0 %v749
        %1322 = vmatprep.subr.mxu0 %v752
        %1323 = vmatpush1.msra.mxu0 %v751
        %1324 = vmatprep.subr.mxu0 %v754
        %1325 = vmatpush1.msra.mxu0 %v753
        %1326 = vmatprep.subr.mxu0 %v756
        %1327 = vmatpush1.msra.mxu0 %v755
        %1328 = vmatprep.subr.mxu0 %v758
        %1329 = vmatpush1.msra.mxu0 %v757
        %1330 = vmatprep.subr.mxu0 %v760
        %1331 = vmatpush1.msra.mxu0 %v759
        %1332 = vmatprep.subr.mxu0 %v762
        %1333 = vmatpush1.msra.mxu0 %v761
        %1334 = vmatprep.subr.mxu0 %v764
        %1335 = vmatpush1.msra.mxu0 %v763
        %1336 = vmatprep.subr.mxu0 %v766
        %1337 = vmatpush1.msra.mxu0 %v765
        %1338 = vmatprep.subr.mxu0 %v768
        %1339 = vmatpush1.msra.mxu0 %v767
        %1340 = vmatprep.subr.mxu0 %v770
        %1341 = vmatpush1.msra.mxu0 %v769
        %1342 = vmatprep.subr.mxu0 %v772
        %1343 = vmatpush1.msra.mxu0 %v771
        %1344 = vmatprep.subr.mxu0 %v774
        %1345 = vmatpush1.msra.mxu0 %v773
        %1346 = vmatprep.subr.mxu0 %v776
        %1347 = vmatpush1.msra.mxu0 %v775
        %1348 = vmatprep.subr.mxu0 %v778
        %1349 = vmatpush1.msra.mxu0 %v777
        %1350 = vmatprep.subr.mxu0 %v780
        %1351 = vmatpush1.msra.mxu0 %v779
        %1352 = vmatprep.subr.mxu0 %v782
        %1353 = vmatpush1.msra.mxu0 %v781
        %1354 = vmatprep.subr.mxu0 %v784
        %1355 = vmatpush1.msra.mxu0 %v783
        %1356 = vmatprep.subr.mxu0 %v786
        %1357 = vmatpush1.msra.mxu0 %v785
        %1358 = vmatprep.subr.mxu0 %v788
        %1359 = vmatpush1.msra.mxu0 %v787
        %1360 = vmatprep.subr.mxu0 %v790
        %1361 = vmatpush1.msra.mxu0 %v789
        %1362 = vmatprep.subr.mxu0 %v792
        %1363 = vmatpush1.msra.mxu0 %v791
        %1364 = vmatprep.subr.mxu0 %v794
        %1365 = vmatpush1.msra.mxu0 %v793
        %1366 = vmatprep.subr.mxu0 %v796
        %1367 = vmatpush1.msra.mxu0 %v795
        %1368 = vmatprep.subr.mxu0 %v798
        %1369 = vmatpush1.msra.mxu0 %v797
        %1370 = vmatprep.subr.mxu0 %v800
        %1371 = vmatpush1.msra.mxu0 %v799
        %1372 = vmatprep.subr.mxu0 %v802
        %1373 = vmatpush1.msra.mxu0 %v801
        %1374 = vmatprep.subr.mxu0 %v804
        %1375 = vmatpush1.msra.mxu0 %v803
        %1376 = vmatprep.subr.mxu0 %v806
        %1377 = vmatpush1.msra.mxu0 %v805
        %1378 = vmatprep.subr.mxu0 %v808
        %1379 = vmatpush1.msra.mxu0 %v807
        %1380 = vmatprep.subr.mxu0 %v810
        %1381 = vmatpush1.msra.mxu0 %v809
        %1382 = vmatprep.mubr.f32.mxu0 %v1317
        %1383 = vmatmul.mubr.f32.gmra.mrb[0].mxu0 %v1316
        %v1384 = vpop.f32.mrb[0].mxu0
        %v1385 = vadd.f32 0.0, %v1384
        %v1386 = vpop.f32.mrb[0].mxu0
        %v1387 = vadd.f32 0.0, %v1386
        %1388 = vdwg.mxu0
        %v1389 = vadd.f32 %v1316, %v1385
        %v1390 = vadd.f32 %v1317, %v1387
        %v1391 = vld [vmem:[%s9] sm:$0xff]
        %v1392 = vld [vmem:[%s10] sm:$0xff]
        %1394 = vrot.lane.b32.xlu0 %v1391, 120
        %v1395 = vpop.permute.xlu0 %1394
        %v1396 = vsel %vm923, %v1395, 0
        %1398 = vmatprep.subr.mxu0 %v1390
        %1399 = vmatpush1.msra.mxu0 %v1389
        %1400 = vmatprep.subr.mxu0 0.0
        %1401 = vmatpush1.msra.mxu0 0.0
        %1402 = vmatprep.subr.mxu0 0.0
        %1403 = vmatpush1.msra.mxu0 0.0
        %1404 = vmatprep.subr.mxu0 0.0
        %1405 = vmatpush1.msra.mxu0 0.0
        %1406 = vmatprep.subr.mxu0 0.0
        %1407 = vmatpush1.msra.mxu0 0.0
        %1408 = vmatprep.subr.mxu0 0.0
        %1409 = vmatpush1.msra.mxu0 0.0
        %1410 = vmatprep.subr.mxu0 0.0
        %1411 = vmatpush1.msra.mxu0 0.0
        %1412 = vmatprep.subr.mxu0 0.0
        %1413 = vmatpush1.msra.mxu0 0.0
        %1414 = vmatprep.subr.mxu0 0.0
        %1415 = vmatpush1.msra.mxu0 0.0
        %1416 = vmatprep.subr.mxu0 0.0
        %1417 = vmatpush1.msra.mxu0 0.0
        %1418 = vmatprep.subr.mxu0 0.0
        %1419 = vmatpush1.msra.mxu0 0.0
        %1420 = vmatprep.subr.mxu0 0.0
        %1421 = vmatpush1.msra.mxu0 0.0
        %1422 = vmatprep.subr.mxu0 0.0
        %1423 = vmatpush1.msra.mxu0 0.0
        %1424 = vmatprep.subr.mxu0 0.0
        %1425 = vmatpush1.msra.mxu0 0.0
        %1426 = vmatprep.subr.mxu0 0.0
        %1427 = vmatpush1.msra.mxu0 0.0
        %1428 = vmatprep.subr.mxu0 0.0
        %1429 = vmatpush1.msra.mxu0 0.0
        %1430 = vmatprep.subr.mxu0 0.0
        %1431 = vmatpush1.msra.mxu0 0.0
        %1432 = vmatprep.subr.mxu0 0.0
        %1433 = vmatpush1.msra.mxu0 0.0
        %1434 = vmatprep.subr.mxu0 0.0
        %1435 = vmatpush1.msra.mxu0 0.0
        %1436 = vmatprep.subr.mxu0 0.0
        %1437 = vmatpush1.msra.mxu0 0.0
        %1438 = vmatprep.subr.mxu0 0.0
        %1439 = vmatpush1.msra.mxu0 0.0
        %1440 = vmatprep.subr.mxu0 0.0
        %1441 = vmatpush1.msra.mxu0 0.0
        %1442 = vmatprep.subr.mxu0 0.0
        %1443 = vmatpush1.msra.mxu0 0.0
        %1444 = vmatprep.subr.mxu0 0.0
        %1445 = vmatpush1.msra.mxu0 0.0
        %1446 = vmatprep.subr.mxu0 0.0
        %1447 = vmatpush1.msra.mxu0 0.0
        %1448 = vmatprep.subr.mxu0 0.0
        %1449 = vmatpush1.msra.mxu0 0.0
        %1450 = vmatprep.subr.mxu0 0.0
        %1451 = vmatpush1.msra.mxu0 0.0
        %1452 = vmatprep.subr.mxu0 0.0
        %1453 = vmatpush1.msra.mxu0 0.0
        %1454 = vmatprep.subr.mxu0 0.0
        %1455 = vmatpush1.msra.mxu0 0.0
        %1456 = vmatprep.subr.mxu0 0.0
        %1457 = vmatpush1.msra.mxu0 0.0
        %1458 = vmatprep.subr.mxu0 0.0
        %1459 = vmatpush1.msra.mxu0 0.0
        %1460 = vmatprep.subr.mxu0 0.0
        %1461 = vmatpush1.msra.mxu0 0.0
        %1462 = vmatprep.mubr.f32.mxu0 0.0
        %1463 = vmatmul.mubr.f32.gmra.mrb[0].mxu0 %v1396
        %v1464 = vpop.f32.mrb[0].mxu0
        %v1465 = vadd.f32 0.0, %v1464
        %v1466 = vpop.f32.mrb[0].mxu0
        %v1467 = vadd.f32 0.0, %v1466
        %1468 = vdwg.mxu0
        %v1469 = vsel %vm923, %v1391, 0
        %1471 = vmatprep.subr.mxu0 %v1232
        %1472 = vmatpush1.msra.mxu0 %v1231
        %1473 = vmatprep.subr.mxu0 0.0
        %1474 = vmatpush1.msra.mxu0 0.0
        %1475 = vmatprep.subr.mxu0 0.0
        %1476 = vmatpush1.msra.mxu0 0.0
        %1477 = vmatprep.subr.mxu0 0.0
        %1478 = vmatpush1.msra.mxu0 0.0
        %1479 = vmatprep.subr.mxu0 0.0
        %1480 = vmatpush1.msra.mxu0 0.0
        %1481 = vmatprep.subr.mxu0 0.0
        %1482 = vmatpush1.msra.mxu0 0.0
        %1483 = vmatprep.subr.mxu0 0.0
        %1484 = vmatpush1.msra.mxu0 0.0
        %1485 = vmatprep.subr.mxu0 0.0
        %1486 = vmatpush1.msra.mxu0 0.0
        %1487 = vmatprep.subr.mxu0 0.0
        %1488 = vmatpush1.msra.mxu0 0.0
        %1489 = vmatprep.subr.mxu0 0.0
        %1490 = vmatpush1.msra.mxu0 0.0
        %1491 = vmatprep.subr.mxu0 0.0
        %1492 = vmatpush1.msra.mxu0 0.0
        %1493 = vmatprep.subr.mxu0 0.0
        %1494 = vmatpush1.msra.mxu0 0.0
        %1495 = vmatprep.subr.mxu0 0.0
        %1496 = vmatpush1.msra.mxu0 0.0
        %1497 = vmatprep.subr.mxu0 0.0
        %1498 = vmatpush1.msra.mxu0 0.0
        %1499 = vmatprep.subr.mxu0 0.0
        %1500 = vmatpush1.msra.mxu0 0.0
        %1501 = vmatprep.subr.mxu0 0.0
        %1502 = vmatpush1.msra.mxu0 0.0
        %1503 = vmatprep.subr.mxu0 0.0
        %1504 = vmatpush1.msra.mxu0 0.0
        %1505 = vmatprep.subr.mxu0 0.0
        %1506 = vmatpush1.msra.mxu0 0.0
        %1507 = vmatprep.subr.mxu0 0.0
        %1508 = vmatpush1.msra.mxu0 0.0
        %1509 = vmatprep.subr.mxu0 0.0
        %1510 = vmatpush1.msra.mxu0 0.0
        %1511 = vmatprep.subr.mxu0 0.0
        %1512 = vmatpush1.msra.mxu0 0.0
        %1513 = vmatprep.subr.mxu0 0.0
        %1514 = vmatpush1.msra.mxu0 0.0
        %1515 = vmatprep.subr.mxu0 0.0
        %1516 = vmatpush1.msra.mxu0 0.0
        %1517 = vmatprep.subr.mxu0 0.0
        %1518 = vmatpush1.msra.mxu0 0.0
        %1519 = vmatprep.subr.mxu0 0.0
        %1520 = vmatpush1.msra.mxu0 0.0
        %1521 = vmatprep.subr.mxu0 0.0
        %1522 = vmatpush1.msra.mxu0 0.0
        %1523 = vmatprep.subr.mxu0 0.0
        %1524 = vmatpush1.msra.mxu0 0.0
        %1525 = vmatprep.subr.mxu0 0.0
        %1526 = vmatpush1.msra.mxu0 0.0
        %1527 = vmatprep.subr.mxu0 0.0
        %1528 = vmatpush1.msra.mxu0 0.0
        %1529 = vmatprep.subr.mxu0 0.0
        %1530 = vmatpush1.msra.mxu0 0.0
        %1531 = vmatprep.subr.mxu0 0.0
        %1532 = vmatpush1.msra.mxu0 0.0
        %1533 = vmatprep.subr.mxu0 0.0
        %1534 = vmatpush1.msra.mxu0 0.0
        %1535 = vmatprep.mubr.f32.mxu0 0.0
        %1536 = vmatmul.mubr.f32.gmra.mrb[0].mxu0 %v1469
        %v1537 = vpop.f32.mrb[0].mxu0
        %v1538 = vadd.f32 %v1465, %v1537
        %v1539 = vpop.f32.mrb[0].mxu0
        %v1540 = vadd.f32 %v1467, %v1539
        %1541 = vdwg.mxu0
        %1543 = vset.pattern.permute.xlu0 0
        %1544 = vperm.xlu0 %1543, %v1392
        %v1545 = vpop.permute.xlu0 %1544
        %v1547 = vadd.f32 %v1538, %v1545
        %v1548 = vadd.f32 %v1540, %v1545
        %v1549 = vmul.f32 %v1547, 0.01
        %v1550 = vmul.f32 %v1548, 0.01
        %v1551 = vmax.f32 %v1547, %v1549
        %v1552 = vmax.f32 %v1548, %v1550
        %1553 = vmatprep.subr.mxu0 %v748
        %1554 = vmatpush1.msra.mxu0 %v747
        %1555 = vmatprep.subr.mxu0 %v750
        %1556 = vmatpush1.msra.mxu0 %v749
        %1557 = vmatprep.subr.mxu0 %v752
        %1558 = vmatpush1.msra.mxu0 %v751
        %1559 = vmatprep.subr.mxu0 %v754
        %1560 = vmatpush1.msra.mxu0 %v753
        %1561 = vmatprep.subr.mxu0 %v756
        %1562 = vmatpush1.msra.mxu0 %v755
        %1563 = vmatprep.subr.mxu0 %v758
        %1564 = vmatpush1.msra.mxu0 %v757
        %1565 = vmatprep.subr.mxu0 %v760
        %1566 = vmatpush1.msra.mxu0 %v759
        %1567 = vmatprep.subr.mxu0 %v762
        %1568 = vmatpush1.msra.mxu0 %v761
        %1569 = vmatprep.subr.mxu0 %v764
        %1570 = vmatpush1.msra.mxu0 %v763
        %1571 = vmatprep.subr.mxu0 %v766
        %1572 = vmatpush1.msra.mxu0 %v765
        %1573 = vmatprep.subr.mxu0 %v768
        %1574 = vmatpush1.msra.mxu0 %v767
        %1575 = vmatprep.subr.mxu0 %v770
        %1576 = vmatpush1.msra.mxu0 %v769
        %1577 = vmatprep.subr.mxu0 %v772
        %1578 = vmatpush1.msra.mxu0 %v771
        %1579 = vmatprep.subr.mxu0 %v774
        %1580 = vmatpush1.msra.mxu0 %v773
        %1581 = vmatprep.subr.mxu0 %v776
        %1582 = vmatpush1.msra.mxu0 %v775
        %1583 = vmatprep.subr.mxu0 %v778
        %1584 = vmatpush1.msra.mxu0 %v777
        %1585 = vmatprep.subr.mxu0 %v780
        %1586 = vmatpush1.msra.mxu0 %v779
        %1587 = vmatprep.subr.mxu0 %v782
        %1588 = vmatpush1.msra.mxu0 %v781
        %1589 = vmatprep.subr.mxu0 %v784
        %1590 = vmatpush1.msra.mxu0 %v783
        %1591 = vmatprep.subr.mxu0 %v786
        %1592 = vmatpush1.msra.mxu0 %v785
        %1593 = vmatprep.subr.mxu0 %v788
        %1594 = vmatpush1.msra.mxu0 %v787
        %1595 = vmatprep.subr.mxu0 %v790
        %1596 = vmatpush1.msra.mxu0 %v789
        %1597 = vmatprep.subr.mxu0 %v792
        %1598 = vmatpush1.msra.mxu0 %v791
        %1599 = vmatprep.subr.mxu0 %v794
        %1600 = vmatpush1.msra.mxu0 %v793
        %1601 = vmatprep.subr.mxu0 %v796
        %1602 = vmatpush1.msra.mxu0 %v795
        %1603 = vmatprep.subr.mxu0 %v798
        %1604 = vmatpush1.msra.mxu0 %v797
        %1605 = vmatprep.subr.mxu0 %v800
        %1606 = vmatpush1.msra.mxu0 %v799
        %1607 = vmatprep.subr.mxu0 %v802
        %1608 = vmatpush1.msra.mxu0 %v801
        %1609 = vmatprep.subr.mxu0 %v804
        %1610 = vmatpush1.msra.mxu0 %v803
        %1611 = vmatprep.subr.mxu0 %v806
        %1612 = vmatpush1.msra.mxu0 %v805
        %1613 = vmatprep.subr.mxu0 %v808
        %1614 = vmatpush1.msra.mxu0 %v807
        %1615 = vmatprep.subr.mxu0 %v810
        %1616 = vmatpush1.msra.mxu0 %v809
        %1617 = vmatprep.mubr.f32.mxu0 %v1552
        %1618 = vmatmul.mubr.f32.gmra.mrb[0].mxu0 %v1551
        %v1619 = vpop.f32.mrb[0].mxu0
        %v1620 = vadd.f32 0.0, %v1619
        %v1621 = vpop.f32.mrb[0].mxu0
        %v1622 = vadd.f32 0.0, %v1621
        %1623 = vdwg.mxu0
        %v1624 = vmul.f32 %v1620, 2.0
        %v1625 = vmul.f32 %v1622, 2.0
        %v1626 = vld [vmem:[%s11] sm:$0xff]
        %v1627 = vld [vmem:[%s12] sm:$0xff]
        %1629 = vset.pattern.permute.xlu0 0
        %1630 = vperm.xlu0 %1629, %v1627
        %v1631 = vpop.permute.xlu0 %1630
        %v1634 = vsel %vm923, %v1626, 0
        %1636 = vmatprep.subr.mxu0 %v1074
        %1637 = vmatpush1.msra.mxu0 %v1073
        %1638 = vmatprep.subr.mxu0 0.0
        %1639 = vmatpush1.msra.mxu0 0.0
        %1640 = vmatprep.subr.mxu0 0.0
        %1641 = vmatpush1.msra.mxu0 0.0
        %1642 = vmatprep.subr.mxu0 0.0
        %1643 = vmatpush1.msra.mxu0 0.0
        %1644 = vmatprep.subr.mxu0 0.0
        %1645 = vmatpush1.msra.mxu0 0.0
        %1646 = vmatprep.subr.mxu0 0.0
        %1647 = vmatpush1.msra.mxu0 0.0
        %1648 = vmatprep.subr.mxu0 0.0
        %1649 = vmatpush1.msra.mxu0 0.0
        %1650 = vmatprep.subr.mxu0 0.0
        %1651 = vmatpush1.msra.mxu0 0.0
        %1652 = vmatprep.subr.mxu0 0.0
        %1653 = vmatpush1.msra.mxu0 0.0
        %1654 = vmatprep.subr.mxu0 0.0
        %1655 = vmatpush1.msra.mxu0 0.0
        %1656 = vmatprep.subr.mxu0 0.0
        %1657 = vmatpush1.msra.mxu0 0.0
        %1658 = vmatprep.subr.mxu0 0.0
        %1659 = vmatpush1.msra.mxu0 0.0
        %1660 = vmatprep.subr.mxu0 0.0
        %1661 = vmatpush1.msra.mxu0 0.0
        %1662 = vmatprep.subr.mxu0 0.0
        %1663 = vmatpush1.msra.mxu0 0.0
        %1664 = vmatprep.subr.mxu0 0.0
        %1665 = vmatpush1.msra.mxu0 0.0
        %1666 = vmatprep.subr.mxu0 0.0
        %1667 = vmatpush1.msra.mxu0 0.0
        %1668 = vmatprep.subr.mxu0 0.0
        %1669 = vmatpush1.msra.mxu0 0.0
        %1670 = vmatprep.subr.mxu0 0.0
        %1671 = vmatpush1.msra.mxu0 0.0
        %1672 = vmatprep.subr.mxu0 0.0
        %1673 = vmatpush1.msra.mxu0 0.0
        %1674 = vmatprep.subr.mxu0 0.0
        %1675 = vmatpush1.msra.mxu0 0.0
        %1676 = vmatprep.subr.mxu0 0.0
        %1677 = vmatpush1.msra.mxu0 0.0
        %1678 = vmatprep.subr.mxu0 0.0
        %1679 = vmatpush1.msra.mxu0 0.0
        %1680 = vmatprep.subr.mxu0 0.0
        %1681 = vmatpush1.msra.mxu0 0.0
        %1682 = vmatprep.subr.mxu0 0.0
        %1683 = vmatpush1.msra.mxu0 0.0
        %1684 = vmatprep.subr.mxu0 0.0
        %1685 = vmatpush1.msra.mxu0 0.0
        %1686 = vmatprep.subr.mxu0 0.0
        %1687 = vmatpush1.msra.mxu0 0.0
        %1688 = vmatprep.subr.mxu0 0.0
        %1689 = vmatpush1.msra.mxu0 0.0
        %1690 = vmatprep.subr.mxu0 0.0
        %1691 = vmatpush1.msra.mxu0 0.0
        %1692 = vmatprep.subr.mxu0 0.0
        %1693 = vmatpush1.msra.mxu0 0.0
        %1694 = vmatprep.subr.mxu0 0.0
        %1695 = vmatpush1.msra.mxu0 0.0
        %1696 = vmatprep.subr.mxu0 0.0
        %1697 = vmatpush1.msra.mxu0 0.0
        %1698 = vmatprep.subr.mxu0 0.0
        %1699 = vmatpush1.msra.mxu0 0.0
        %1700 = vmatprep.mubr.f32.mxu0 0.0
        %1701 = vmatmul.mubr.f32.gmra.mrb[0].mxu0 %v1634
        %v1702 = vpop.f32.mrb[0].mxu0
        %v1703 = vadd.f32 %v1631, %v1702
        %v1704 = vpop.f32.mrb[0].mxu0
        %v1705 = vadd.f32 %v1631, %v1704
        %1706 = vdwg.mxu0
        %v1707 = vmul.f32 %v1703, 0.01
        %v1708 = vmul.f32 %v1705, 0.01
        %v1709 = vmax.f32 %v1703, %v1707
        %v1710 = vmax.f32 %v1705, %v1708
        %1711 = vmatprep.subr.mxu0 %v748
        %1712 = vmatpush1.msra.mxu0 %v747
        %1713 = vmatprep.subr.mxu0 %v750
        %1714 = vmatpush1.msra.mxu0 %v749
        %1715 = vmatprep.subr.mxu0 %v752
        %1716 = vmatpush1.msra.mxu0 %v751
        %1717 = vmatprep.subr.mxu0 %v754
        %1718 = vmatpush1.msra.mxu0 %v753
        %1719 = vmatprep.subr.mxu0 %v756
        %1720 = vmatpush1.msra.mxu0 %v755
        %1721 = vmatprep.subr.mxu0 %v758
        %1722 = vmatpush1.msra.mxu0 %v757
        %1723 = vmatprep.subr.mxu0 %v760
        %1724 = vmatpush1.msra.mxu0 %v759
        %1725 = vmatprep.subr.mxu0 %v762
        %1726 = vmatpush1.msra.mxu0 %v761
        %1727 = vmatprep.subr.mxu0 %v764
        %1728 = vmatpush1.msra.mxu0 %v763
        %1729 = vmatprep.subr.mxu0 %v766
        %1730 = vmatpush1.msra.mxu0 %v765
        %1731 = vmatprep.subr.mxu0 %v768
        %1732 = vmatpush1.msra.mxu0 %v767
        %1733 = vmatprep.subr.mxu0 %v770
        %1734 = vmatpush1.msra.mxu0 %v769
        %1735 = vmatprep.subr.mxu0 %v772
        %1736 = vmatpush1.msra.mxu0 %v771
        %1737 = vmatprep.subr.mxu0 %v774
        %1738 = vmatpush1.msra.mxu0 %v773
        %1739 = vmatprep.subr.mxu0 %v776
        %1740 = vmatpush1.msra.mxu0 %v775
        %1741 = vmatprep.subr.mxu0 %v778
        %1742 = vmatpush1.msra.mxu0 %v777
        %1743 = vmatprep.subr.mxu0 %v780
        %1744 = vmatpush1.msra.mxu0 %v779
        %1745 = vmatprep.subr.mxu0 %v782
        %1746 = vmatpush1.msra.mxu0 %v781
        %1747 = vmatprep.subr.mxu0 %v784
        %1748 = vmatpush1.msra.mxu0 %v783
        %1749 = vmatprep.subr.mxu0 %v786
        %1750 = vmatpush1.msra.mxu0 %v785
        %1751 = vmatprep.subr.mxu0 %v788
        %1752 = vmatpush1.msra.mxu0 %v787
        %1753 = vmatprep.subr.mxu0 %v790
        %1754 = vmatpush1.msra.mxu0 %v789
        %1755 = vmatprep.subr.mxu0 %v792
        %1756 = vmatpush1.msra.mxu0 %v791
        %1757 = vmatprep.subr.mxu0 %v794
        %1758 = vmatpush1.msra.mxu0 %v793
        %1759 = vmatprep.subr.mxu0 %v796
        %1760 = vmatpush1.msra.mxu0 %v795
        %1761 = vmatprep.subr.mxu0 %v798
        %1762 = vmatpush1.msra.mxu0 %v797
        %1763 = vmatprep.subr.mxu0 %v800
        %1764 = vmatpush1.msra.mxu0 %v799
        %1765 = vmatprep.subr.mxu0 %v802
        %1766 = vmatpush1.msra.mxu0 %v801
        %1767 = vmatprep.subr.mxu0 %v804
        %1768 = vmatpush1.msra.mxu0 %v803
        %1769 = vmatprep.subr.mxu0 %v806
        %1770 = vmatpush1.msra.mxu0 %v805
        %1771 = vmatprep.subr.mxu0 %v808
        %1772 = vmatpush1.msra.mxu0 %v807
        %1773 = vmatprep.subr.mxu0 %v810
        %1774 = vmatpush1.msra.mxu0 %v809
        %1775 = vmatprep.mubr.f32.mxu0 %v1710
        %1776 = vmatmul.mubr.f32.gmra.mrb[0].mxu0 %v1709
        %v1777 = vpop.f32.mrb[0].mxu0
        %v1778 = vadd.f32 0.0, %v1777
        %v1779 = vpop.f32.mrb[0].mxu0
        %v1780 = vadd.f32 0.0, %v1779
        %1781 = vdwg.mxu0
        %v1782 = vmul.f32 %v1778, 2.0
        %v1783 = vmul.f32 %v1780, 2.0
        %v1784 = vld [vmem:[%s13] sm:$0xff]
        %v1785 = vld [vmem:[%s14] sm:$0xff]
        %1787 = vrot.lane.b32.xlu0 %v1784, 120
        %v1788 = vpop.permute.xlu0 %1787
        %v1789 = vsel %vm923, %v1788, 0
        %1791 = vmatprep.subr.mxu0 %v1783
        %1792 = vmatpush1.msra.mxu0 %v1782
        %1793 = vmatprep.subr.mxu0 0.0
        %1794 = vmatpush1.msra.mxu0 0.0
        %1795 = vmatprep.subr.mxu0 0.0
        %1796 = vmatpush1.msra.mxu0 0.0
        %1797 = vmatprep.subr.mxu0 0.0
        %1798 = vmatpush1.msra.mxu0 0.0
        %1799 = vmatprep.subr.mxu0 0.0
        %1800 = vmatpush1.msra.mxu0 0.0
        %1801 = vmatprep.subr.mxu0 0.0
        %1802 = vmatpush1.msra.mxu0 0.0
        %1803 = vmatprep.subr.mxu0 0.0
        %1804 = vmatpush1.msra.mxu0 0.0
        %1805 = vmatprep.subr.mxu0 0.0
        %1806 = vmatpush1.msra.mxu0 0.0
        %1807 = vmatprep.subr.mxu0 0.0
        %1808 = vmatpush1.msra.mxu0 0.0
        %1809 = vmatprep.subr.mxu0 0.0
        %1810 = vmatpush1.msra.mxu0 0.0
        %1811 = vmatprep.subr.mxu0 0.0
        %1812 = vmatpush1.msra.mxu0 0.0
        %1813 = vmatprep.subr.mxu0 0.0
        %1814 = vmatpush1.msra.mxu0 0.0
        %1815 = vmatprep.subr.mxu0 0.0
        %1816 = vmatpush1.msra.mxu0 0.0
        %1817 = vmatprep.subr.mxu0 0.0
        %1818 = vmatpush1.msra.mxu0 0.0
        %1819 = vmatprep.subr.mxu0 0.0
        %1820 = vmatpush1.msra.mxu0 0.0
        %1821 = vmatprep.subr.mxu0 0.0
        %1822 = vmatpush1.msra.mxu0 0.0
        %1823 = vmatprep.subr.mxu0 0.0
        %1824 = vmatpush1.msra.mxu0 0.0
        %1825 = vmatprep.subr.mxu0 0.0
        %1826 = vmatpush1.msra.mxu0 0.0
        %1827 = vmatprep.subr.mxu0 0.0
        %1828 = vmatpush1.msra.mxu0 0.0
        %1829 = vmatprep.subr.mxu0 0.0
        %1830 = vmatpush1.msra.mxu0 0.0
        %1831 = vmatprep.subr.mxu0 0.0
        %1832 = vmatpush1.msra.mxu0 0.0
        %1833 = vmatprep.subr.mxu0 0.0
        %1834 = vmatpush1.msra.mxu0 0.0
        %1835 = vmatprep.subr.mxu0 0.0
        %1836 = vmatpush1.msra.mxu0 0.0
        %1837 = vmatprep.subr.mxu0 0.0
        %1838 = vmatpush1.msra.mxu0 0.0
        %1839 = vmatprep.subr.mxu0 0.0
        %1840 = vmatpush1.msra.mxu0 0.0
        %1841 = vmatprep.subr.mxu0 0.0
        %1842 = vmatpush1.msra.mxu0 0.0
        %1843 = vmatprep.subr.mxu0 0.0
        %1844 = vmatpush1.msra.mxu0 0.0
        %1845 = vmatprep.subr.mxu0 0.0
        %1846 = vmatpush1.msra.mxu0 0.0
        %1847 = vmatprep.subr.mxu0 0.0
        %1848 = vmatpush1.msra.mxu0 0.0
        %1849 = vmatprep.subr.mxu0 0.0
        %1850 = vmatpush1.msra.mxu0 0.0
        %1851 = vmatprep.subr.mxu0 0.0
        %1852 = vmatpush1.msra.mxu0 0.0
        %1853 = vmatprep.subr.mxu0 0.0
        %1854 = vmatpush1.msra.mxu0 0.0
        %1855 = vmatprep.mubr.f32.mxu0 0.0
        %1856 = vmatmul.mubr.f32.gmra.mrb[0].mxu0 %v1789
        %v1857 = vpop.f32.mrb[0].mxu0
        %v1858 = vadd.f32 0.0, %v1857
        %v1859 = vpop.f32.mrb[0].mxu0
        %v1860 = vadd.f32 0.0, %v1859
        %1861 = vdwg.mxu0
        %v1862 = vsel %vm923, %v1784, 0
        %1864 = vmatprep.subr.mxu0 %v1625
        %1865 = vmatpush1.msra.mxu0 %v1624
        %1866 = vmatprep.subr.mxu0 0.0
        %1867 = vmatpush1.msra.mxu0 0.0
        %1868 = vmatprep.subr.mxu0 0.0
        %1869 = vmatpush1.msra.mxu0 0.0
        %1870 = vmatprep.subr.mxu0 0.0
        %1871 = vmatpush1.msra.mxu0 0.0
        %1872 = vmatprep.subr.mxu0 0.0
        %1873 = vmatpush1.msra.mxu0 0.0
        %1874 = vmatprep.subr.mxu0 0.0
        %1875 = vmatpush1.msra.mxu0 0.0
        %1876 = vmatprep.subr.mxu0 0.0
        %1877 = vmatpush1.msra.mxu0 0.0
        %1878 = vmatprep.subr.mxu0 0.0
        %1879 = vmatpush1.msra.mxu0 0.0
        %1880 = vmatprep.subr.mxu0 0.0
        %1881 = vmatpush1.msra.mxu0 0.0
        %1882 = vmatprep.subr.mxu0 0.0
        %1883 = vmatpush1.msra.mxu0 0.0
        %1884 = vmatprep.subr.mxu0 0.0
        %1885 = vmatpush1.msra.mxu0 0.0
        %1886 = vmatprep.subr.mxu0 0.0
        %1887 = vmatpush1.msra.mxu0 0.0
        %1888 = vmatprep.subr.mxu0 0.0
        %1889 = vmatpush1.msra.mxu0 0.0
        %1890 = vmatprep.subr.mxu0 0.0
        %1891 = vmatpush1.msra.mxu0 0.0
        %1892 = vmatprep.subr.mxu0 0.0
        %1893 = vmatpush1.msra.mxu0 0.0
        %1894 = vmatprep.subr.mxu0 0.0
        %1895 = vmatpush1.msra.mxu0 0.0
        %1896 = vmatprep.subr.mxu0 0.0
        %1897 = vmatpush1.msra.mxu0 0.0
        %1898 = vmatprep.subr.mxu0 0.0
        %1899 = vmatpush1.msra.mxu0 0.0
        %1900 = vmatprep.subr.mxu0 0.0
        %1901 = vmatpush1.msra.mxu0 0.0
        %1902 = vmatprep.subr.mxu0 0.0
        %1903 = vmatpush1.msra.mxu0 0.0
        %1904 = vmatprep.subr.mxu0 0.0
        %1905 = vmatpush1.msra.mxu0 0.0
        %1906 = vmatprep.subr.mxu0 0.0
        %1907 = vmatpush1.msra.mxu0 0.0
        %1908 = vmatprep.subr.mxu0 0.0
        %1909 = vmatpush1.msra.mxu0 0.0
        %1910 = vmatprep.subr.mxu0 0.0
        %1911 = vmatpush1.msra.mxu0 0.0
        %1912 = vmatprep.subr.mxu0 0.0
        %1913 = vmatpush1.msra.mxu0 0.0
        %1914 = vmatprep.subr.mxu0 0.0
        %1915 = vmatpush1.msra.mxu0 0.0
        %1916 = vmatprep.subr.mxu0 0.0
        %1917 = vmatpush1.msra.mxu0 0.0
        %1918 = vmatprep.subr.mxu0 0.0
        %1919 = vmatpush1.msra.mxu0 0.0
        %1920 = vmatprep.subr.mxu0 0.0
        %1921 = vmatpush1.msra.mxu0 0.0
        %1922 = vmatprep.subr.mxu0 0.0
        %1923 = vmatpush1.msra.mxu0 0.0
        %1924 = vmatprep.subr.mxu0 0.0
        %1925 = vmatpush1.msra.mxu0 0.0
        %1926 = vmatprep.subr.mxu0 0.0
        %1927 = vmatpush1.msra.mxu0 0.0
        %1928 = vmatprep.mubr.f32.mxu0 0.0
        %1929 = vmatmul.mubr.f32.gmra.mrb[0].mxu0 %v1862
        %v1930 = vpop.f32.mrb[0].mxu0
        %v1931 = vadd.f32 %v1858, %v1930
        %v1932 = vpop.f32.mrb[0].mxu0
        %v1933 = vadd.f32 %v1860, %v1932
        %1934 = vdwg.mxu0
        %1936 = vset.pattern.permute.xlu0 0
        %1937 = vperm.xlu0 %1936, %v1785
        %v1938 = vpop.permute.xlu0 %1937
        %v1940 = vadd.f32 %v1931, %v1938
        %v1941 = vadd.f32 %v1933, %v1938
        %v1942 = vmul.f32 %v1940, 0.01
        %v1943 = vmul.f32 %v1941, 0.01
        %v1944 = vmax.f32 %v1940, %v1942
        %v1945 = vmax.f32 %v1941, %v1943
        %1946 = vst [vmem:[%s736] sm:$0xff] %v1231
        %1947 = vst [vmem:[%s736 + $0x8] sm:$0xff] %v1232
        %1948 = vst [vmem:[%s741] sm:$0xff] %v1231
        %1949 = vst [vmem:[%s741 + $0x8] sm:$0xff] %v1232
        %1950 = vst [vmem:[%s741 + $0x10] sm:$0xff] %v1389
        %1951 = vst [vmem:[%s741 + $0x18] sm:$0xff] %v1390
        %v1952 = vld [vmem:[%s16] sm:$0xff]
        %v1953 = vld [vmem:[%s16 + $0x8] sm:$0xff]
        %v1954 = vld [vmem:[%s16 + $0x10] sm:$0xff]
        %v1955 = vld [vmem:[%s16 + $0x18] sm:$0xff]
        %v1956 = vld [vmem:[%s16 + $0x20] sm:$0xff]
        %v1957 = vld [vmem:[%s16 + $0x28] sm:$0xff]
        %v1958 = vld [vmem:[%s16 + $0x30] sm:$0xff]
        %v1959 = vld [vmem:[%s16 + $0x38] sm:$0xff]
        %v1960 = vld [vmem:[%s16 + $0x40] sm:$0xff]
        %v1961 = vld [vmem:[%s16 + $0x48] sm:$0xff]
        %v1962 = vld [vmem:[%s16 + $0x50] sm:$0xff]
        %v1963 = vld [vmem:[%s16 + $0x58] sm:$0xff]
        %v1964 = vld [vmem:[%s16 + $0x60] sm:$0xff]
        %v1965 = vld [vmem:[%s16 + $0x68] sm:$0xff]
        %v1966 = vld [vmem:[%s16 + $0x70] sm:$0xff]
        %v1967 = vld [vmem:[%s16 + $0x78] sm:$0xff]
        %v1968 = vld [vmem:[%s16 + $0x80] sm:$0xff]
        %v1969 = vld [vmem:[%s16 + $0x88] sm:$0xff]
        %v1970 = vld [vmem:[%s16 + $0x90] sm:$0xff]
        %v1971 = vld [vmem:[%s16 + $0x98] sm:$0xff]
        %v1972 = vld [vmem:[%s16 + $0xa0] sm:$0xff]
        %v1973 = vld [vmem:[%s16 + $0xa8] sm:$0xff]
        %v1974 = vld [vmem:[%s16 + $0xb0] sm:$0xff]
        %v1975 = vld [vmem:[%s16 + $0xb8] sm:$0xff]
        %v1976 = vld [vmem:[%s16 + $0xc0] sm:$0xff]
        %v1977 = vld [vmem:[%s16 + $0xc8] sm:$0xff]
        %v1978 = vld [vmem:[%s16 + $0xd0] sm:$0xff]
        %v1979 = vld [vmem:[%s16 + $0xd8] sm:$0xff]
        %v1980 = vld [vmem:[%s16 + $0xe0] sm:$0xff]
        %v1981 = vld [vmem:[%s16 + $0xe8] sm:$0xff]
        %v1982 = vld [vmem:[%s16 + $0xf0] sm:$0xff]
        %v1983 = vld [vmem:[%s16 + $0xf8] sm:$0xff]
        %v1984 = vld [vmem:[%s16 + $0x100] sm:$0xff]
        %v1985 = vld [vmem:[%s16 + $0x108] sm:$0xff]
        %v1986 = vld [vmem:[%s16 + $0x110] sm:$0xff]
        %v1987 = vld [vmem:[%s16 + $0x118] sm:$0xff]
        %v1988 = vld [vmem:[%s16 + $0x120] sm:$0xff]
        %v1989 = vld [vmem:[%s16 + $0x128] sm:$0xff]
        %v1990 = vld [vmem:[%s16 + $0x130] sm:$0xff]
        %v1991 = vld [vmem:[%s16 + $0x138] sm:$0xff]
        %v1992 = vld [vmem:[%s16 + $0x140] sm:$0xff]
        %v1993 = vld [vmem:[%s16 + $0x148] sm:$0xff]
        %v1994 = vld [vmem:[%s16 + $0x150] sm:$0xff]
        %v1995 = vld [vmem:[%s16 + $0x158] sm:$0xff]
        %v1996 = vld [vmem:[%s16 + $0x160] sm:$0xff]
        %v1997 = vld [vmem:[%s16 + $0x168] sm:$0xff]
        %v1998 = vld [vmem:[%s16 + $0x170] sm:$0xff]
        %v1999 = vld [vmem:[%s16 + $0x178] sm:$0xff]
        %v2000 = vld [vmem:[%s16 + $0x180] sm:$0xff]
        %v2001 = vld [vmem:[%s16 + $0x188] sm:$0xff]
        %v2002 = vld [vmem:[%s16 + $0x190] sm:$0xff]
        %v2003 = vld [vmem:[%s16 + $0x198] sm:$0xff]
        %v2004 = vld [vmem:[%s16 + $0x1a0] sm:$0xff]
        %v2005 = vld [vmem:[%s16 + $0x1a8] sm:$0xff]
        %v2006 = vld [vmem:[%s16 + $0x1b0] sm:$0xff]
        %v2007 = vld [vmem:[%s16 + $0x1b8] sm:$0xff]
        %v2008 = vld [vmem:[%s16 + $0x1c0] sm:$0xff]
        %v2009 = vld [vmem:[%s16 + $0x1c8] sm:$0xff]
        %v2010 = vld [vmem:[%s16 + $0x1d0] sm:$0xff]
        %v2011 = vld [vmem:[%s16 + $0x1d8] sm:$0xff]
        %v2012 = vld [vmem:[%s16 + $0x1e0] sm:$0xff]
        %v2013 = vld [vmem:[%s16 + $0x1e8] sm:$0xff]
        %v2014 = vld [vmem:[%s16 + $0x1f0] sm:$0xff]
        %v2015 = vld [vmem:[%s16 + $0x1f8] sm:$0xff]
        %v2016 = vld [vmem:[%s16 + $0x200] sm:$0xff]
        %v2017 = vld [vmem:[%s16 + $0x208] sm:$0xff]
        %v2018 = vld [vmem:[%s16 + $0x210] sm:$0xff]
        %v2019 = vld [vmem:[%s16 + $0x218] sm:$0xff]
        %v2020 = vld [vmem:[%s16 + $0x220] sm:$0xff]
        %v2021 = vld [vmem:[%s16 + $0x228] sm:$0xff]
        %v2022 = vld [vmem:[%s16 + $0x230] sm:$0xff]
        %v2023 = vld [vmem:[%s16 + $0x238] sm:$0xff]
        %v2024 = vld [vmem:[%s16 + $0x240] sm:$0xff]
        %v2025 = vld [vmem:[%s16 + $0x248] sm:$0xff]
        %v2026 = vld [vmem:[%s16 + $0x250] sm:$0xff]
        %v2027 = vld [vmem:[%s16 + $0x258] sm:$0xff]
        %v2028 = vld [vmem:[%s16 + $0x260] sm:$0xff]
        %v2029 = vld [vmem:[%s16 + $0x268] sm:$0xff]
        %v2030 = vld [vmem:[%s16 + $0x270] sm:$0xff]
        %v2031 = vld [vmem:[%s16 + $0x278] sm:$0xff]
        %v2032 = vld [vmem:[%s16 + $0x280] sm:$0xff]
        %v2033 = vld [vmem:[%s16 + $0x288] sm:$0xff]
        %v2034 = vld [vmem:[%s16 + $0x290] sm:$0xff]
        %v2035 = vld [vmem:[%s16 + $0x298] sm:$0xff]
        %v2036 = vld [vmem:[%s16 + $0x2a0] sm:$0xff]
        %v2037 = vld [vmem:[%s16 + $0x2a8] sm:$0xff]
        %v2038 = vld [vmem:[%s16 + $0x2b0] sm:$0xff]
        %v2039 = vld [vmem:[%s16 + $0x2b8] sm:$0xff]
        %v2040 = vld [vmem:[%s16 + $0x2c0] sm:$0xff]
        %v2041 = vld [vmem:[%s16 + $0x2c8] sm:$0xff]
        %v2042 = vld [vmem:[%s16 + $0x2d0] sm:$0xff]
        %v2043 = vld [vmem:[%s16 + $0x2d8] sm:$0xff]
        %v2044 = vld [vmem:[%s16 + $0x2e0] sm:$0xff]
        %v2045 = vld [vmem:[%s16 + $0x2e8] sm:$0xff]
        %v2046 = vld [vmem:[%s16 + $0x2f0] sm:$0xff]
        %v2047 = vld [vmem:[%s16 + $0x2f8] sm:$0xff]
        %v2048 = vld [vmem:[%s16 + $0x300] sm:$0xff]
        %v2049 = vld [vmem:[%s16 + $0x308] sm:$0xff]
        %v2050 = vld [vmem:[%s16 + $0x310] sm:$0xff]
        %v2051 = vld [vmem:[%s16 + $0x318] sm:$0xff]
        %v2052 = vld [vmem:[%s16 + $0x320] sm:$0xff]
        %v2053 = vld [vmem:[%s16 + $0x328] sm:$0xff]
        %v2054 = vld [vmem:[%s16 + $0x330] sm:$0xff]
        %v2055 = vld [vmem:[%s16 + $0x338] sm:$0xff]
        %v2056 = vld [vmem:[%s16 + $0x340] sm:$0xff]
        %v2057 = vld [vmem:[%s16 + $0x348] sm:$0xff]
        %v2058 = vld [vmem:[%s16 + $0x350] sm:$0xff]
        %v2059 = vld [vmem:[%s16 + $0x358] sm:$0xff]
        %v2060 = vld [vmem:[%s16 + $0x360] sm:$0xff]
        %v2061 = vld [vmem:[%s16 + $0x368] sm:$0xff]
        %v2062 = vld [vmem:[%s16 + $0x370] sm:$0xff]
        %v2063 = vld [vmem:[%s16 + $0x378] sm:$0xff]
        %v2064 = vld [vmem:[%s16 + $0x380] sm:$0xff]
        %v2065 = vld [vmem:[%s16 + $0x388] sm:$0xff]
        %v2066 = vld [vmem:[%s16 + $0x390] sm:$0xff]
        %v2067 = vld [vmem:[%s16 + $0x398] sm:$0xff]
        %v2068 = vld [vmem:[%s16 + $0x3a0] sm:$0xff]
        %v2069 = vld [vmem:[%s16 + $0x3a8] sm:$0xff]
        %v2070 = vld [vmem:[%s16 + $0x3b0] sm:$0xff]
        %v2071 = vld [vmem:[%s16 + $0x3b8] sm:$0xff]
        %v2072 = vld [vmem:[%s16 + $0x3c0] sm:$0xff]
        %v2073 = vld [vmem:[%s16 + $0x3c8] sm:$0xff]
        %v2074 = vld [vmem:[%s16 + $0x3d0] sm:$0xff]
        %v2075 = vld [vmem:[%s16 + $0x3d8] sm:$0xff]
        %v2076 = vld [vmem:[%s16 + $0x3e0] sm:$0xff]
        %v2077 = vld [vmem:[%s16 + $0x3e8] sm:$0xff]
        %v2078 = vld [vmem:[%s16 + $0x3f0] sm:$0xff]
        %v2079 = vld [vmem:[%s16 + $0x3f8] sm:$0xff]
        %v2080 = vld [vmem:[%s17] sm:$0xf]
        %v2082 = vlaneseq
        %v2083 = vshrl.u32 %v2082, 7
        %v2084 = vsub.s32 0, %v2083
        %v2085 = vrot.slane %v2080, %v2084
        %v2086 = vlaneseq
        %v2087 = vshrl.u32 %v2086, 7
        %v2088 = vsub.s32 1, %v2087
        %v2089 = vrot.slane %v2080, %v2088
        %v2090 = vlaneseq
        %v2091 = vshrl.u32 %v2090, 7
        %v2092 = vsub.s32 2, %v2091
        %v2093 = vrot.slane %v2080, %v2092
        %v2094 = vlaneseq
        %v2095 = vshrl.u32 %v2094, 7
        %v2096 = vsub.s32 3, %v2095
        %v2097 = vrot.slane %v2080, %v2096
        %2102 = vmatprep.subr.mxu0 %v1953
        %2103 = vmatpush1.msra.mxu0 %v1952
        %2104 = vmatprep.subr.mxu0 %v1957
        %2105 = vmatpush1.msra.mxu0 %v1956
        %2106 = vmatprep.subr.mxu0 %v1961
        %2107 = vmatpush1.msra.mxu0 %v1960
        %2108 = vmatprep.subr.mxu0 %v1965
        %2109 = vmatpush1.msra.mxu0 %v1964
        %2110 = vmatprep.subr.mxu0 %v1969
        %2111 = vmatpush1.msra.mxu0 %v1968
        %2112 = vmatprep.subr.mxu0 %v1973
        %2113 = vmatpush1.msra.mxu0 %v1972
        %2114 = vmatprep.subr.mxu0 %v1977
        %2115 = vmatpush1.msra.mxu0 %v1976
        %2116 = vmatprep.subr.mxu0 %v1981
        %2117 = vmatpush1.msra.mxu0 %v1980
        %2118 = vmatprep.subr.mxu0 %v1985
        %2119 = vmatpush1.msra.mxu0 %v1984
        %2120 = vmatprep.subr.mxu0 %v1989
        %2121 = vmatpush1.msra.mxu0 %v1988
        %2122 = vmatprep.subr.mxu0 %v1993
        %2123 = vmatpush1.msra.mxu0 %v1992
        %2124 = vmatprep.subr.mxu0 %v1997
        %2125 = vmatpush1.msra.mxu0 %v1996
        %2126 = vmatprep.subr.mxu0 %v2001
        %2127 = vmatpush1.msra.mxu0 %v2000
        %2128 = vmatprep.subr.mxu0 %v2005
        %2129 = vmatpush1.msra.mxu0 %v2004
        %2130 = vmatprep.subr.mxu0 %v2009
        %2131 = vmatpush1.msra.mxu0 %v2008
        %2132 = vmatprep.subr.mxu0 %v2013
        %2133 = vmatpush1.msra.mxu0 %v2012
        %2134 = vmatprep.subr.mxu0 %v2017
        %2135 = vmatpush1.msra.mxu0 %v2016
        %2136 = vmatprep.subr.mxu0 %v2021
        %2137 = vmatpush1.msra.mxu0 %v2020
        %2138 = vmatprep.subr.mxu0 %v2025
        %2139 = vmatpush1.msra.mxu0 %v2024
        %2140 = vmatprep.subr.mxu0 %v2029
        %2141 = vmatpush1.msra.mxu0 %v2028
        %2142 = vmatprep.subr.mxu0 %v2033
        %2143 = vmatpush1.msra.mxu0 %v2032
        %2144 = vmatprep.subr.mxu0 %v2037
        %2145 = vmatpush1.msra.mxu0 %v2036
        %2146 = vmatprep.subr.mxu0 %v2041
        %2147 = vmatpush1.msra.mxu0 %v2040
        %2148 = vmatprep.subr.mxu0 %v2045
        %2149 = vmatpush1.msra.mxu0 %v2044
        %2150 = vmatprep.subr.mxu0 %v2049
        %2151 = vmatpush1.msra.mxu0 %v2048
        %2152 = vmatprep.subr.mxu0 %v2053
        %2153 = vmatpush1.msra.mxu0 %v2052
        %2154 = vmatprep.subr.mxu0 %v2057
        %2155 = vmatpush1.msra.mxu0 %v2056
        %2156 = vmatprep.subr.mxu0 %v2061
        %2157 = vmatpush1.msra.mxu0 %v2060
        %2158 = vmatprep.subr.mxu0 %v2065
        %2159 = vmatpush1.msra.mxu0 %v2064
        %2160 = vmatprep.subr.mxu0 %v2069
        %2161 = vmatpush1.msra.mxu0 %v2068
        %2162 = vmatprep.subr.mxu0 %v2073
        %2163 = vmatpush1.msra.mxu0 %v2072
        %2164 = vmatprep.subr.mxu0 %v2077
        %2165 = vmatpush1.msra.mxu0 %v2076
        %2166 = vmatprep.mubr.f32.mxu0 %v1945
        %2167 = vmatmul.mubr.f32.gmra.mrb[0].mxu0 %v1944
        %v2168 = vpop.f32.mrb[0].mxu0
        %v2169 = vadd.f32 %v2085, %v2168
        %v2170 = vpop.f32.mrb[0].mxu0
        %v2171 = vadd.f32 %v2089, %v2170
        %2172 = vdwg.mxu0
        %2173 = vmatprep.subr.mxu0 %v1955
        %2174 = vmatpush1.msra.mxu0 %v1954
        %2175 = vmatprep.subr.mxu0 %v1959
        %2176 = vmatpush1.msra.mxu0 %v1958
        %2177 = vmatprep.subr.mxu0 %v1963
        %2178 = vmatpush1.msra.mxu0 %v1962
        %2179 = vmatprep.subr.mxu0 %v1967
        %2180 = vmatpush1.msra.mxu0 %v1966
        %2181 = vmatprep.subr.mxu0 %v1971
        %2182 = vmatpush1.msra.mxu0 %v1970
        %2183 = vmatprep.subr.mxu0 %v1975
        %2184 = vmatpush1.msra.mxu0 %v1974
        %2185 = vmatprep.subr.mxu0 %v1979
        %2186 = vmatpush1.msra.mxu0 %v1978
        %2187 = vmatprep.subr.mxu0 %v1983
        %2188 = vmatpush1.msra.mxu0 %v1982
        %2189 = vmatprep.subr.mxu0 %v1987
        %2190 = vmatpush1.msra.mxu0 %v1986
        %2191 = vmatprep.subr.mxu0 %v1991
        %2192 = vmatpush1.msra.mxu0 %v1990
        %2193 = vmatprep.subr.mxu0 %v1995
        %2194 = vmatpush1.msra.mxu0 %v1994
        %2195 = vmatprep.subr.mxu0 %v1999
        %2196 = vmatpush1.msra.mxu0 %v1998
        %2197 = vmatprep.subr.mxu0 %v2003
        %2198 = vmatpush1.msra.mxu0 %v2002
        %2199 = vmatprep.subr.mxu0 %v2007
        %2200 = vmatpush1.msra.mxu0 %v2006
        %2201 = vmatprep.subr.mxu0 %v2011
        %2202 = vmatpush1.msra.mxu0 %v2010
        %2203 = vmatprep.subr.mxu0 %v2015
        %2204 = vmatpush1.msra.mxu0 %v2014
        %2205 = vmatprep.subr.mxu0 %v2019
        %2206 = vmatpush1.msra.mxu0 %v2018
        %2207 = vmatprep.subr.mxu0 %v2023
        %2208 = vmatpush1.msra.mxu0 %v2022
        %2209 = vmatprep.subr.mxu0 %v2027
        %2210 = vmatpush1.msra.mxu0 %v2026
        %2211 = vmatprep.subr.mxu0 %v2031
        %2212 = vmatpush1.msra.mxu0 %v2030
        %2213 = vmatprep.subr.mxu0 %v2035
        %2214 = vmatpush1.msra.mxu0 %v2034
        %2215 = vmatprep.subr.mxu0 %v2039
        %2216 = vmatpush1.msra.mxu0 %v2038
        %2217 = vmatprep.subr.mxu0 %v2043
        %2218 = vmatpush1.msra.mxu0 %v2042
        %2219 = vmatprep.subr.mxu0 %v2047
        %2220 = vmatpush1.msra.mxu0 %v2046
        %2221 = vmatprep.subr.mxu0 %v2051
        %2222 = vmatpush1.msra.mxu0 %v2050
        %2223 = vmatprep.subr.mxu0 %v2055
        %2224 = vmatpush1.msra.mxu0 %v2054
        %2225 = vmatprep.subr.mxu0 %v2059
        %2226 = vmatpush1.msra.mxu0 %v2058
        %2227 = vmatprep.subr.mxu0 %v2063
        %2228 = vmatpush1.msra.mxu0 %v2062
        %2229 = vmatprep.subr.mxu0 %v2067
        %2230 = vmatpush1.msra.mxu0 %v2066
        %2231 = vmatprep.subr.mxu0 %v2071
        %2232 = vmatpush1.msra.mxu0 %v2070
        %2233 = vmatprep.subr.mxu0 %v2075
        %2234 = vmatpush1.msra.mxu0 %v2074
        %2235 = vmatprep.subr.mxu0 %v2079
        %2236 = vmatpush1.msra.mxu0 %v2078
        %2237 = vmatprep.mubr.f32.mxu0 %v1945
        %2238 = vmatmul.mubr.f32.gmra.mrb[0].mxu0 %v1944
        %v2239 = vpop.f32.mrb[0].mxu0
        %v2240 = vadd.f32 %v2093, %v2239
        %v2241 = vpop.f32.mrb[0].mxu0
        %v2242 = vadd.f32 %v2097, %v2241
        %2243 = vdwg.mxu0
        %v2244 = vmax.f32 %v2169, 0.0
        %v2245 = vmax.f32 %v2171, 0.0
        %v2246 = vmax.f32 %v2240, 0.0
        %v2247 = vmax.f32 %v2242, 0.0
        %v2248 = vld [vmem:[%s18] sm:$0xff]
        %v2249 = vld [vmem:[%s18 + $0x8] sm:$0xff]
        %v2250 = vld [vmem:[%s18 + $0x10] sm:$0xff]
        %v2251 = vld [vmem:[%s18 + $0x18] sm:$0xff]
        %v2252 = vld [vmem:[%s18 + $0x20] sm:$0xff]
        %v2253 = vld [vmem:[%s18 + $0x28] sm:$0xff]
        %v2254 = vld [vmem:[%s18 + $0x30] sm:$0xff]
        %v2255 = vld [vmem:[%s18 + $0x38] sm:$0xff]
        %v2256 = vld [vmem:[%s18 + $0x40] sm:$0xff]
        %v2257 = vld [vmem:[%s18 + $0x48] sm:$0xff]
        %v2258 = vld [vmem:[%s18 + $0x50] sm:$0xff]
        %v2259 = vld [vmem:[%s18 + $0x58] sm:$0xff]
        %v2260 = vld [vmem:[%s18 + $0x60] sm:$0xff]
        %v2261 = vld [vmem:[%s18 + $0x68] sm:$0xff]
        %v2262 = vld [vmem:[%s18 + $0x70] sm:$0xff]
        %v2263 = vld [vmem:[%s18 + $0x78] sm:$0xff]
        %v2264 = vld [vmem:[%s18 + $0x80] sm:$0xff]
        %v2265 = vld [vmem:[%s18 + $0x88] sm:$0xff]
        %v2266 = vld [vmem:[%s18 + $0x90] sm:$0xff]
        %v2267 = vld [vmem:[%s18 + $0x98] sm:$0xff]
        %v2268 = vld [vmem:[%s18 + $0xa0] sm:$0xff]
        %v2269 = vld [vmem:[%s18 + $0xa8] sm:$0xff]
        %v2270 = vld [vmem:[%s18 + $0xb0] sm:$0xff]
        %v2271 = vld [vmem:[%s18 + $0xb8] sm:$0xff]
        %v2272 = vld [vmem:[%s18 + $0xc0] sm:$0xff]
        %v2273 = vld [vmem:[%s18 + $0xc8] sm:$0xff]
        %v2274 = vld [vmem:[%s18 + $0xd0] sm:$0xff]
        %v2275 = vld [vmem:[%s18 + $0xd8] sm:$0xff]
        %v2276 = vld [vmem:[%s18 + $0xe0] sm:$0xff]
        %v2277 = vld [vmem:[%s18 + $0xe8] sm:$0xff]
        %v2278 = vld [vmem:[%s18 + $0xf0] sm:$0xff]
        %v2279 = vld [vmem:[%s18 + $0xf8] sm:$0xff]
        %v2280 = vld [vmem:[%s18 + $0x100] sm:$0xff]
        %v2281 = vld [vmem:[%s18 + $0x108] sm:$0xff]
        %v2282 = vld [vmem:[%s18 + $0x110] sm:$0xff]
        %v2283 = vld [vmem:[%s18 + $0x118] sm:$0xff]
        %v2284 = vld [vmem:[%s18 + $0x120] sm:$0xff]
        %v2285 = vld [vmem:[%s18 + $0x128] sm:$0xff]
        %v2286 = vld [vmem:[%s18 + $0x130] sm:$0xff]
        %v2287 = vld [vmem:[%s18 + $0x138] sm:$0xff]
        %v2288 = vld [vmem:[%s18 + $0x140] sm:$0xff]
        %v2289 = vld [vmem:[%s18 + $0x148] sm:$0xff]
        %v2290 = vld [vmem:[%s18 + $0x150] sm:$0xff]
        %v2291 = vld [vmem:[%s18 + $0x158] sm:$0xff]
        %v2292 = vld [vmem:[%s18 + $0x160] sm:$0xff]
        %v2293 = vld [vmem:[%s18 + $0x168] sm:$0xff]
        %v2294 = vld [vmem:[%s18 + $0x170] sm:$0xff]
        %v2295 = vld [vmem:[%s18 + $0x178] sm:$0xff]
        %v2296 = vld [vmem:[%s18 + $0x180] sm:$0xff]
        %v2297 = vld [vmem:[%s18 + $0x188] sm:$0xff]
        %v2298 = vld [vmem:[%s18 + $0x190] sm:$0xff]
        %v2299 = vld [vmem:[%s18 + $0x198] sm:$0xff]
        %v2300 = vld [vmem:[%s18 + $0x1a0] sm:$0xff]
        %v2301 = vld [vmem:[%s18 + $0x1a8] sm:$0xff]
        %v2302 = vld [vmem:[%s18 + $0x1b0] sm:$0xff]
        %v2303 = vld [vmem:[%s18 + $0x1b8] sm:$0xff]
        %v2304 = vld [vmem:[%s18 + $0x1c0] sm:$0xff]
        %v2305 = vld [vmem:[%s18 + $0x1c8] sm:$0xff]
        %v2306 = vld [vmem:[%s18 + $0x1d0] sm:$0xff]
        %v2307 = vld [vmem:[%s18 + $0x1d8] sm:$0xff]
        %v2308 = vld [vmem:[%s18 + $0x1e0] sm:$0xff]
        %v2309 = vld [vmem:[%s18 + $0x1e8] sm:$0xff]
        %v2310 = vld [vmem:[%s18 + $0x1f0] sm:$0xff]
        %v2311 = vld [vmem:[%s18 + $0x1f8] sm:$0xff]
        %s2312 = sld [smem:[#allocation2]]
        %v2313 = vstv %s2312
        %2314 = vmatprep.subr.mxu0 0.0
        %2315 = vmatpush1.msra.mxu0 %v2248
        %2316 = vmatprep.subr.mxu0 0.0
        %2317 = vmatpush1.msra.mxu0 %v2249
        %2318 = vmatprep.subr.mxu0 0.0
        %2319 = vmatpush1.msra.mxu0 %v2250
        %2320 = vmatprep.subr.mxu0 0.0
        %2321 = vmatpush1.msra.mxu0 %v2251
        %2322 = vmatprep.subr.mxu0 0.0
        %2323 = vmatpush1.msra.mxu0 %v2252
        %2324 = vmatprep.subr.mxu0 0.0
        %2325 = vmatpush1.msra.mxu0 %v2253
        %2326 = vmatprep.subr.mxu0 0.0
        %2327 = vmatpush1.msra.mxu0 %v2254
        %2328 = vmatprep.subr.mxu0 0.0
        %2329 = vmatpush1.msra.mxu0 %v2255
        %2330 = vmatprep.subr.mxu0 0.0
        %2331 = vmatpush1.msra.mxu0 %v2256
        %2332 = vmatprep.subr.mxu0 0.0
        %2333 = vmatpush1.msra.mxu0 %v2257
        %2334 = vmatprep.subr.mxu0 0.0
        %2335 = vmatpush1.msra.mxu0 %v2258
        %2336 = vmatprep.subr.mxu0 0.0
        %2337 = vmatpush1.msra.mxu0 %v2259
        %2338 = vmatprep.subr.mxu0 0.0
        %2339 = vmatpush1.msra.mxu0 %v2260
        %2340 = vmatprep.subr.mxu0 0.0
        %2341 = vmatpush1.msra.mxu0 %v2261
        %2342 = vmatprep.subr.mxu0 0.0
        %2343 = vmatpush1.msra.mxu0 %v2262
        %2344 = vmatprep.subr.mxu0 0.0
        %2345 = vmatpush1.msra.mxu0 %v2263
        %2346 = vmatprep.subr.mxu0 0.0
        %2347 = vmatpush1.msra.mxu0 %v2264
        %2348 = vmatprep.subr.mxu0 0.0
        %2349 = vmatpush1.msra.mxu0 %v2265
        %2350 = vmatprep.subr.mxu0 0.0
        %2351 = vmatpush1.msra.mxu0 %v2266
        %2352 = vmatprep.subr.mxu0 0.0
        %2353 = vmatpush1.msra.mxu0 %v2267
        %2354 = vmatprep.subr.mxu0 0.0
        %2355 = vmatpush1.msra.mxu0 %v2268
        %2356 = vmatprep.subr.mxu0 0.0
        %2357 = vmatpush1.msra.mxu0 %v2269
        %2358 = vmatprep.subr.mxu0 0.0
        %2359 = vmatpush1.msra.mxu0 %v2270
        %2360 = vmatprep.subr.mxu0 0.0
        %2361 = vmatpush1.msra.mxu0 %v2271
        %2362 = vmatprep.subr.mxu0 0.0
        %2363 = vmatpush1.msra.mxu0 %v2272
        %2364 = vmatprep.subr.mxu0 0.0
        %2365 = vmatpush1.msra.mxu0 %v2273
        %2366 = vmatprep.subr.mxu0 0.0
        %2367 = vmatpush1.msra.mxu0 %v2274
        %2368 = vmatprep.subr.mxu0 0.0
        %2369 = vmatpush1.msra.mxu0 %v2275
        %2370 = vmatprep.subr.mxu0 0.0
        %2371 = vmatpush1.msra.mxu0 %v2276
        %2372 = vmatprep.subr.mxu0 0.0
        %2373 = vmatpush1.msra.mxu0 %v2277
        %2374 = vmatprep.subr.mxu0 0.0
        %2375 = vmatpush1.msra.mxu0 %v2278
        %2376 = vmatprep.subr.mxu0 0.0
        %2377 = vmatpush1.msra.mxu0 %v2279
        %2378 = vmatprep.mubr.f32.mxu0 %v2245
        %2379 = vmatmul.mubr.f32.gmra.mrb[0].mxu0 %v2244
        %v2380 = vpop.f32.mrb[0].mxu0
        %v2381 = vadd.f32 %v2313, %v2380
        %v2382 = vpop.f32.mrb[0].mxu0
        %2383 = vdwg.mxu0
        %2384 = vmatprep.subr.mxu0 0.0
        %2385 = vmatpush1.msra.mxu0 %v2280
        %2386 = vmatprep.subr.mxu0 0.0
        %2387 = vmatpush1.msra.mxu0 %v2281
        %2388 = vmatprep.subr.mxu0 0.0
        %2389 = vmatpush1.msra.mxu0 %v2282
        %2390 = vmatprep.subr.mxu0 0.0
        %2391 = vmatpush1.msra.mxu0 %v2283
        %2392 = vmatprep.subr.mxu0 0.0
        %2393 = vmatpush1.msra.mxu0 %v2284
        %2394 = vmatprep.subr.mxu0 0.0
        %2395 = vmatpush1.msra.mxu0 %v2285
        %2396 = vmatprep.subr.mxu0 0.0
        %2397 = vmatpush1.msra.mxu0 %v2286
        %2398 = vmatprep.subr.mxu0 0.0
        %2399 = vmatpush1.msra.mxu0 %v2287
        %2400 = vmatprep.subr.mxu0 0.0
        %2401 = vmatpush1.msra.mxu0 %v2288
        %2402 = vmatprep.subr.mxu0 0.0
        %2403 = vmatpush1.msra.mxu0 %v2289
        %2404 = vmatprep.subr.mxu0 0.0
        %2405 = vmatpush1.msra.mxu0 %v2290
        %2406 = vmatprep.subr.mxu0 0.0
        %2407 = vmatpush1.msra.mxu0 %v2291
        %2408 = vmatprep.subr.mxu0 0.0
        %2409 = vmatpush1.msra.mxu0 %v2292
        %2410 = vmatprep.subr.mxu0 0.0
        %2411 = vmatpush1.msra.mxu0 %v2293
        %2412 = vmatprep.subr.mxu0 0.0
        %2413 = vmatpush1.msra.mxu0 %v2294
        %2414 = vmatprep.subr.mxu0 0.0
        %2415 = vmatpush1.msra.mxu0 %v2295
        %2416 = vmatprep.subr.mxu0 0.0
        %2417 = vmatpush1.msra.mxu0 %v2296
        %2418 = vmatprep.subr.mxu0 0.0
        %2419 = vmatpush1.msra.mxu0 %v2297
        %2420 = vmatprep.subr.mxu0 0.0
        %2421 = vmatpush1.msra.mxu0 %v2298
        %2422 = vmatprep.subr.mxu0 0.0
        %2423 = vmatpush1.msra.mxu0 %v2299
        %2424 = vmatprep.subr.mxu0 0.0
        %2425 = vmatpush1.msra.mxu0 %v2300
        %2426 = vmatprep.subr.mxu0 0.0
        %2427 = vmatpush1.msra.mxu0 %v2301
        %2428 = vmatprep.subr.mxu0 0.0
        %2429 = vmatpush1.msra.mxu0 %v2302
        %2430 = vmatprep.subr.mxu0 0.0
        %2431 = vmatpush1.msra.mxu0 %v2303
        %2432 = vmatprep.subr.mxu0 0.0
        %2433 = vmatpush1.msra.mxu0 %v2304
        %2434 = vmatprep.subr.mxu0 0.0
        %2435 = vmatpush1.msra.mxu0 %v2305
        %2436 = vmatprep.subr.mxu0 0.0
        %2437 = vmatpush1.msra.mxu0 %v2306
        %2438 = vmatprep.subr.mxu0 0.0
        %2439 = vmatpush1.msra.mxu0 %v2307
        %2440 = vmatprep.subr.mxu0 0.0
        %2441 = vmatpush1.msra.mxu0 %v2308
        %2442 = vmatprep.subr.mxu0 0.0
        %2443 = vmatpush1.msra.mxu0 %v2309
        %2444 = vmatprep.subr.mxu0 0.0
        %2445 = vmatpush1.msra.mxu0 %v2310
        %2446 = vmatprep.subr.mxu0 0.0
        %2447 = vmatpush1.msra.mxu0 %v2311
        %2448 = vmatprep.mubr.f32.mxu0 %v2247
        %2449 = vmatmul.mubr.f32.gmra.mrb[0].mxu0 %v2246
        %v2450 = vpop.f32.mrb[0].mxu0
        %v2451 = vadd.f32 %v2381, %v2450
        %v2452 = vpop.f32.mrb[0].mxu0
        %2453 = vdwg.mxu0
        %v2454 = vld [vmem:[%s19] sm:$0xff]
        %v2455 = vld [vmem:[%s19 + $0x8] sm:$0xff]
        %v2456 = vld [vmem:[%s19 + $0x10] sm:$0xff]
        %v2457 = vld [vmem:[%s19 + $0x18] sm:$0xff]
        %v2458 = vld [vmem:[%s19 + $0x20] sm:$0xff]
        %v2459 = vld [vmem:[%s19 + $0x28] sm:$0xff]
        %v2460 = vld [vmem:[%s19 + $0x30] sm:$0xff]
        %v2461 = vld [vmem:[%s19 + $0x38] sm:$0xff]
        %v2462 = vld [vmem:[%s19 + $0x40] sm:$0xff]
        %v2463 = vld [vmem:[%s19 + $0x48] sm:$0xff]
        %v2464 = vld [vmem:[%s19 + $0x50] sm:$0xff]
        %v2465 = vld [vmem:[%s19 + $0x58] sm:$0xff]
        %v2466 = vld [vmem:[%s19 + $0x60] sm:$0xff]
        %v2467 = vld [vmem:[%s19 + $0x68] sm:$0xff]
        %v2468 = vld [vmem:[%s19 + $0x70] sm:$0xff]
        %v2469 = vld [vmem:[%s19 + $0x78] sm:$0xff]
        %v2470 = vld [vmem:[%s19 + $0x80] sm:$0xff]
        %v2471 = vld [vmem:[%s19 + $0x88] sm:$0xff]
        %v2472 = vld [vmem:[%s19 + $0x90] sm:$0xff]
        %v2473 = vld [vmem:[%s19 + $0x98] sm:$0xff]
        %v2474 = vld [vmem:[%s19 + $0xa0] sm:$0xff]
        %v2475 = vld [vmem:[%s19 + $0xa8] sm:$0xff]
        %v2476 = vld [vmem:[%s19 + $0xb0] sm:$0xff]
        %v2477 = vld [vmem:[%s19 + $0xb8] sm:$0xff]
        %v2478 = vld [vmem:[%s19 + $0xc0] sm:$0xff]
        %v2479 = vld [vmem:[%s19 + $0xc8] sm:$0xff]
        %v2480 = vld [vmem:[%s19 + $0xd0] sm:$0xff]
        %v2481 = vld [vmem:[%s19 + $0xd8] sm:$0xff]
        %v2482 = vld [vmem:[%s19 + $0xe0] sm:$0xff]
        %v2483 = vld [vmem:[%s19 + $0xe8] sm:$0xff]
        %v2484 = vld [vmem:[%s19 + $0xf0] sm:$0xff]
        %v2485 = vld [vmem:[%s19 + $0xf8] sm:$0xff]
        %v2486 = vld [vmem:[%s19 + $0x100] sm:$0xff]
        %v2487 = vld [vmem:[%s19 + $0x108] sm:$0xff]
        %v2488 = vld [vmem:[%s19 + $0x110] sm:$0xff]
        %v2489 = vld [vmem:[%s19 + $0x118] sm:$0xff]
        %v2490 = vld [vmem:[%s19 + $0x120] sm:$0xff]
        %v2491 = vld [vmem:[%s19 + $0x128] sm:$0xff]
        %v2492 = vld [vmem:[%s19 + $0x130] sm:$0xff]
        %v2493 = vld [vmem:[%s19 + $0x138] sm:$0xff]
        %v2494 = vld [vmem:[%s19 + $0x140] sm:$0xff]
        %v2495 = vld [vmem:[%s19 + $0x148] sm:$0xff]
        %v2496 = vld [vmem:[%s19 + $0x150] sm:$0xff]
        %v2497 = vld [vmem:[%s19 + $0x158] sm:$0xff]
        %v2498 = vld [vmem:[%s19 + $0x160] sm:$0xff]
        %v2499 = vld [vmem:[%s19 + $0x168] sm:$0xff]
        %v2500 = vld [vmem:[%s19 + $0x170] sm:$0xff]
        %v2501 = vld [vmem:[%s19 + $0x178] sm:$0xff]
        %v2502 = vld [vmem:[%s19 + $0x180] sm:$0xff]
        %v2503 = vld [vmem:[%s19 + $0x188] sm:$0xff]
        %v2504 = vld [vmem:[%s19 + $0x190] sm:$0xff]
        %v2505 = vld [vmem:[%s19 + $0x198] sm:$0xff]
        %v2506 = vld [vmem:[%s19 + $0x1a0] sm:$0xff]
        %v2507 = vld [vmem:[%s19 + $0x1a8] sm:$0xff]
        %v2508 = vld [vmem:[%s19 + $0x1b0] sm:$0xff]
        %v2509 = vld [vmem:[%s19 + $0x1b8] sm:$0xff]
        %v2510 = vld [vmem:[%s19 + $0x1c0] sm:$0xff]
        %v2511 = vld [vmem:[%s19 + $0x1c8] sm:$0xff]
        %v2512 = vld [vmem:[%s19 + $0x1d0] sm:$0xff]
        %v2513 = vld [vmem:[%s19 + $0x1d8] sm:$0xff]
        %v2514 = vld [vmem:[%s19 + $0x1e0] sm:$0xff]
        %v2515 = vld [vmem:[%s19 + $0x1e8] sm:$0xff]
        %v2516 = vld [vmem:[%s19 + $0x1f0] sm:$0xff]
        %v2517 = vld [vmem:[%s19 + $0x1f8] sm:$0xff]
        %s2518 = sld [smem:[#allocation2 + $0x1]]
        %v2519 = vstv %s2518
        %2520 = vmatprep.subr.mxu0 0.0
        %2521 = vmatpush1.msra.mxu0 %v2454
        %2522 = vmatprep.subr.mxu0 0.0
        %2523 = vmatpush1.msra.mxu0 %v2455
        %2524 = vmatprep.subr.mxu0 0.0
        %2525 = vmatpush1.msra.mxu0 %v2456
        %2526 = vmatprep.subr.mxu0 0.0
        %2527 = vmatpush1.msra.mxu0 %v2457
        %2528 = vmatprep.subr.mxu0 0.0
        %2529 = vmatpush1.msra.mxu0 %v2458
        %2530 = vmatprep.subr.mxu0 0.0
        %2531 = vmatpush1.msra.mxu0 %v2459
        %2532 = vmatprep.subr.mxu0 0.0
        %2533 = vmatpush1.msra.mxu0 %v2460
        %2534 = vmatprep.subr.mxu0 0.0
        %2535 = vmatpush1.msra.mxu0 %v2461
        %2536 = vmatprep.subr.mxu0 0.0
        %2537 = vmatpush1.msra.mxu0 %v2462
        %2538 = vmatprep.subr.mxu0 0.0
        %2539 = vmatpush1.msra.mxu0 %v2463
        %2540 = vmatprep.subr.mxu0 0.0
        %2541 = vmatpush1.msra.mxu0 %v2464
        %2542 = vmatprep.subr.mxu0 0.0
        %2543 = vmatpush1.msra.mxu0 %v2465
        %2544 = vmatprep.subr.mxu0 0.0
        %2545 = vmatpush1.msra.mxu0 %v2466
        %2546 = vmatprep.subr.mxu0 0.0
        %2547 = vmatpush1.msra.mxu0 %v2467
        %2548 = vmatprep.subr.mxu0 0.0
        %2549 = vmatpush1.msra.mxu0 %v2468
        %2550 = vmatprep.subr.mxu0 0.0
        %2551 = vmatpush1.msra.mxu0 %v2469
        %2552 = vmatprep.subr.mxu0 0.0
        %2553 = vmatpush1.msra.mxu0 %v2470
        %2554 = vmatprep.subr.mxu0 0.0
        %2555 = vmatpush1.msra.mxu0 %v2471
        %2556 = vmatprep.subr.mxu0 0.0
        %2557 = vmatpush1.msra.mxu0 %v2472
        %2558 = vmatprep.subr.mxu0 0.0
        %2559 = vmatpush1.msra.mxu0 %v2473
        %2560 = vmatprep.subr.mxu0 0.0
        %2561 = vmatpush1.msra.mxu0 %v2474
        %2562 = vmatprep.subr.mxu0 0.0
        %2563 = vmatpush1.msra.mxu0 %v2475
        %2564 = vmatprep.subr.mxu0 0.0
        %2565 = vmatpush1.msra.mxu0 %v2476
        %2566 = vmatprep.subr.mxu0 0.0
        %2567 = vmatpush1.msra.mxu0 %v2477
        %2568 = vmatprep.subr.mxu0 0.0
        %2569 = vmatpush1.msra.mxu0 %v2478
        %2570 = vmatprep.subr.mxu0 0.0
        %2571 = vmatpush1.msra.mxu0 %v2479
        %2572 = vmatprep.subr.mxu0 0.0
        %2573 = vmatpush1.msra.mxu0 %v2480
        %2574 = vmatprep.subr.mxu0 0.0
        %2575 = vmatpush1.msra.mxu0 %v2481
        %2576 = vmatprep.subr.mxu0 0.0
        %2577 = vmatpush1.msra.mxu0 %v2482
        %2578 = vmatprep.subr.mxu0 0.0
        %2579 = vmatpush1.msra.mxu0 %v2483
        %2580 = vmatprep.subr.mxu0 0.0
        %2581 = vmatpush1.msra.mxu0 %v2484
        %2582 = vmatprep.subr.mxu0 0.0
        %2583 = vmatpush1.msra.mxu0 %v2485
        %2584 = vmatprep.mubr.f32.mxu0 %v2245
        %2585 = vmatmul.mubr.f32.gmra.mrb[0].mxu0 %v2244
        %v2586 = vpop.f32.mrb[0].mxu0
        %v2587 = vadd.f32 %v2519, %v2586
        %v2588 = vpop.f32.mrb[0].mxu0
        %2589 = vdwg.mxu0
        %2590 = vmatprep.subr.mxu0 0.0
        %2591 = vmatpush1.msra.mxu0 %v2486
        %2592 = vmatprep.subr.mxu0 0.0
        %2593 = vmatpush1.msra.mxu0 %v2487
        %2594 = vmatprep.subr.mxu0 0.0
        %2595 = vmatpush1.msra.mxu0 %v2488
        %2596 = vmatprep.subr.mxu0 0.0
        %2597 = vmatpush1.msra.mxu0 %v2489
        %2598 = vmatprep.subr.mxu0 0.0
        %2599 = vmatpush1.msra.mxu0 %v2490
        %2600 = vmatprep.subr.mxu0 0.0
        %2601 = vmatpush1.msra.mxu0 %v2491
        %2602 = vmatprep.subr.mxu0 0.0
        %2603 = vmatpush1.msra.mxu0 %v2492
        %2604 = vmatprep.subr.mxu0 0.0
        %2605 = vmatpush1.msra.mxu0 %v2493
        %2606 = vmatprep.subr.mxu0 0.0
        %2607 = vmatpush1.msra.mxu0 %v2494
        %2608 = vmatprep.subr.mxu0 0.0
        %2609 = vmatpush1.msra.mxu0 %v2495
        %2610 = vmatprep.subr.mxu0 0.0
        %2611 = vmatpush1.msra.mxu0 %v2496
        %2612 = vmatprep.subr.mxu0 0.0
        %2613 = vmatpush1.msra.mxu0 %v2497
        %2614 = vmatprep.subr.mxu0 0.0
        %2615 = vmatpush1.msra.mxu0 %v2498
        %2616 = vmatprep.subr.mxu0 0.0
        %2617 = vmatpush1.msra.mxu0 %v2499
        %2618 = vmatprep.subr.mxu0 0.0
        %2619 = vmatpush1.msra.mxu0 %v2500
        %2620 = vmatprep.subr.mxu0 0.0
        %2621 = vmatpush1.msra.mxu0 %v2501
        %2622 = vmatprep.subr.mxu0 0.0
        %2623 = vmatpush1.msra.mxu0 %v2502
        %2624 = vmatprep.subr.mxu0 0.0
        %2625 = vmatpush1.msra.mxu0 %v2503
        %2626 = vmatprep.subr.mxu0 0.0
        %2627 = vmatpush1.msra.mxu0 %v2504
        %2628 = vmatprep.subr.mxu0 0.0
        %2629 = vmatpush1.msra.mxu0 %v2505
        %2630 = vmatprep.subr.mxu0 0.0
        %2631 = vmatpush1.msra.mxu0 %v2506
        %2632 = vmatprep.subr.mxu0 0.0
        %2633 = vmatpush1.msra.mxu0 %v2507
        %2634 = vmatprep.subr.mxu0 0.0
        %2635 = vmatpush1.msra.mxu0 %v2508
        %2636 = vmatprep.subr.mxu0 0.0
        %2637 = vmatpush1.msra.mxu0 %v2509
        %2638 = vmatprep.subr.mxu0 0.0
        %2639 = vmatpush1.msra.mxu0 %v2510
        %2640 = vmatprep.subr.mxu0 0.0
        %2641 = vmatpush1.msra.mxu0 %v2511
        %2642 = vmatprep.subr.mxu0 0.0
        %2643 = vmatpush1.msra.mxu0 %v2512
        %2644 = vmatprep.subr.mxu0 0.0
        %2645 = vmatpush1.msra.mxu0 %v2513
        %2646 = vmatprep.subr.mxu0 0.0
        %2647 = vmatpush1.msra.mxu0 %v2514
        %2648 = vmatprep.subr.mxu0 0.0
        %2649 = vmatpush1.msra.mxu0 %v2515
        %2650 = vmatprep.subr.mxu0 0.0
        %2651 = vmatpush1.msra.mxu0 %v2516
        %2652 = vmatprep.subr.mxu0 0.0
        %2653 = vmatpush1.msra.mxu0 %v2517
        %2654 = vmatprep.mubr.f32.mxu0 %v2247
        %2655 = vmatmul.mubr.f32.gmra.mrb[0].mxu0 %v2246
        %v2656 = vpop.f32.mrb[0].mxu0
        %v2657 = vadd.f32 %v2587, %v2656
        %v2658 = vpop.f32.mrb[0].mxu0
        %2659 = vdwg.mxu0
        %v2660 = vmax.f32 %v2451, %v2657
        %v2661 = vsub.f32 %v2451, %v2660
        %v2662 = vmul.f32 %v2661, 1.442695
        %v2663 = vpow.pop %v2662
        %v2664 = vsub.f32 %v2657, %v2660
        %v2665 = vmul.f32 %v2664, 1.442695
        %v2666 = vpow.pop %v2665
        %v2667 = vadd.f32 %v2663, %v2666
        %v2668 = vrcp.pop %v2667
        %v2669 = vmul.f32 %v2663, %v2668
        %vm2670 = vcmask 261120
        %2671 = vst.msk [vmem:[%s746] sm:$0xff] %vm2670, %v2669
        %v2672 = vmul.f32 %v2666, %v2668
        %s2673 = scalar_lea.vmem %s746, 8
        %2674 = vst.msk [vmem:[%s2673] sm:$0xff] %vm2670, %v2672
        %p2675 = scmp.lt.s32.totalorder %s36, 1
        %s2676 = scalar_select %p2675, %s36, 1
        %s2677 = smul.addr %s2676, 2
        %s2678 = smul.addr %s2677, 8
        %s2679 = scalar_lea.vmem %s21, %s2678
        %p2680 = scmp.lt.s32.totalorder %s36, 1
        %s2681 = scalar_select %p2680, %s36, 1
        %s2682 = smul.addr %s2681, 4
        %s2683 = smul.addr %s2682, 8
        %s2684 = scalar_lea.vmem %s22, %s2683
        %p2685 = scmp.lt.s32.totalorder %s36, 1
        %s2686 = scalar_select %p2685, %s36, 1
        %s2687 = smul.addr %s2686, 2
        %s2688 = smul.addr %s2687, 8
        %s2689 = scalar_lea.vmem %s23, %s2688
        // Predicated region
        $region109: #{_lambda_.1} parent=103 // pred_check
          %p2690 = pneg %p500
        $region110: #{_lambda_.1} parent=103 // pred_check_branch
          %2692 = sbr.rel (%p2690) target = $region112
        $region111: #{_lambda_.1} parent=103 // pred_region
          _
        $region112: #{_lambda_.1} parent=103 // pred_fallthru
          _
        // Predicated region
        $region113: #{_lambda_.1} parent=103 // pred_check
          %p2693 = pneg %p526
        $region114: #{_lambda_.1} parent=103 // pred_check_branch
          %2695 = sbr.rel (%p2693) target = $region116
        $region115: #{_lambda_.1} parent=103 // pred_region
          _
        $region116: #{_lambda_.1} parent=103 // pred_fallthru
          _
        // Predicated region
        $region117: #{_lambda_.1} parent=103 // pred_check
          %p2696 = pneg %p552
        $region118: #{_lambda_.1} parent=103 // pred_check_branch
          %2698 = sbr.rel (%p2696) target = $region120
        $region119: #{_lambda_.1} parent=103 // pred_region
          _
        $region120: #{_lambda_.1} parent=103 // pred_fallthru
          _
      $region104: #{_lambda_.1} parent=5 // pred_fallthru
        _
      %p2699 = scmp.le.s32.totalorder 2, %s31
      // Predicated region
      $region121: #{_lambda_.1} parent=5 // pred_check
        %p2700 = pneg %p2699
      $region122: #{_lambda_.1} parent=5 // pred_check_branch
        %2702 = sbr.rel (%p2700) target = $region124
      $region123: #{_lambda_.1} parent=5 // pred_region
        %s2703 = ssub.s32 %s31, 2
        // Predicated region
        $region125: #{_lambda_.1} parent=123 // pred_check
          %p2704 = pneg %p506
        $region126: #{_lambda_.1} parent=123 // pred_check_branch
          %2706 = sbr.rel (%p2704) target = $region128
        $region127: #{_lambda_.1} parent=123 // pred_region
          %p2707 = scmp.lt.s32.totalorder %s37, 1
          %s2708 = scalar_select %p2707, %s37, 1
          %s2709 = smul.addr %s2708, 2
          %s2710 = smul.addr %s2709, 8
          %s2711 = scalar_lea.vmem %s21, %s2710
        $region128: #{_lambda_.1} parent=123 // pred_fallthru
          _
        // Predicated region
        $region129: #{_lambda_.1} parent=123 // pred_check
          %p2712 = pneg %p532
        $region130: #{_lambda_.1} parent=123 // pred_check_branch
          %2714 = sbr.rel (%p2712) target = $region132
        $region131: #{_lambda_.1} parent=123 // pred_region
          %p2715 = scmp.lt.s32.totalorder %s37, 1
          %s2716 = scalar_select %p2715, %s37, 1
          %s2717 = smul.addr %s2716, 4
          %s2718 = smul.addr %s2717, 8
          %s2719 = scalar_lea.vmem %s22, %s2718
        $region132: #{_lambda_.1} parent=123 // pred_fallthru
          _
        // Predicated region
        $region133: #{_lambda_.1} parent=123 // pred_check
          %p2720 = pneg %p558
        $region134: #{_lambda_.1} parent=123 // pred_check_branch
          %2722 = sbr.rel (%p2720) target = $region136
        $region135: #{_lambda_.1} parent=123 // pred_region
          %p2723 = scmp.lt.s32.totalorder %s37, 1
          %s2724 = scalar_select %p2723, %s37, 1
          %s2725 = smul.addr %s2724, 2
          %s2726 = smul.addr %s2725, 8
          %s2727 = scalar_lea.vmem %s23, %s2726
        $region136: #{_lambda_.1} parent=123 // pred_fallthru
          _
      $region124: #{_lambda_.1} parent=5 // pred_fallthru
        _
    $region6: #{_lambda_.1} parent=1 // loop_footer
      %s35 = sadd.s32 1, %s31
    $region7: #{_lambda_.1} parent=1 // loop_footer_branch
      %30 = sbr.rel target = $region3
    $region8: #{_lambda_.1} parent=1 // loop_exit
      _
    %2728 = vsyncpa [#allocation3], 1
    %s2729 = scalar_lea.sflag [#allocation3], 1
    %2730 = vsyncpa %s2729, 1

</llo_original>
